<compile_context>
chip_gen: v7x
topology: tpu7x:2x2x1
jax: 0.10.0
libtpu: 0.0.40
codegen_flags: <defaults>
</compile_context>

<pallas_src>
import functools

import jax
import jax.numpy as jnp
from jax.experimental import pallas as pl
from jax.experimental.pallas import tpu as pltpu


def _fused_disc_kernel(x_ref, w1_ref, b1_ref, w2_ref, b2_ref, w3_ref, b3_ref,
                       w4_ref, b4_ref, o_ref, act_ref, *, H, W, C, PF, PB,
                       slope, mm_dtype):
    """Fused 4-layer discriminator for one batch element (transposed layout).

    x_ref  : (1, C, M) f32      channel-padded input, M = H*W (row-major spatial)
    w{1,2,3}_ref : (9*C, C)     tap-major packed weights: row = tap*C + co, col = ci
    b{1,2,3}_ref : (C, 1) f32
    w4_ref : (9*8, C)           classifier weights, out channel zero-padded to 8 rows
    b4_ref : (8, 1) f32
    o_ref  : (1, 1, M)          lane-dense output row (wrapper reshapes to NCHW)
    act_ref: (C, PF + M + PB)   flat activation buffer with zero halos; the interior
                                starts at the 128-aligned lane offset PF.
    """
    M = H * W

    # Zero ONLY the halos.  The interior [PF, PF+M) is fully rewritten for every layer
    # and the halos are never written, so they stay zero.  Done every grid step (cheap)
    # rather than under pl.when(program_id==0): scratch is per-TensorCore, and with a
    # "parallel" batch axis a second core would never see program_id == 0.
    act_ref[:, 0:PF] = jnp.zeros((C, PF), mm_dtype)
    act_ref[:, PF + M:PF + M + PB] = jnp.zeros((C, PB), mm_dtype)

    # Column-boundary masks for the horizontal taps (hoisted out of the layer/tap loops).
    col = jax.lax.broadcasted_iota(jnp.int32, (1, M), 1) % W
    not_left = col != 0          # valid destinations when the tap reads col - 1
    not_right = col != W - 1     # valid destinations when the tap reads col + 1

    def conv3x3(w_ref, cout):
        """3x3 'SAME' conv of the activation in act_ref[:, PF:PF+M] -> (cout, M) f32."""
        acc = jnp.zeros((cout, M), jnp.float32)
        for ky in range(3):
            for kx in range(3):
                tap = ky * 3 + kx
                start = PF + (ky - 1) * W + (kx - 1)
                shifted = act_ref[:, start:start + M]             # (C, M), mm_dtype
                # Vertical out-of-image reads land in the zero halos; horizontal
                # out-of-image reads wrap into the neighboring row and are masked.
                if kx == 0:
                    shifted = jnp.where(not_left, shifted, jnp.zeros_like(shifted))
                elif kx == 2:
                    shifted = jnp.where(not_right, shifted, jnp.zeros_like(shifted))
                w_tap = w_ref[tap * cout:(tap + 1) * cout, :]     # (cout, C)
                acc = acc + jnp.dot(w_tap, shifted,
                                    preferred_element_type=jnp.float32)
        return acc

    # Layer-1 input -> interior of the haloed buffer (128-aligned lane offset).
    act_ref[:, PF:PF + M] = x_ref[0].astype(mm_dtype)

    # Three conv3x3 + LeakyReLU(0.2) layers (static Python loop: LLO sees it unrolled).
    for w_ref, b_ref in ((w1_ref, b1_ref), (w2_ref, b2_ref), (w3_ref, b3_ref)):
        y = conv3x3(w_ref, C) + b_ref[...]                        # (C, M) f32
        y = jnp.where(y > 0, y, slope * y)                        # LeakyReLU(0.2)
        act_ref[:, PF:PF + M] = y.astype(mm_dtype)

    # Classifier: single output channel padded to 8 MXU rows; keep row 0 (lane-dense).
    y4 = conv3x3(w4_ref, 8) + b4_ref[...]                         # (8, M) f32
    o_ref[0] = y4[0:1, :].astype(o_ref.dtype)


def _pack_weight(w_hwio, cin_pad, cout_pad):
    """HWIO (3,3,cin,cout) -> (9*cout_pad, cin_pad); rows tap-major then out-channel."""
    kh, kw, cin, cout = w_hwio.shape
    w = jnp.pad(w_hwio, ((0, 0), (0, 0), (0, cin_pad - cin), (0, cout_pad - cout)))
    w = jnp.transpose(w, (0, 1, 3, 2))                    # (3, 3, cout_pad, cin_pad)
    return w.reshape(kh * kw * cout_pad, cin_pad)


@functools.partial(jax.jit, static_argnames=("use_bf16",))
def fc_discriminator_img(x_nchw, params, use_bf16=False):
    """Forward pass matching FCDiscriminator_img.forward (NCHW in, NCHW out)."""
    N, cin, H, W = x_nchw.shape
    ndf = params["w1"].shape[-1]
    C = max(8, ((ndf + 7) // 8) * 8)          # sublane-aligned channel width
    if cin > C:
        raise ValueError("num_classes > padded ndf is not supported by this kernel")

    M = H * W
    PF = ((W + 2 + 127) // 128) * 128         # 128-lane-aligned front halo (>= W + 1)
    PB = W + 1                                # back halo

    mm_dtype = jnp.bfloat16 if use_bf16 else jnp.float32   # keep f32 on v5e

    # NCHW -> (N, C, H*W): a pure reshape (no transpose); zero-pad channels once.
    x = x_nchw.reshape(N, cin, M)
    x = jnp.pad(x, ((0, 0), (0, C - cin), (0, 0)))

    w1 = _pack_weight(params["w1"], C, C).astype(mm_dtype)   # (9C, C)
    w2 = _pack_weight(params["w2"], C, C).astype(mm_dtype)
    w3 = _pack_weight(params["w3"], C, C).astype(mm_dtype)
    w4 = _pack_weight(params["w4"], C, 8).astype(mm_dtype)   # (72, C)
    b1 = jnp.pad(params["b1"], (0, C - ndf)).reshape(C, 1)
    b2 = jnp.pad(params["b2"], (0, C - ndf)).reshape(C, 1)
    b3 = jnp.pad(params["b3"], (0, C - ndf)).reshape(C, 1)
    b4 = jnp.pad(params["b4"], (0, 7)).reshape(8, 1)

    kernel = functools.partial(_fused_disc_kernel, H=H, W=W, C=C, PF=PF, PB=PB,
                               slope=0.2, mm_dtype=mm_dtype)

    wspec = pl.BlockSpec((9 * C, C), lambda n: (0, 0))
    bspec = pl.BlockSpec((C, 1), lambda n: (0, 0))

    # TODO(synk): for large H*W on v7x (64 MiB VMEM) add a row-strip grid axis with a
    # +1-row halo and an explicit vmem_limit_bytes; on v5e/v6e (128 MiB VMEM) batch
    # several images per grid step along the matmul lane dim instead.
    # TODO(synk): pipeline_mode=pl.Buffered(1) on the constant weight/bias specs once
    # VMEM pressure matters (v7x); left at the default here.
    out = pl.pallas_call(
        kernel,
        out_shape=jax.ShapeDtypeStruct((N, 1, M), x_nchw.dtype),
        grid=(N,),
        in_specs=[
            pl.BlockSpec((1, C, M), lambda n: (n, 0, 0)),         # x
            wspec, bspec,                                         # layer 1
            wspec, bspec,                                         # layer 2
            wspec, bspec,                                         # layer 3
            pl.BlockSpec((9 * 8, C), lambda n: (0, 0)),           # classifier w
            pl.BlockSpec((8, 1), lambda n: (0, 0)),               # classifier b
        ],
        out_specs=pl.BlockSpec((1, 1, M), lambda n: (n, 0, 0)),
        scratch_shapes=[pltpu.VMEM((C, PF + M + PB), mm_dtype)],
        compiler_params=pltpu.CompilerParams(
            dimension_semantics=("parallel",)),
    )(x, w1, b1, w2, b2, w3, b3, w4, b4)
    return out.reshape(N, 1, H, W)


def init_params(key, num_classes, ndf):
    """Deterministic synthetic parameters (shapes match the PyTorch module, HWIO)."""
    dims = [(num_classes, ndf), (ndf, ndf), (ndf, ndf), (ndf, 1)]
    params = {}
    for i, (cin, cout) in enumerate(dims, start=1):
        key, kw, kb = jax.random.split(key, 3)
        fan_in = cin * 9
        scale = (1.0 / fan_in) ** 0.5
        params[f"w{i}"] = jax.random.uniform(
            kw, (3, 3, cin, cout), jnp.float32, -scale, scale)
        params[f"b{i}"] = jax.random.uniform(
            kb, (cout,), jnp.float32, -scale, scale)
    return params


def _reference(x_nchw, params):
    """Pure-JAX reference (lax conv) for correctness check."""
    x = jnp.transpose(x_nchw, (0, 2, 3, 1))
    dn = jax.lax.conv_dimension_numbers(x.shape, params["w1"].shape,
                                        ("NHWC", "HWIO", "NHWC"))

    def conv(h, w, b):
        return jax.lax.conv_general_dilated(
            h, w, window_strides=(1, 1), padding="SAME",
            dimension_numbers=dn) + b[None, None, None, :]

    def leaky(h):
        return jnp.where(h > 0, h, 0.2 * h)

    h = leaky(conv(x, params["w1"], params["b1"]))
    h = leaky(conv(h, params["w2"], params["b2"]))
    h = leaky(conv(h, params["w3"], params["b3"]))
    h = conv(h, params["w4"], params["b4"])
    return jnp.transpose(h, (0, 3, 1, 2))


if __name__ == "__main__":
    key = jax.random.PRNGKey(0)
    num_classes, ndf = 4, 32
    N, H, W = 2, 16, 16

    kx, kp = jax.random.split(key)
    x = jax.random.normal(kx, (N, num_classes, H, W), jnp.float32)
    params = init_params(kp, num_classes, ndf)

    # f32 matmul path (near-exact vs. lax.conv reference).
    out = jax.block_until_ready(fc_discriminator_img(x, params))
    assert out.shape == (N, 1, H, W), out.shape

    ref = jax.block_until_ready(_reference(x, params))
    assert jnp.allclose(out, ref, atol=1e-4, rtol=1e-4), (
        float(jnp.max(jnp.abs(out - ref))))

    # bf16 matmul-operand path (v6e/v7x), f32 accumulation -> tightened tolerance.
    out_bf16 = jax.block_until_ready(fc_discriminator_img(x, params, use_bf16=True))
    assert jnp.allclose(out_bf16, ref, atol=2e-2, rtol=2e-2), (
        float(jnp.max(jnp.abs(out_bf16 - ref))))

    print("KERNEL_OK")
</pallas_src>

<mosaic_0001>
module attributes {stable_mosaic.version = 11 : i64} {
  func.func @_fused_disc_kernel(%arg0: i32, %arg1: memref<1x32x256xf32, #tpu.memory_space<vmem>>, %arg2: memref<288x32xf32, #tpu.memory_space<vmem>>, %arg3: memref<32x1xf32, #tpu.memory_space<vmem>>, %arg4: memref<288x32xf32, #tpu.memory_space<vmem>>, %arg5: memref<32x1xf32, #tpu.memory_space<vmem>>, %arg6: memref<288x32xf32, #tpu.memory_space<vmem>>, %arg7: memref<32x1xf32, #tpu.memory_space<vmem>>, %arg8: memref<72x32xf32, #tpu.memory_space<vmem>>, %arg9: memref<8x1xf32, #tpu.memory_space<vmem>>, %arg10: memref<1x1x256xf32, #tpu.memory_space<vmem>>, %arg11: memref<32x401xf32, #tpu.memory_space<vmem>>) attributes {dimension_semantics = [#tpu.dimension_semantics<parallel>], iteration_bounds = array<i64: 2>, scalar_prefetch = 0 : i64, scratch_operands = 1 : i64, tpu.core_type = #tpu.core_type<tc>, window_params = [{transform_indices = @transform_0, window_bounds = array<i64: 1, 32, 256>}, {pipeline_mode = #tpu.pipeline_mode<synchronous>, transform_indices = @transform_1, window_bounds = array<i64: 288, 32>}, {pipeline_mode = #tpu.pipeline_mode<synchronous>, transform_indices = @transform_2, window_bounds = array<i64: 32, 1>}, {pipeline_mode = #tpu.pipeline_mode<synchronous>, transform_indices = @transform_3, window_bounds = array<i64: 288, 32>}, {pipeline_mode = #tpu.pipeline_mode<synchronous>, transform_indices = @transform_4, window_bounds = array<i64: 32, 1>}, {pipeline_mode = #tpu.pipeline_mode<synchronous>, transform_indices = @transform_5, window_bounds = array<i64: 288, 32>}, {pipeline_mode = #tpu.pipeline_mode<synchronous>, transform_indices = @transform_6, window_bounds = array<i64: 32, 1>}, {pipeline_mode = #tpu.pipeline_mode<synchronous>, transform_indices = @transform_7, window_bounds = array<i64: 72, 32>}, {pipeline_mode = #tpu.pipeline_mode<synchronous>, transform_indices = @transform_8, window_bounds = array<i64: 8, 1>}, {transform_indices = @transform_9, window_bounds = array<i64: 1, 1, 256>}]} {
    %cst = arith.constant 0.000000e+00 : f32
    %0 = vector.broadcast %cst : f32 to vector<32x128xf32>
    %c0 = arith.constant 0 : index
    %c0_0 = arith.constant 0 : index
    %1 = vector.load %arg11[%c0, %c0_0] : memref<32x401xf32, #tpu.memory_space<vmem>>, vector<32x128xf32>
    tpu.vector_store %arg11[%c0, %c0_0], %0 {strides = array<i32>} : memref<32x401xf32, #tpu.memory_space<vmem>>, vector<32x128xf32>,
    %cst_1 = arith.constant 0.000000e+00 : f32
    %2 = vector.broadcast %cst_1 : f32 to vector<32x17xf32>
    %c0_2 = arith.constant 0 : index
    %c384 = arith.constant 384 : index
    %3 = vector.load %arg11[%c0_2, %c384] : memref<32x401xf32, #tpu.memory_space<vmem>>, vector<32x17xf32>
    tpu.vector_store %arg11[%c0_2, %c384], %2 {strides = array<i32>} : memref<32x401xf32, #tpu.memory_space<vmem>>, vector<32x17xf32>,
    %4 = tpu.iota {dimensions = array<i32: 1>} : vector<1x256xi32>
    %c16_i32 = arith.constant 16 : i32
    %c0_i32 = arith.constant 0 : i32
    %5 = arith.cmpi eq, %c16_i32, %c0_i32 : i32
    %c1_i32 = arith.constant 1 : i32
    %6 = arith.select %5, %c1_i32, %c16_i32 : i32
    %7 = vector.broadcast %6 : i32 to vector<1x256xi32>
    %8 = arith.remsi %4, %7 : vector<1x256xi32>
    %c0_i32_3 = arith.constant 0 : i32
    %9 = vector.broadcast %c0_i32_3 : i32 to vector<1x256xi32>
    %10 = arith.cmpi ne, %8, %9 : vector<1x256xi32>
    %c0_i32_4 = arith.constant 0 : i32
    %11 = vector.broadcast %c0_i32_4 : i32 to vector<1x256xi32>
    %12 = arith.cmpi slt, %8, %11 : vector<1x256xi32>
    %c0_i32_5 = arith.constant 0 : i32
    %13 = arith.cmpi slt, %6, %c0_i32_5 : i32
    %14 = vector.broadcast %13 : i1 to vector<1x256xi1>
    %15 = vector.broadcast %14 : vector<1x256xi1> to vector<1x256xi1>
    %16 = arith.xori %12, %15 : vector<1x256xi1>
    %17 = arith.andi %16, %10 : vector<1x256xi1>
    %18 = vector.broadcast %6 : i32 to vector<1x256xi32>
    %19 = arith.addi %8, %18 : vector<1x256xi32>
    %20 = arith.select %17, %19, %8 : vector<1x256xi1>, vector<1x256xi32>
    %c0_i32_6 = arith.constant 0 : i32
    %21 = vector.broadcast %c0_i32_6 : i32 to vector<1x256xi32>
    %22 = arith.cmpi ne, %20, %21 : vector<1x256xi32>
    %c15_i32 = arith.constant 15 : i32
    %23 = vector.broadcast %c15_i32 : i32 to vector<1x256xi32>
    %24 = arith.cmpi ne, %20, %23 : vector<1x256xi32>
    %c0_7 = arith.constant 0 : index
    %c0_8 = arith.constant 0 : index
    %c0_9 = arith.constant 0 : index
    %25 = vector.load %arg1[%c0_7, %c0_8, %c0_9] : memref<1x32x256xf32, #tpu.memory_space<vmem>>, vector<1x32x256xf32>
    %26 = vector.shape_cast %25 : vector<1x32x256xf32> to vector<32x256xf32>
    %c0_10 = arith.constant 0 : index
    %c128 = arith.constant 128 : index
    %27 = vector.load %arg11[%c0_10, %c128] : memref<32x401xf32, #tpu.memory_space<vmem>>, vector<32x256xf32>
    tpu.vector_store %arg11[%c0_10, %c128], %26 {strides = array<i32>} : memref<32x401xf32, #tpu.memory_space<vmem>>, vector<32x256xf32>,
    %cst_11 = arith.constant 0.000000e+00 : f32
    %28 = vector.broadcast %cst_11 : f32 to vector<32x256xf32>
    %c0_12 = arith.constant 0 : index
    %c111 = arith.constant 111 : index
    %29 = vector.load %arg11[%c0_12, %c111] : memref<32x401xf32, #tpu.memory_space<vmem>>, vector<32x256xf32>
    %cst_13 = arith.constant 0.000000e+00 : f32
    %30 = vector.broadcast %cst_13 : f32 to vector<32x256xf32>
    %31 = vector.shape_cast %22 : vector<1x256xi1> to vector<1x256xi1>
    %32 = vector.broadcast %31 : vector<1x256xi1> to vector<32x256xi1>
    %33 = arith.select %32, %29, %30 : vector<32x256xi1>, vector<32x256xf32>
    %c0_14 = arith.constant 0 : index
    %c0_15 = arith.constant 0 : index
    %34 = vector.load %arg2[%c0_14, %c0_15] : memref<288x32xf32, #tpu.memory_space<vmem>>, vector<32x32xf32>
    %cst_16 = arith.constant dense<0.000000e+00> : vector<32x256xf32>
    %35 = tpu.matmul %34, %33, %cst_16 {dimension_numbers = #tpu.dot_dimension_numbers<[1], [0], [0], [1], [0, 0, 1, 1], [], []>} : vector<32x32xf32>, vector<32x256xf32>, vector<32x256xf32> -> vector<32x256xf32>
    %36 = arith.addf %28, %35 : vector<32x256xf32>
    %c0_17 = arith.constant 0 : index
    %c112 = arith.constant 112 : index
    %37 = vector.load %arg11[%c0_17, %c112] : memref<32x401xf32, #tpu.memory_space<vmem>>, vector<32x256xf32>
    %c32 = arith.constant 32 : index
    %c0_18 = arith.constant 0 : index
    %38 = vector.load %arg2[%c32, %c0_18] : memref<288x32xf32, #tpu.memory_space<vmem>>, vector<32x32xf32>
    %cst_19 = arith.constant dense<0.000000e+00> : vector<32x256xf32>
    %39 = tpu.matmul %38, %37, %cst_19 {dimension_numbers = #tpu.dot_dimension_numbers<[1], [0], [0], [1], [0, 0, 1, 1], [], []>} : vector<32x32xf32>, vector<32x256xf32>, vector<32x256xf32> -> vector<32x256xf32>
    %40 = arith.addf %36, %39 : vector<32x256xf32>
    %c0_20 = arith.constant 0 : index
    %c113 = arith.constant 113 : index
    %41 = vector.load %arg11[%c0_20, %c113] : memref<32x401xf32, #tpu.memory_space<vmem>>, vector<32x256xf32>
    %cst_21 = arith.constant 0.000000e+00 : f32
    %42 = vector.broadcast %cst_21 : f32 to vector<32x256xf32>
    %43 = vector.shape_cast %24 : vector<1x256xi1> to vector<1x256xi1>
    %44 = vector.broadcast %43 : vector<1x256xi1> to vector<32x256xi1>
    %45 = arith.select %44, %41, %42 : vector<32x256xi1>, vector<32x256xf32>
    %c64 = arith.constant 64 : index
    %c0_22 = arith.constant 0 : index
    %46 = vector.load %arg2[%c64, %c0_22] : memref<288x32xf32, #tpu.memory_space<vmem>>, vector<32x32xf32>
    %cst_23 = arith.constant dense<0.000000e+00> : vector<32x256xf32>
    %47 = tpu.matmul %46, %45, %cst_23 {dimension_numbers = #tpu.dot_dimension_numbers<[1], [0], [0], [1], [0, 0, 1, 1], [], []>} : vector<32x32xf32>, vector<32x256xf32>, vector<32x256xf32> -> vector<32x256xf32>
    %48 = arith.addf %40, %47 : vector<32x256xf32>
    %c0_24 = arith.constant 0 : index
    %c127 = arith.constant 127 : index
    %49 = vector.load %arg11[%c0_24, %c127] : memref<32x401xf32, #tpu.memory_space<vmem>>, vector<32x256xf32>
    %cst_25 = arith.constant 0.000000e+00 : f32
    %50 = vector.broadcast %cst_25 : f32 to vector<32x256xf32>
    %51 = vector.shape_cast %22 : vector<1x256xi1> to vector<1x256xi1>
    %52 = vector.broadcast %51 : vector<1x256xi1> to vector<32x256xi1>
    %53 = arith.select %52, %49, %50 : vector<32x256xi1>, vector<32x256xf32>
    %c96 = arith.constant 96 : index
    %c0_26 = arith.constant 0 : index
    %54 = vector.load %arg2[%c96, %c0_26] : memref<288x32xf32, #tpu.memory_space<vmem>>, vector<32x32xf32>
    %cst_27 = arith.constant dense<0.000000e+00> : vector<32x256xf32>
    %55 = tpu.matmul %54, %53, %cst_27 {dimension_numbers = #tpu.dot_dimension_numbers<[1], [0], [0], [1], [0, 0, 1, 1], [], []>} : vector<32x32xf32>, vector<32x256xf32>, vector<32x256xf32> -> vector<32x256xf32>
    %56 = arith.addf %48, %55 : vector<32x256xf32>
    %c0_28 = arith.constant 0 : index
    %c128_29 = arith.constant 128 : index
    %57 = vector.load %arg11[%c0_28, %c128_29] : memref<32x401xf32, #tpu.memory_space<vmem>>, vector<32x256xf32>
    %c128_30 = arith.constant 128 : index
    %c0_31 = arith.constant 0 : index
    %58 = vector.load %arg2[%c128_30, %c0_31] : memref<288x32xf32, #tpu.memory_space<vmem>>, vector<32x32xf32>
    %cst_32 = arith.constant dense<0.000000e+00> : vector<32x256xf32>
    %59 = tpu.matmul %58, %57, %cst_32 {dimension_numbers = #tpu.dot_dimension_numbers<[1], [0], [0], [1], [0, 0, 1, 1], [], []>} : vector<32x32xf32>, vector<32x256xf32>, vector<32x256xf32> -> vector<32x256xf32>
    %60 = arith.addf %56, %59 : vector<32x256xf32>
    %c0_33 = arith.constant 0 : index
    %c129 = arith.constant 129 : index
    %61 = vector.load %arg11[%c0_33, %c129] : memref<32x401xf32, #tpu.memory_space<vmem>>, vector<32x256xf32>
    %cst_34 = arith.constant 0.000000e+00 : f32
    %62 = vector.broadcast %cst_34 : f32 to vector<32x256xf32>
    %63 = vector.shape_cast %24 : vector<1x256xi1> to vector<1x256xi1>
    %64 = vector.broadcast %63 : vector<1x256xi1> to vector<32x256xi1>
    %65 = arith.select %64, %61, %62 : vector<32x256xi1>, vector<32x256xf32>
    %c160 = arith.constant 160 : index
    %c0_35 = arith.constant 0 : index
    %66 = vector.load %arg2[%c160, %c0_35] : memref<288x32xf32, #tpu.memory_space<vmem>>, vector<32x32xf32>
    %cst_36 = arith.constant dense<0.000000e+00> : vector<32x256xf32>
    %67 = tpu.matmul %66, %65, %cst_36 {dimension_numbers = #tpu.dot_dimension_numbers<[1], [0], [0], [1], [0, 0, 1, 1], [], []>} : vector<32x32xf32>, vector<32x256xf32>, vector<32x256xf32> -> vector<32x256xf32>
    %68 = arith.addf %60, %67 : vector<32x256xf32>
    %c0_37 = arith.constant 0 : index
    %c143 = arith.constant 143 : index
    %69 = vector.load %arg11[%c0_37, %c143] : memref<32x401xf32, #tpu.memory_space<vmem>>, vector<32x256xf32>
    %cst_38 = arith.constant 0.000000e+00 : f32
    %70 = vector.broadcast %cst_38 : f32 to vector<32x256xf32>
    %71 = vector.shape_cast %22 : vector<1x256xi1> to vector<1x256xi1>
    %72 = vector.broadcast %71 : vector<1x256xi1> to vector<32x256xi1>
    %73 = arith.select %72, %69, %70 : vector<32x256xi1>, vector<32x256xf32>
    %c192 = arith.constant 192 : index
    %c0_39 = arith.constant 0 : index
    %74 = vector.load %arg2[%c192, %c0_39] : memref<288x32xf32, #tpu.memory_space<vmem>>, vector<32x32xf32>
    %cst_40 = arith.constant dense<0.000000e+00> : vector<32x256xf32>
    %75 = tpu.matmul %74, %73, %cst_40 {dimension_numbers = #tpu.dot_dimension_numbers<[1], [0], [0], [1], [0, 0, 1, 1], [], []>} : vector<32x32xf32>, vector<32x256xf32>, vector<32x256xf32> -> vector<32x256xf32>
    %76 = arith.addf %68, %75 : vector<32x256xf32>
    %c0_41 = arith.constant 0 : index
    %c144 = arith.constant 144 : index
    %77 = vector.load %arg11[%c0_41, %c144] : memref<32x401xf32, #tpu.memory_space<vmem>>, vector<32x256xf32>
    %c224 = arith.constant 224 : index
    %c0_42 = arith.constant 0 : index
    %78 = vector.load %arg2[%c224, %c0_42] : memref<288x32xf32, #tpu.memory_space<vmem>>, vector<32x32xf32>
    %cst_43 = arith.constant dense<0.000000e+00> : vector<32x256xf32>
    %79 = tpu.matmul %78, %77, %cst_43 {dimension_numbers = #tpu.dot_dimension_numbers<[1], [0], [0], [1], [0, 0, 1, 1], [], []>} : vector<32x32xf32>, vector<32x256xf32>, vector<32x256xf32> -> vector<32x256xf32>
    %80 = arith.addf %76, %79 : vector<32x256xf32>
    %c0_44 = arith.constant 0 : index
    %c145 = arith.constant 145 : index
    %81 = vector.load %arg11[%c0_44, %c145] : memref<32x401xf32, #tpu.memory_space<vmem>>, vector<32x256xf32>
    %cst_45 = arith.constant 0.000000e+00 : f32
    %82 = vector.broadcast %cst_45 : f32 to vector<32x256xf32>
    %83 = vector.shape_cast %24 : vector<1x256xi1> to vector<1x256xi1>
    %84 = vector.broadcast %83 : vector<1x256xi1> to vector<32x256xi1>
    %85 = arith.select %84, %81, %82 : vector<32x256xi1>, vector<32x256xf32>
    %c256 = arith.constant 256 : index
    %c0_46 = arith.constant 0 : index
    %86 = vector.load %arg2[%c256, %c0_46] : memref<288x32xf32, #tpu.memory_space<vmem>>, vector<32x32xf32>
    %cst_47 = arith.constant dense<0.000000e+00> : vector<32x256xf32>
    %87 = tpu.matmul %86, %85, %cst_47 {dimension_numbers = #tpu.dot_dimension_numbers<[1], [0], [0], [1], [0, 0, 1, 1], [], []>} : vector<32x32xf32>, vector<32x256xf32>, vector<32x256xf32> -> vector<32x256xf32>
    %88 = arith.addf %80, %87 : vector<32x256xf32>
    %c0_48 = arith.constant 0 : index
    %c0_49 = arith.constant 0 : index
    %89 = vector.load %arg3[%c0_48, %c0_49] : memref<32x1xf32, #tpu.memory_space<vmem>>, vector<32x1xf32>
    %90 = vector.broadcast %89 : vector<32x1xf32> to vector<32x256xf32>
    %91 = arith.addf %88, %90 : vector<32x256xf32>
    %cst_50 = arith.constant 0.000000e+00 : f32
    %92 = vector.broadcast %cst_50 : f32 to vector<32x256xf32>
    %93 = arith.cmpf ogt, %91, %92 : vector<32x256xf32>
    %cst_51 = arith.constant 2.000000e-01 : f32
    %94 = vector.broadcast %cst_51 : f32 to vector<32x256xf32>
    %95 = arith.mulf %94, %91 : vector<32x256xf32>
    %96 = arith.select %93, %91, %95 : vector<32x256xi1>, vector<32x256xf32>
    %c0_52 = arith.constant 0 : index
    %c128_53 = arith.constant 128 : index
    %97 = vector.load %arg11[%c0_52, %c128_53] : memref<32x401xf32, #tpu.memory_space<vmem>>, vector<32x256xf32>
    tpu.vector_store %arg11[%c0_52, %c128_53], %96 {strides = array<i32>} : memref<32x401xf32, #tpu.memory_space<vmem>>, vector<32x256xf32>,
    %cst_54 = arith.constant 0.000000e+00 : f32
    %98 = vector.broadcast %cst_54 : f32 to vector<32x256xf32>
    %c0_55 = arith.constant 0 : index
    %c111_56 = arith.constant 111 : index
    %99 = vector.load %arg11[%c0_55, %c111_56] : memref<32x401xf32, #tpu.memory_space<vmem>>, vector<32x256xf32>
    %cst_57 = arith.constant 0.000000e+00 : f32
    %100 = vector.broadcast %cst_57 : f32 to vector<32x256xf32>
    %101 = vector.shape_cast %22 : vector<1x256xi1> to vector<1x256xi1>
    %102 = vector.broadcast %101 : vector<1x256xi1> to vector<32x256xi1>
    %103 = arith.select %102, %99, %100 : vector<32x256xi1>, vector<32x256xf32>
    %c0_58 = arith.constant 0 : index
    %c0_59 = arith.constant 0 : index
    %104 = vector.load %arg4[%c0_58, %c0_59] : memref<288x32xf32, #tpu.memory_space<vmem>>, vector<32x32xf32>
    %cst_60 = arith.constant dense<0.000000e+00> : vector<32x256xf32>
    %105 = tpu.matmul %104, %103, %cst_60 {dimension_numbers = #tpu.dot_dimension_numbers<[1], [0], [0], [1], [0, 0, 1, 1], [], []>} : vector<32x32xf32>, vector<32x256xf32>, vector<32x256xf32> -> vector<32x256xf32>
    %106 = arith.addf %98, %105 : vector<32x256xf32>
    %c0_61 = arith.constant 0 : index
    %c112_62 = arith.constant 112 : index
    %107 = vector.load %arg11[%c0_61, %c112_62] : memref<32x401xf32, #tpu.memory_space<vmem>>, vector<32x256xf32>
    %c32_63 = arith.constant 32 : index
    %c0_64 = arith.constant 0 : index
    %108 = vector.load %arg4[%c32_63, %c0_64] : memref<288x32xf32, #tpu.memory_space<vmem>>, vector<32x32xf32>
    %cst_65 = arith.constant dense<0.000000e+00> : vector<32x256xf32>
    %109 = tpu.matmul %108, %107, %cst_65 {dimension_numbers = #tpu.dot_dimension_numbers<[1], [0], [0], [1], [0, 0, 1, 1], [], []>} : vector<32x32xf32>, vector<32x256xf32>, vector<32x256xf32> -> vector<32x256xf32>
    %110 = arith.addf %106, %109 : vector<32x256xf32>
    %c0_66 = arith.constant 0 : index
    %c113_67 = arith.constant 113 : index
    %111 = vector.load %arg11[%c0_66, %c113_67] : memref<32x401xf32, #tpu.memory_space<vmem>>, vector<32x256xf32>
    %cst_68 = arith.constant 0.000000e+00 : f32
    %112 = vector.broadcast %cst_68 : f32 to vector<32x256xf32>
    %113 = vector.shape_cast %24 : vector<1x256xi1> to vector<1x256xi1>
    %114 = vector.broadcast %113 : vector<1x256xi1> to vector<32x256xi1>
    %115 = arith.select %114, %111, %112 : vector<32x256xi1>, vector<32x256xf32>
    %c64_69 = arith.constant 64 : index
    %c0_70 = arith.constant 0 : index
    %116 = vector.load %arg4[%c64_69, %c0_70] : memref<288x32xf32, #tpu.memory_space<vmem>>, vector<32x32xf32>
    %cst_71 = arith.constant dense<0.000000e+00> : vector<32x256xf32>
    %117 = tpu.matmul %116, %115, %cst_71 {dimension_numbers = #tpu.dot_dimension_numbers<[1], [0], [0], [1], [0, 0, 1, 1], [], []>} : vector<32x32xf32>, vector<32x256xf32>, vector<32x256xf32> -> vector<32x256xf32>
    %118 = arith.addf %110, %117 : vector<32x256xf32>
    %c0_72 = arith.constant 0 : index
    %c127_73 = arith.constant 127 : index
    %119 = vector.load %arg11[%c0_72, %c127_73] : memref<32x401xf32, #tpu.memory_space<vmem>>, vector<32x256xf32>
    %cst_74 = arith.constant 0.000000e+00 : f32
    %120 = vector.broadcast %cst_74 : f32 to vector<32x256xf32>
    %121 = vector.shape_cast %22 : vector<1x256xi1> to vector<1x256xi1>
    %122 = vector.broadcast %121 : vector<1x256xi1> to vector<32x256xi1>
    %123 = arith.select %122, %119, %120 : vector<32x256xi1>, vector<32x256xf32>
    %c96_75 = arith.constant 96 : index
    %c0_76 = arith.constant 0 : index
    %124 = vector.load %arg4[%c96_75, %c0_76] : memref<288x32xf32, #tpu.memory_space<vmem>>, vector<32x32xf32>
    %cst_77 = arith.constant dense<0.000000e+00> : vector<32x256xf32>
    %125 = tpu.matmul %124, %123, %cst_77 {dimension_numbers = #tpu.dot_dimension_numbers<[1], [0], [0], [1], [0, 0, 1, 1], [], []>} : vector<32x32xf32>, vector<32x256xf32>, vector<32x256xf32> -> vector<32x256xf32>
    %126 = arith.addf %118, %125 : vector<32x256xf32>
    %c0_78 = arith.constant 0 : index
    %c128_79 = arith.constant 128 : index
    %127 = vector.load %arg11[%c0_78, %c128_79] : memref<32x401xf32, #tpu.memory_space<vmem>>, vector<32x256xf32>
    %c128_80 = arith.constant 128 : index
    %c0_81 = arith.constant 0 : index
    %128 = vector.load %arg4[%c128_80, %c0_81] : memref<288x32xf32, #tpu.memory_space<vmem>>, vector<32x32xf32>
    %cst_82 = arith.constant dense<0.000000e+00> : vector<32x256xf32>
    %129 = tpu.matmul %128, %127, %cst_82 {dimension_numbers = #tpu.dot_dimension_numbers<[1], [0], [0], [1], [0, 0, 1, 1], [], []>} : vector<32x32xf32>, vector<32x256xf32>, vector<32x256xf32> -> vector<32x256xf32>
    %130 = arith.addf %126, %129 : vector<32x256xf32>
    %c0_83 = arith.constant 0 : index
    %c129_84 = arith.constant 129 : index
    %131 = vector.load %arg11[%c0_83, %c129_84] : memref<32x401xf32, #tpu.memory_space<vmem>>, vector<32x256xf32>
    %cst_85 = arith.constant 0.000000e+00 : f32
    %132 = vector.broadcast %cst_85 : f32 to vector<32x256xf32>
    %133 = vector.shape_cast %24 : vector<1x256xi1> to vector<1x256xi1>
    %134 = vector.broadcast %133 : vector<1x256xi1> to vector<32x256xi1>
    %135 = arith.select %134, %131, %132 : vector<32x256xi1>, vector<32x256xf32>
    %c160_86 = arith.constant 160 : index
    %c0_87 = arith.constant 0 : index
    %136 = vector.load %arg4[%c160_86, %c0_87] : memref<288x32xf32, #tpu.memory_space<vmem>>, vector<32x32xf32>
    %cst_88 = arith.constant dense<0.000000e+00> : vector<32x256xf32>
    %137 = tpu.matmul %136, %135, %cst_88 {dimension_numbers = #tpu.dot_dimension_numbers<[1], [0], [0], [1], [0, 0, 1, 1], [], []>} : vector<32x32xf32>, vector<32x256xf32>, vector<32x256xf32> -> vector<32x256xf32>
    %138 = arith.addf %130, %137 : vector<32x256xf32>
    %c0_89 = arith.constant 0 : index
    %c143_90 = arith.constant 143 : index
    %139 = vector.load %arg11[%c0_89, %c143_90] : memref<32x401xf32, #tpu.memory_space<vmem>>, vector<32x256xf32>
    %cst_91 = arith.constant 0.000000e+00 : f32
    %140 = vector.broadcast %cst_91 : f32 to vector<32x256xf32>
    %141 = vector.shape_cast %22 : vector<1x256xi1> to vector<1x256xi1>
    %142 = vector.broadcast %141 : vector<1x256xi1> to vector<32x256xi1>
    %143 = arith.select %142, %139, %140 : vector<32x256xi1>, vector<32x256xf32>
    %c192_92 = arith.constant 192 : index
    %c0_93 = arith.constant 0 : index
    %144 = vector.load %arg4[%c192_92, %c0_93] : memref<288x32xf32, #tpu.memory_space<vmem>>, vector<32x32xf32>
    %cst_94 = arith.constant dense<0.000000e+00> : vector<32x256xf32>
    %145 = tpu.matmul %144, %143, %cst_94 {dimension_numbers = #tpu.dot_dimension_numbers<[1], [0], [0], [1], [0, 0, 1, 1], [], []>} : vector<32x32xf32>, vector<32x256xf32>, vector<32x256xf32> -> vector<32x256xf32>
    %146 = arith.addf %138, %145 : vector<32x256xf32>
    %c0_95 = arith.constant 0 : index
    %c144_96 = arith.constant 144 : index
    %147 = vector.load %arg11[%c0_95, %c144_96] : memref<32x401xf32, #tpu.memory_space<vmem>>, vector<32x256xf32>
    %c224_97 = arith.constant 224 : index
    %c0_98 = arith.constant 0 : index
    %148 = vector.load %arg4[%c224_97, %c0_98] : memref<288x32xf32, #tpu.memory_space<vmem>>, vector<32x32xf32>
    %cst_99 = arith.constant dense<0.000000e+00> : vector<32x256xf32>
    %149 = tpu.matmul %148, %147, %cst_99 {dimension_numbers = #tpu.dot_dimension_numbers<[1], [0], [0], [1], [0, 0, 1, 1], [], []>} : vector<32x32xf32>, vector<32x256xf32>, vector<32x256xf32> -> vector<32x256xf32>
    %150 = arith.addf %146, %149 : vector<32x256xf32>
    %c0_100 = arith.constant 0 : index
    %c145_101 = arith.constant 145 : index
    %151 = vector.load %arg11[%c0_100, %c145_101] : memref<32x401xf32, #tpu.memory_space<vmem>>, vector<32x256xf32>
    %cst_102 = arith.constant 0.000000e+00 : f32
    %152 = vector.broadcast %cst_102 : f32 to vector<32x256xf32>
    %153 = vector.shape_cast %24 : vector<1x256xi1> to vector<1x256xi1>
    %154 = vector.broadcast %153 : vector<1x256xi1> to vector<32x256xi1>
    %155 = arith.select %154, %151, %152 : vector<32x256xi1>, vector<32x256xf32>
    %c256_103 = arith.constant 256 : index
    %c0_104 = arith.constant 0 : index
    %156 = vector.load %arg4[%c256_103, %c0_104] : memref<288x32xf32, #tpu.memory_space<vmem>>, vector<32x32xf32>
    %cst_105 = arith.constant dense<0.000000e+00> : vector<32x256xf32>
    %157 = tpu.matmul %156, %155, %cst_105 {dimension_numbers = #tpu.dot_dimension_numbers<[1], [0], [0], [1], [0, 0, 1, 1], [], []>} : vector<32x32xf32>, vector<32x256xf32>, vector<32x256xf32> -> vector<32x256xf32>
    %158 = arith.addf %150, %157 : vector<32x256xf32>
    %c0_106 = arith.constant 0 : index
    %c0_107 = arith.constant 0 : index
    %159 = vector.load %arg5[%c0_106, %c0_107] : memref<32x1xf32, #tpu.memory_space<vmem>>, vector<32x1xf32>
    %160 = vector.broadcast %159 : vector<32x1xf32> to vector<32x256xf32>
    %161 = arith.addf %158, %160 : vector<32x256xf32>
    %cst_108 = arith.constant 0.000000e+00 : f32
    %162 = vector.broadcast %cst_108 : f32 to vector<32x256xf32>
    %163 = arith.cmpf ogt, %161, %162 : vector<32x256xf32>
    %cst_109 = arith.constant 2.000000e-01 : f32
    %164 = vector.broadcast %cst_109 : f32 to vector<32x256xf32>
    %165 = arith.mulf %164, %161 : vector<32x256xf32>
    %166 = arith.select %163, %161, %165 : vector<32x256xi1>, vector<32x256xf32>
    %c0_110 = arith.constant 0 : index
    %c128_111 = arith.constant 128 : index
    %167 = vector.load %arg11[%c0_110, %c128_111] : memref<32x401xf32, #tpu.memory_space<vmem>>, vector<32x256xf32>
    tpu.vector_store %arg11[%c0_110, %c128_111], %166 {strides = array<i32>} : memref<32x401xf32, #tpu.memory_space<vmem>>, vector<32x256xf32>,
    %cst_112 = arith.constant 0.000000e+00 : f32
    %168 = vector.broadcast %cst_112 : f32 to vector<32x256xf32>
    %c0_113 = arith.constant 0 : index
    %c111_114 = arith.constant 111 : index
    %169 = vector.load %arg11[%c0_113, %c111_114] : memref<32x401xf32, #tpu.memory_space<vmem>>, vector<32x256xf32>
    %cst_115 = arith.constant 0.000000e+00 : f32
    %170 = vector.broadcast %cst_115 : f32 to vector<32x256xf32>
    %171 = vector.shape_cast %22 : vector<1x256xi1> to vector<1x256xi1>
    %172 = vector.broadcast %171 : vector<1x256xi1> to vector<32x256xi1>
    %173 = arith.select %172, %169, %170 : vector<32x256xi1>, vector<32x256xf32>
    %c0_116 = arith.constant 0 : index
    %c0_117 = arith.constant 0 : index
    %174 = vector.load %arg6[%c0_116, %c0_117] : memref<288x32xf32, #tpu.memory_space<vmem>>, vector<32x32xf32>
    %cst_118 = arith.constant dense<0.000000e+00> : vector<32x256xf32>
    %175 = tpu.matmul %174, %173, %cst_118 {dimension_numbers = #tpu.dot_dimension_numbers<[1], [0], [0], [1], [0, 0, 1, 1], [], []>} : vector<32x32xf32>, vector<32x256xf32>, vector<32x256xf32> -> vector<32x256xf32>
    %176 = arith.addf %168, %175 : vector<32x256xf32>
    %c0_119 = arith.constant 0 : index
    %c112_120 = arith.constant 112 : index
    %177 = vector.load %arg11[%c0_119, %c112_120] : memref<32x401xf32, #tpu.memory_space<vmem>>, vector<32x256xf32>
    %c32_121 = arith.constant 32 : index
    %c0_122 = arith.constant 0 : index
    %178 = vector.load %arg6[%c32_121, %c0_122] : memref<288x32xf32, #tpu.memory_space<vmem>>, vector<32x32xf32>
    %cst_123 = arith.constant dense<0.000000e+00> : vector<32x256xf32>
    %179 = tpu.matmul %178, %177, %cst_123 {dimension_numbers = #tpu.dot_dimension_numbers<[1], [0], [0], [1], [0, 0, 1, 1], [], []>} : vector<32x32xf32>, vector<32x256xf32>, vector<32x256xf32> -> vector<32x256xf32>
    %180 = arith.addf %176, %179 : vector<32x256xf32>
    %c0_124 = arith.constant 0 : index
    %c113_125 = arith.constant 113 : index
    %181 = vector.load %arg11[%c0_124, %c113_125] : memref<32x401xf32, #tpu.memory_space<vmem>>, vector<32x256xf32>
    %cst_126 = arith.constant 0.000000e+00 : f32
    %182 = vector.broadcast %cst_126 : f32 to vector<32x256xf32>
    %183 = vector.shape_cast %24 : vector<1x256xi1> to vector<1x256xi1>
    %184 = vector.broadcast %183 : vector<1x256xi1> to vector<32x256xi1>
    %185 = arith.select %184, %181, %182 : vector<32x256xi1>, vector<32x256xf32>
    %c64_127 = arith.constant 64 : index
    %c0_128 = arith.constant 0 : index
    %186 = vector.load %arg6[%c64_127, %c0_128] : memref<288x32xf32, #tpu.memory_space<vmem>>, vector<32x32xf32>
    %cst_129 = arith.constant dense<0.000000e+00> : vector<32x256xf32>
    %187 = tpu.matmul %186, %185, %cst_129 {dimension_numbers = #tpu.dot_dimension_numbers<[1], [0], [0], [1], [0, 0, 1, 1], [], []>} : vector<32x32xf32>, vector<32x256xf32>, vector<32x256xf32> -> vector<32x256xf32>
    %188 = arith.addf %180, %187 : vector<32x256xf32>
    %c0_130 = arith.constant 0 : index
    %c127_131 = arith.constant 127 : index
    %189 = vector.load %arg11[%c0_130, %c127_131] : memref<32x401xf32, #tpu.memory_space<vmem>>, vector<32x256xf32>
    %cst_132 = arith.constant 0.000000e+00 : f32
    %190 = vector.broadcast %cst_132 : f32 to vector<32x256xf32>
    %191 = vector.shape_cast %22 : vector<1x256xi1> to vector<1x256xi1>
    %192 = vector.broadcast %191 : vector<1x256xi1> to vector<32x256xi1>
    %193 = arith.select %192, %189, %190 : vector<32x256xi1>, vector<32x256xf32>
    %c96_133 = arith.constant 96 : index
    %c0_134 = arith.constant 0 : index
    %194 = vector.load %arg6[%c96_133, %c0_134] : memref<288x32xf32, #tpu.memory_space<vmem>>, vector<32x32xf32>
    %cst_135 = arith.constant dense<0.000000e+00> : vector<32x256xf32>
    %195 = tpu.matmul %194, %193, %cst_135 {dimension_numbers = #tpu.dot_dimension_numbers<[1], [0], [0], [1], [0, 0, 1, 1], [], []>} : vector<32x32xf32>, vector<32x256xf32>, vector<32x256xf32> -> vector<32x256xf32>
    %196 = arith.addf %188, %195 : vector<32x256xf32>
    %c0_136 = arith.constant 0 : index
    %c128_137 = arith.constant 128 : index
    %197 = vector.load %arg11[%c0_136, %c128_137] : memref<32x401xf32, #tpu.memory_space<vmem>>, vector<32x256xf32>
    %c128_138 = arith.constant 128 : index
    %c0_139 = arith.constant 0 : index
    %198 = vector.load %arg6[%c128_138, %c0_139] : memref<288x32xf32, #tpu.memory_space<vmem>>, vector<32x32xf32>
    %cst_140 = arith.constant dense<0.000000e+00> : vector<32x256xf32>
    %199 = tpu.matmul %198, %197, %cst_140 {dimension_numbers = #tpu.dot_dimension_numbers<[1], [0], [0], [1], [0, 0, 1, 1], [], []>} : vector<32x32xf32>, vector<32x256xf32>, vector<32x256xf32> -> vector<32x256xf32>
    %200 = arith.addf %196, %199 : vector<32x256xf32>
    %c0_141 = arith.constant 0 : index
    %c129_142 = arith.constant 129 : index
    %201 = vector.load %arg11[%c0_141, %c129_142] : memref<32x401xf32, #tpu.memory_space<vmem>>, vector<32x256xf32>
    %cst_143 = arith.constant 0.000000e+00 : f32
    %202 = vector.broadcast %cst_143 : f32 to vector<32x256xf32>
    %203 = vector.shape_cast %24 : vector<1x256xi1> to vector<1x256xi1>
    %204 = vector.broadcast %203 : vector<1x256xi1> to vector<32x256xi1>
    %205 = arith.select %204, %201, %202 : vector<32x256xi1>, vector<32x256xf32>
    %c160_144 = arith.constant 160 : index
    %c0_145 = arith.constant 0 : index
    %206 = vector.load %arg6[%c160_144, %c0_145] : memref<288x32xf32, #tpu.memory_space<vmem>>, vector<32x32xf32>
    %cst_146 = arith.constant dense<0.000000e+00> : vector<32x256xf32>
    %207 = tpu.matmul %206, %205, %cst_146 {dimension_numbers = #tpu.dot_dimension_numbers<[1], [0], [0], [1], [0, 0, 1, 1], [], []>} : vector<32x32xf32>, vector<32x256xf32>, vector<32x256xf32> -> vector<32x256xf32>
    %208 = arith.addf %200, %207 : vector<32x256xf32>
    %c0_147 = arith.constant 0 : index
    %c143_148 = arith.constant 143 : index
    %209 = vector.load %arg11[%c0_147, %c143_148] : memref<32x401xf32, #tpu.memory_space<vmem>>, vector<32x256xf32>
    %cst_149 = arith.constant 0.000000e+00 : f32
    %210 = vector.broadcast %cst_149 : f32 to vector<32x256xf32>
    %211 = vector.shape_cast %22 : vector<1x256xi1> to vector<1x256xi1>
    %212 = vector.broadcast %211 : vector<1x256xi1> to vector<32x256xi1>
    %213 = arith.select %212, %209, %210 : vector<32x256xi1>, vector<32x256xf32>
    %c192_150 = arith.constant 192 : index
    %c0_151 = arith.constant 0 : index
    %214 = vector.load %arg6[%c192_150, %c0_151] : memref<288x32xf32, #tpu.memory_space<vmem>>, vector<32x32xf32>
    %cst_152 = arith.constant dense<0.000000e+00> : vector<32x256xf32>
    %215 = tpu.matmul %214, %213, %cst_152 {dimension_numbers = #tpu.dot_dimension_numbers<[1], [0], [0], [1], [0, 0, 1, 1], [], []>} : vector<32x32xf32>, vector<32x256xf32>, vector<32x256xf32> -> vector<32x256xf32>
    %216 = arith.addf %208, %215 : vector<32x256xf32>
    %c0_153 = arith.constant 0 : index
    %c144_154 = arith.constant 144 : index
    %217 = vector.load %arg11[%c0_153, %c144_154] : memref<32x401xf32, #tpu.memory_space<vmem>>, vector<32x256xf32>
    %c224_155 = arith.constant 224 : index
    %c0_156 = arith.constant 0 : index
    %218 = vector.load %arg6[%c224_155, %c0_156] : memref<288x32xf32, #tpu.memory_space<vmem>>, vector<32x32xf32>
    %cst_157 = arith.constant dense<0.000000e+00> : vector<32x256xf32>
    %219 = tpu.matmul %218, %217, %cst_157 {dimension_numbers = #tpu.dot_dimension_numbers<[1], [0], [0], [1], [0, 0, 1, 1], [], []>} : vector<32x32xf32>, vector<32x256xf32>, vector<32x256xf32> -> vector<32x256xf32>
    %220 = arith.addf %216, %219 : vector<32x256xf32>
    %c0_158 = arith.constant 0 : index
    %c145_159 = arith.constant 145 : index
    %221 = vector.load %arg11[%c0_158, %c145_159] : memref<32x401xf32, #tpu.memory_space<vmem>>, vector<32x256xf32>
    %cst_160 = arith.constant 0.000000e+00 : f32
    %222 = vector.broadcast %cst_160 : f32 to vector<32x256xf32>
    %223 = vector.shape_cast %24 : vector<1x256xi1> to vector<1x256xi1>
    %224 = vector.broadcast %223 : vector<1x256xi1> to vector<32x256xi1>
    %225 = arith.select %224, %221, %222 : vector<32x256xi1>, vector<32x256xf32>
    %c256_161 = arith.constant 256 : index
    %c0_162 = arith.constant 0 : index
    %226 = vector.load %arg6[%c256_161, %c0_162] : memref<288x32xf32, #tpu.memory_space<vmem>>, vector<32x32xf32>
    %cst_163 = arith.constant dense<0.000000e+00> : vector<32x256xf32>
    %227 = tpu.matmul %226, %225, %cst_163 {dimension_numbers = #tpu.dot_dimension_numbers<[1], [0], [0], [1], [0, 0, 1, 1], [], []>} : vector<32x32xf32>, vector<32x256xf32>, vector<32x256xf32> -> vector<32x256xf32>
    %228 = arith.addf %220, %227 : vector<32x256xf32>
    %c0_164 = arith.constant 0 : index
    %c0_165 = arith.constant 0 : index
    %229 = vector.load %arg7[%c0_164, %c0_165] : memref<32x1xf32, #tpu.memory_space<vmem>>, vector<32x1xf32>
    %230 = vector.broadcast %229 : vector<32x1xf32> to vector<32x256xf32>
    %231 = arith.addf %228, %230 : vector<32x256xf32>
    %cst_166 = arith.constant 0.000000e+00 : f32
    %232 = vector.broadcast %cst_166 : f32 to vector<32x256xf32>
    %233 = arith.cmpf ogt, %231, %232 : vector<32x256xf32>
    %cst_167 = arith.constant 2.000000e-01 : f32
    %234 = vector.broadcast %cst_167 : f32 to vector<32x256xf32>
    %235 = arith.mulf %234, %231 : vector<32x256xf32>
    %236 = arith.select %233, %231, %235 : vector<32x256xi1>, vector<32x256xf32>
    %c0_168 = arith.constant 0 : index
    %c128_169 = arith.constant 128 : index
    %237 = vector.load %arg11[%c0_168, %c128_169] : memref<32x401xf32, #tpu.memory_space<vmem>>, vector<32x256xf32>
    tpu.vector_store %arg11[%c0_168, %c128_169], %236 {strides = array<i32>} : memref<32x401xf32, #tpu.memory_space<vmem>>, vector<32x256xf32>,
    %cst_170 = arith.constant 0.000000e+00 : f32
    %238 = vector.broadcast %cst_170 : f32 to vector<8x256xf32>
    %c0_171 = arith.constant 0 : index
    %c111_172 = arith.constant 111 : index
    %239 = vector.load %arg11[%c0_171, %c111_172] : memref<32x401xf32, #tpu.memory_space<vmem>>, vector<32x256xf32>
    %cst_173 = arith.constant 0.000000e+00 : f32
    %240 = vector.broadcast %cst_173 : f32 to vector<32x256xf32>
    %241 = vector.shape_cast %22 : vector<1x256xi1> to vector<1x256xi1>
    %242 = vector.broadcast %241 : vector<1x256xi1> to vector<32x256xi1>
    %243 = arith.select %242, %239, %240 : vector<32x256xi1>, vector<32x256xf32>
    %c0_174 = arith.constant 0 : index
    %c0_175 = arith.constant 0 : index
    %244 = vector.load %arg8[%c0_174, %c0_175] : memref<72x32xf32, #tpu.memory_space<vmem>>, vector<8x32xf32>
    %cst_176 = arith.constant dense<0.000000e+00> : vector<8x256xf32>
    %245 = tpu.matmul %244, %243, %cst_176 {dimension_numbers = #tpu.dot_dimension_numbers<[1], [0], [0], [1], [0, 0, 1, 1], [], []>} : vector<8x32xf32>, vector<32x256xf32>, vector<8x256xf32> -> vector<8x256xf32>
    %246 = arith.addf %238, %245 : vector<8x256xf32>
    %c0_177 = arith.constant 0 : index
    %c112_178 = arith.constant 112 : index
    %247 = vector.load %arg11[%c0_177, %c112_178] : memref<32x401xf32, #tpu.memory_space<vmem>>, vector<32x256xf32>
    %c8 = arith.constant 8 : index
    %c0_179 = arith.constant 0 : index
    %248 = vector.load %arg8[%c8, %c0_179] : memref<72x32xf32, #tpu.memory_space<vmem>>, vector<8x32xf32>
    %cst_180 = arith.constant dense<0.000000e+00> : vector<8x256xf32>
    %249 = tpu.matmul %248, %247, %cst_180 {dimension_numbers = #tpu.dot_dimension_numbers<[1], [0], [0], [1], [0, 0, 1, 1], [], []>} : vector<8x32xf32>, vector<32x256xf32>, vector<8x256xf32> -> vector<8x256xf32>
    %250 = arith.addf %246, %249 : vector<8x256xf32>
    %c0_181 = arith.constant 0 : index
    %c113_182 = arith.constant 113 : index
    %251 = vector.load %arg11[%c0_181, %c113_182] : memref<32x401xf32, #tpu.memory_space<vmem>>, vector<32x256xf32>
    %cst_183 = arith.constant 0.000000e+00 : f32
    %252 = vector.broadcast %cst_183 : f32 to vector<32x256xf32>
    %253 = vector.shape_cast %24 : vector<1x256xi1> to vector<1x256xi1>
    %254 = vector.broadcast %253 : vector<1x256xi1> to vector<32x256xi1>
    %255 = arith.select %254, %251, %252 : vector<32x256xi1>, vector<32x256xf32>
    %c16 = arith.constant 16 : index
    %c0_184 = arith.constant 0 : index
    %256 = vector.load %arg8[%c16, %c0_184] : memref<72x32xf32, #tpu.memory_space<vmem>>, vector<8x32xf32>
    %cst_185 = arith.constant dense<0.000000e+00> : vector<8x256xf32>
    %257 = tpu.matmul %256, %255, %cst_185 {dimension_numbers = #tpu.dot_dimension_numbers<[1], [0], [0], [1], [0, 0, 1, 1], [], []>} : vector<8x32xf32>, vector<32x256xf32>, vector<8x256xf32> -> vector<8x256xf32>
    %258 = arith.addf %250, %257 : vector<8x256xf32>
    %c0_186 = arith.constant 0 : index
    %c127_187 = arith.constant 127 : index
    %259 = vector.load %arg11[%c0_186, %c127_187] : memref<32x401xf32, #tpu.memory_space<vmem>>, vector<32x256xf32>
    %cst_188 = arith.constant 0.000000e+00 : f32
    %260 = vector.broadcast %cst_188 : f32 to vector<32x256xf32>
    %261 = vector.shape_cast %22 : vector<1x256xi1> to vector<1x256xi1>
    %262 = vector.broadcast %261 : vector<1x256xi1> to vector<32x256xi1>
    %263 = arith.select %262, %259, %260 : vector<32x256xi1>, vector<32x256xf32>
    %c24 = arith.constant 24 : index
    %c0_189 = arith.constant 0 : index
    %264 = vector.load %arg8[%c24, %c0_189] : memref<72x32xf32, #tpu.memory_space<vmem>>, vector<8x32xf32>
    %cst_190 = arith.constant dense<0.000000e+00> : vector<8x256xf32>
    %265 = tpu.matmul %264, %263, %cst_190 {dimension_numbers = #tpu.dot_dimension_numbers<[1], [0], [0], [1], [0, 0, 1, 1], [], []>} : vector<8x32xf32>, vector<32x256xf32>, vector<8x256xf32> -> vector<8x256xf32>
    %266 = arith.addf %258, %265 : vector<8x256xf32>
    %c0_191 = arith.constant 0 : index
    %c128_192 = arith.constant 128 : index
    %267 = vector.load %arg11[%c0_191, %c128_192] : memref<32x401xf32, #tpu.memory_space<vmem>>, vector<32x256xf32>
    %c32_193 = arith.constant 32 : index
    %c0_194 = arith.constant 0 : index
    %268 = vector.load %arg8[%c32_193, %c0_194] : memref<72x32xf32, #tpu.memory_space<vmem>>, vector<8x32xf32>
    %cst_195 = arith.constant dense<0.000000e+00> : vector<8x256xf32>
    %269 = tpu.matmul %268, %267, %cst_195 {dimension_numbers = #tpu.dot_dimension_numbers<[1], [0], [0], [1], [0, 0, 1, 1], [], []>} : vector<8x32xf32>, vector<32x256xf32>, vector<8x256xf32> -> vector<8x256xf32>
    %270 = arith.addf %266, %269 : vector<8x256xf32>
    %c0_196 = arith.constant 0 : index
    %c129_197 = arith.constant 129 : index
    %271 = vector.load %arg11[%c0_196, %c129_197] : memref<32x401xf32, #tpu.memory_space<vmem>>, vector<32x256xf32>
    %cst_198 = arith.constant 0.000000e+00 : f32
    %272 = vector.broadcast %cst_198 : f32 to vector<32x256xf32>
    %273 = vector.shape_cast %24 : vector<1x256xi1> to vector<1x256xi1>
    %274 = vector.broadcast %273 : vector<1x256xi1> to vector<32x256xi1>
    %275 = arith.select %274, %271, %272 : vector<32x256xi1>, vector<32x256xf32>
    %c40 = arith.constant 40 : index
    %c0_199 = arith.constant 0 : index
    %276 = vector.load %arg8[%c40, %c0_199] : memref<72x32xf32, #tpu.memory_space<vmem>>, vector<8x32xf32>
    %cst_200 = arith.constant dense<0.000000e+00> : vector<8x256xf32>
    %277 = tpu.matmul %276, %275, %cst_200 {dimension_numbers = #tpu.dot_dimension_numbers<[1], [0], [0], [1], [0, 0, 1, 1], [], []>} : vector<8x32xf32>, vector<32x256xf32>, vector<8x256xf32> -> vector<8x256xf32>
    %278 = arith.addf %270, %277 : vector<8x256xf32>
    %c0_201 = arith.constant 0 : index
    %c143_202 = arith.constant 143 : index
    %279 = vector.load %arg11[%c0_201, %c143_202] : memref<32x401xf32, #tpu.memory_space<vmem>>, vector<32x256xf32>
    %cst_203 = arith.constant 0.000000e+00 : f32
    %280 = vector.broadcast %cst_203 : f32 to vector<32x256xf32>
    %281 = vector.shape_cast %22 : vector<1x256xi1> to vector<1x256xi1>
    %282 = vector.broadcast %281 : vector<1x256xi1> to vector<32x256xi1>
    %283 = arith.select %282, %279, %280 : vector<32x256xi1>, vector<32x256xf32>
    %c48 = arith.constant 48 : index
    %c0_204 = arith.constant 0 : index
    %284 = vector.load %arg8[%c48, %c0_204] : memref<72x32xf32, #tpu.memory_space<vmem>>, vector<8x32xf32>
    %cst_205 = arith.constant dense<0.000000e+00> : vector<8x256xf32>
    %285 = tpu.matmul %284, %283, %cst_205 {dimension_numbers = #tpu.dot_dimension_numbers<[1], [0], [0], [1], [0, 0, 1, 1], [], []>} : vector<8x32xf32>, vector<32x256xf32>, vector<8x256xf32> -> vector<8x256xf32>
    %286 = arith.addf %278, %285 : vector<8x256xf32>
    %c0_206 = arith.constant 0 : index
    %c144_207 = arith.constant 144 : index
    %287 = vector.load %arg11[%c0_206, %c144_207] : memref<32x401xf32, #tpu.memory_space<vmem>>, vector<32x256xf32>
    %c56 = arith.constant 56 : index
    %c0_208 = arith.constant 0 : index
    %288 = vector.load %arg8[%c56, %c0_208] : memref<72x32xf32, #tpu.memory_space<vmem>>, vector<8x32xf32>
    %cst_209 = arith.constant dense<0.000000e+00> : vector<8x256xf32>
    %289 = tpu.matmul %288, %287, %cst_209 {dimension_numbers = #tpu.dot_dimension_numbers<[1], [0], [0], [1], [0, 0, 1, 1], [], []>} : vector<8x32xf32>, vector<32x256xf32>, vector<8x256xf32> -> vector<8x256xf32>
    %290 = arith.addf %286, %289 : vector<8x256xf32>
    %c0_210 = arith.constant 0 : index
    %c145_211 = arith.constant 145 : index
    %291 = vector.load %arg11[%c0_210, %c145_211] : memref<32x401xf32, #tpu.memory_space<vmem>>, vector<32x256xf32>
    %cst_212 = arith.constant 0.000000e+00 : f32
    %292 = vector.broadcast %cst_212 : f32 to vector<32x256xf32>
    %293 = vector.shape_cast %24 : vector<1x256xi1> to vector<1x256xi1>
    %294 = vector.broadcast %293 : vector<1x256xi1> to vector<32x256xi1>
    %295 = arith.select %294, %291, %292 : vector<32x256xi1>, vector<32x256xf32>
    %c64_213 = arith.constant 64 : index
    %c0_214 = arith.constant 0 : index
    %296 = vector.load %arg8[%c64_213, %c0_214] : memref<72x32xf32, #tpu.memory_space<vmem>>, vector<8x32xf32>
    %cst_215 = arith.constant dense<0.000000e+00> : vector<8x256xf32>
    %297 = tpu.matmul %296, %295, %cst_215 {dimension_numbers = #tpu.dot_dimension_numbers<[1], [0], [0], [1], [0, 0, 1, 1], [], []>} : vector<8x32xf32>, vector<32x256xf32>, vector<8x256xf32> -> vector<8x256xf32>
    %298 = arith.addf %290, %297 : vector<8x256xf32>
    %c0_216 = arith.constant 0 : index
    %c0_217 = arith.constant 0 : index
    %299 = vector.load %arg9[%c0_216, %c0_217] : memref<8x1xf32, #tpu.memory_space<vmem>>, vector<8x1xf32>
    %300 = vector.broadcast %299 : vector<8x1xf32> to vector<8x256xf32>
    %301 = arith.addf %298, %300 : vector<8x256xf32>
    %302 = vector.extract_strided_slice %301 {offsets = [0, 0], sizes = [1, 256], strides = [1, 1]} : vector<8x256xf32> to vector<1x256xf32>
    %c0_218 = arith.constant 0 : index
    %c0_219 = arith.constant 0 : index
    %c0_220 = arith.constant 0 : index
    %303 = vector.load %arg10[%c0_218, %c0_219, %c0_220] : memref<1x1x256xf32, #tpu.memory_space<vmem>>, vector<1x1x256xf32>
    %304 = vector.shape_cast %303 : vector<1x1x256xf32> to vector<1x256xf32>
    %305 = vector.shape_cast %302 : vector<1x256xf32> to vector<1x1x256xf32>
    tpu.vector_store %arg10[%c0_218, %c0_219, %c0_220], %305 {strides = array<i32>} : memref<1x1x256xf32, #tpu.memory_space<vmem>>, vector<1x1x256xf32>,
    return
  }
  func.func @transform_0(%arg0: i32) -> (i32, i32, i32) {
    %c0_i32 = arith.constant 0 : i32
    %c0_i32_0 = arith.constant 0 : i32
    %c0_i32_1 = arith.constant 0 : i32
    return %arg0, %c0_i32, %c0_i32_0 : i32, i32, i32
  }
  func.func @transform_1(%arg0: i32) -> (i32, i32) {
    %c0_i32 = arith.constant 0 : i32
    %c0_i32_0 = arith.constant 0 : i32
    %c0_i32_1 = arith.constant 0 : i32
    return %c0_i32, %c0_i32_0 : i32, i32
  }
  func.func @transform_2(%arg0: i32) -> (i32, i32) {
    %c0_i32 = arith.constant 0 : i32
    %c0_i32_0 = arith.constant 0 : i32
    %c0_i32_1 = arith.constant 0 : i32
    return %c0_i32, %c0_i32_0 : i32, i32
  }
  func.func @transform_3(%arg0: i32) -> (i32, i32) {
    %c0_i32 = arith.constant 0 : i32
    %c0_i32_0 = arith.constant 0 : i32
    %c0_i32_1 = arith.constant 0 : i32
    return %c0_i32, %c0_i32_0 : i32, i32
  }
  func.func @transform_4(%arg0: i32) -> (i32, i32) {
    %c0_i32 = arith.constant 0 : i32
    %c0_i32_0 = arith.constant 0 : i32
    %c0_i32_1 = arith.constant 0 : i32
    return %c0_i32, %c0_i32_0 : i32, i32
  }
  func.func @transform_5(%arg0: i32) -> (i32, i32) {
    %c0_i32 = arith.constant 0 : i32
    %c0_i32_0 = arith.constant 0 : i32
    %c0_i32_1 = arith.constant 0 : i32
    return %c0_i32, %c0_i32_0 : i32, i32
  }
  func.func @transform_6(%arg0: i32) -> (i32, i32) {
    %c0_i32 = arith.constant 0 : i32
    %c0_i32_0 = arith.constant 0 : i32
    %c0_i32_1 = arith.constant 0 : i32
    return %c0_i32, %c0_i32_0 : i32, i32
  }
  func.func @transform_7(%arg0: i32) -> (i32, i32) {
    %c0_i32 = arith.constant 0 : i32
    %c0_i32_0 = arith.constant 0 : i32
    %c0_i32_1 = arith.constant 0 : i32
    return %c0_i32, %c0_i32_0 : i32, i32
  }
  func.func @transform_8(%arg0: i32) -> (i32, i32) {
    %c0_i32 = arith.constant 0 : i32
    %c0_i32_0 = arith.constant 0 : i32
    %c0_i32_1 = arith.constant 0 : i32
    return %c0_i32, %c0_i32_0 : i32, i32
  }
  func.func @transform_9(%arg0: i32) -> (i32, i32, i32) {
    %c0_i32 = arith.constant 0 : i32
    %c0_i32_0 = arith.constant 0 : i32
    %c0_i32_1 = arith.constant 0 : i32
    return %arg0, %c0_i32, %c0_i32_0 : i32, i32, i32
  }
}

</mosaic_0001>

<llo_original>
// kernel: fc_discriminator_img.1
$region0: #{fc_discriminator_img.1}
  #allocation0 [shape = 'u32[]', space=smem, size = 0x4, offset = 0x4, fixed_abs, tag = 'smem constant byte address 0x4 - core index']
  #allocation1 [shape = 'u32[144,128]{1,0:T(1,128)}', space=vmem, size = 0x12000, scoped, tag = 'internal scratch']
  #allocation2 [shape = 'f32[32,401]{1,0:T(8,128)}', space=vmem, size = 0x10000, scoped, tag = 'scratch operand']
  %s0 = inlined_call_operand.vmem [shape: f32[2,32,256], index: 0, kind: input, shape index: {}]
  %s1 = inlined_call_operand.vmem [shape: f32[288,32], index: 1, kind: input, shape index: {}]
  %s2 = inlined_call_operand.vmem [shape: f32[32,1], index: 2, kind: input, shape index: {}]
  %s3 = inlined_call_operand.vmem [shape: f32[288,32], index: 3, kind: input, shape index: {}]
  %s4 = inlined_call_operand.vmem [shape: f32[32,1], index: 4, kind: input, shape index: {}]
  %s5 = inlined_call_operand.vmem [shape: f32[288,32], index: 5, kind: input, shape index: {}]
  %s6 = inlined_call_operand.vmem [shape: f32[32,1], index: 6, kind: input, shape index: {}]
  %s7 = inlined_call_operand.vmem [shape: f32[72,32], index: 7, kind: input, shape index: {}]
  %s8 = inlined_call_operand.vmem [shape: f32[8,1], index: 8, kind: input, shape index: {}]
  %s9 = inlined_call_operand.vmem [shape: f32[2,1,256], index: 9, kind: output, shape index: {}]
  %s10 = sld [smem:[#allocation0]]
  $region69: #{fc_discriminator_img.1} parent=0
    _
  %s12 = ssub.s32 1, %s10
  %s13 = scalar_select 0, %s12, %s10
  loop: start=0, step=1, limit=4
  $region2: #{fc_discriminator_img.1} parent=0 // loop_pre_header
    _
  $region3: #{fc_discriminator_img.1} parent=0 // loop_header
    %s15 = sphi 0, %s19
    %p16 = scmp.ge.s32.totalorder %s15, 4
    %s25 = sphi 0, %s27
    %s28 = sphi 0, %s25
    %s29 = sphi 0, %s28
    %s45 = sphi 0, %s29
    %s49 = sphi 0, %s49
    %s51 = sphi 0, %s49
    %s52 = sphi 0, %s51
    %s66 = sphi 0, %s52
    %s70 = sphi 0, %s70
    %s72 = sphi 0, %s70
    %s73 = sphi 0, %s72
    %s87 = sphi 0, %s73
    %s91 = sphi 0, %s91
    %s93 = sphi 0, %s91
    %s94 = sphi 0, %s93
    %s108 = sphi 0, %s94
    %s112 = sphi 0, %s112
    %s114 = sphi 0, %s112
    %s115 = sphi 0, %s114
    %s129 = sphi 0, %s115
    %s133 = sphi 0, %s133
    %s135 = sphi 0, %s133
    %s136 = sphi 0, %s135
    %s150 = sphi 0, %s136
    %s154 = sphi 0, %s154
    %s156 = sphi 0, %s154
    %s157 = sphi 0, %s156
    %s171 = sphi 0, %s157
    %s175 = sphi 0, %s175
    %s177 = sphi 0, %s175
    %s178 = sphi 0, %s177
    %s192 = sphi 0, %s178
    %s196 = sphi 0, %s196
    %s198 = sphi 0, %s196
    %s199 = sphi 0, %s198
    %s213 = sphi 0, %s199
    %s219 = sphi 0, %s221
    %s222 = sphi 0, %s219
    %s223 = sphi 0, %s222
    %s239 = sphi 0, %s223
  $region4: #{fc_discriminator_img.1} parent=0 // loop_header_branch
    %18 = sbr.rel (%p16) target = $region8
  $region5: #{fc_discriminator_img.1} parent=0 // loop_body
    %s20 = ssub.s32 %s15, 1
    %s21 = ssub.s32 %s15, 2
    %s22 = sadd.s32 %s15, 1
    %s23 = ssub.s32 %s15, %s22
    %p24 = scmp.eq.s32.totalorder %s23, 0
    %s26 = sadd.s32 %s25, 1
    %s27 = scalar_select %p24, %s25, %s26
    %p30 = pneg %p24
    %p31 = scmp.eq.s32.totalorder %s15, 1
    %p32 = por %p30, %p31
    %p33 = scmp.ne.s32.totalorder %s25, %s28
    %p34 = scmp.eq.s32.totalorder %s15, 0
    %p35 = por %p33, %p34
    %p36 = scmp.ne.s32.totalorder %s25, %s28
    %p37 = scmp.eq.s32.totalorder %s20, 1
    %p38 = por %p36, %p37
    %p39 = scmp.ne.s32.totalorder %s28, %s29
    %p40 = scmp.eq.s32.totalorder %s20, 0
    %p41 = por %p39, %p40
    %p42 = scmp.ne.s32.totalorder %s28, %s29
    %p43 = scmp.eq.s32.totalorder %s21, 1
    %p44 = por %p42, %p43
    %p46 = scmp.ne.s32.totalorder %s29, %s45
    %p47 = scmp.eq.s32.totalorder %s21, 0
    %p48 = por %p46, %p47
    %s50 = sadd.s32 %s49, 1
    %p53 = scmp.eq.s32.totalorder %s15, 1
    %p54 = scmp.ne.s32.totalorder %s49, %s51
    %p55 = scmp.eq.s32.totalorder %s15, 0
    %p56 = por %p54, %p55
    %p57 = scmp.ne.s32.totalorder %s49, %s51
    %p58 = scmp.eq.s32.totalorder %s20, 1
    %p59 = por %p57, %p58
    %p60 = scmp.ne.s32.totalorder %s51, %s52
    %p61 = scmp.eq.s32.totalorder %s20, 0
    %p62 = por %p60, %p61
    %p63 = scmp.ne.s32.totalorder %s51, %s52
    %p64 = scmp.eq.s32.totalorder %s21, 1
    %p65 = por %p63, %p64
    %p67 = scmp.ne.s32.totalorder %s52, %s66
    %p68 = scmp.eq.s32.totalorder %s21, 0
    %p69 = por %p67, %p68
    %s71 = sadd.s32 %s70, 1
    %p74 = scmp.eq.s32.totalorder %s15, 1
    %p75 = scmp.ne.s32.totalorder %s70, %s72
    %p76 = scmp.eq.s32.totalorder %s15, 0
    %p77 = por %p75, %p76
    %p78 = scmp.ne.s32.totalorder %s70, %s72
    %p79 = scmp.eq.s32.totalorder %s20, 1
    %p80 = por %p78, %p79
    %p81 = scmp.ne.s32.totalorder %s72, %s73
    %p82 = scmp.eq.s32.totalorder %s20, 0
    %p83 = por %p81, %p82
    %p84 = scmp.ne.s32.totalorder %s72, %s73
    %p85 = scmp.eq.s32.totalorder %s21, 1
    %p86 = por %p84, %p85
    %p88 = scmp.ne.s32.totalorder %s73, %s87
    %p89 = scmp.eq.s32.totalorder %s21, 0
    %p90 = por %p88, %p89
    %s92 = sadd.s32 %s91, 1
    %p95 = scmp.eq.s32.totalorder %s15, 1
    %p96 = scmp.ne.s32.totalorder %s91, %s93
    %p97 = scmp.eq.s32.totalorder %s15, 0
    %p98 = por %p96, %p97
    %p99 = scmp.ne.s32.totalorder %s91, %s93
    %p100 = scmp.eq.s32.totalorder %s20, 1
    %p101 = por %p99, %p100
    %p102 = scmp.ne.s32.totalorder %s93, %s94
    %p103 = scmp.eq.s32.totalorder %s20, 0
    %p104 = por %p102, %p103
    %p105 = scmp.ne.s32.totalorder %s93, %s94
    %p106 = scmp.eq.s32.totalorder %s21, 1
    %p107 = por %p105, %p106
    %p109 = scmp.ne.s32.totalorder %s94, %s108
    %p110 = scmp.eq.s32.totalorder %s21, 0
    %p111 = por %p109, %p110
    %s113 = sadd.s32 %s112, 1
    %p116 = scmp.eq.s32.totalorder %s15, 1
    %p117 = scmp.ne.s32.totalorder %s112, %s114
    %p118 = scmp.eq.s32.totalorder %s15, 0
    %p119 = por %p117, %p118
    %p120 = scmp.ne.s32.totalorder %s112, %s114
    %p121 = scmp.eq.s32.totalorder %s20, 1
    %p122 = por %p120, %p121
    %p123 = scmp.ne.s32.totalorder %s114, %s115
    %p124 = scmp.eq.s32.totalorder %s20, 0
    %p125 = por %p123, %p124
    %p126 = scmp.ne.s32.totalorder %s114, %s115
    %p127 = scmp.eq.s32.totalorder %s21, 1
    %p128 = por %p126, %p127
    %p130 = scmp.ne.s32.totalorder %s115, %s129
    %p131 = scmp.eq.s32.totalorder %s21, 0
    %p132 = por %p130, %p131
    %s134 = sadd.s32 %s133, 1
    %p137 = scmp.eq.s32.totalorder %s15, 1
    %p138 = scmp.ne.s32.totalorder %s133, %s135
    %p139 = scmp.eq.s32.totalorder %s15, 0
    %p140 = por %p138, %p139
    %p141 = scmp.ne.s32.totalorder %s133, %s135
    %p142 = scmp.eq.s32.totalorder %s20, 1
    %p143 = por %p141, %p142
    %p144 = scmp.ne.s32.totalorder %s135, %s136
    %p145 = scmp.eq.s32.totalorder %s20, 0
    %p146 = por %p144, %p145
    %p147 = scmp.ne.s32.totalorder %s135, %s136
    %p148 = scmp.eq.s32.totalorder %s21, 1
    %p149 = por %p147, %p148
    %p151 = scmp.ne.s32.totalorder %s136, %s150
    %p152 = scmp.eq.s32.totalorder %s21, 0
    %p153 = por %p151, %p152
    %s155 = sadd.s32 %s154, 1
    %p158 = scmp.eq.s32.totalorder %s15, 1
    %p159 = scmp.ne.s32.totalorder %s154, %s156
    %p160 = scmp.eq.s32.totalorder %s15, 0
    %p161 = por %p159, %p160
    %p162 = scmp.ne.s32.totalorder %s154, %s156
    %p163 = scmp.eq.s32.totalorder %s20, 1
    %p164 = por %p162, %p163
    %p165 = scmp.ne.s32.totalorder %s156, %s157
    %p166 = scmp.eq.s32.totalorder %s20, 0
    %p167 = por %p165, %p166
    %p168 = scmp.ne.s32.totalorder %s156, %s157
    %p169 = scmp.eq.s32.totalorder %s21, 1
    %p170 = por %p168, %p169
    %p172 = scmp.ne.s32.totalorder %s157, %s171
    %p173 = scmp.eq.s32.totalorder %s21, 0
    %p174 = por %p172, %p173
    %s176 = sadd.s32 %s175, 1
    %p179 = scmp.eq.s32.totalorder %s15, 1
    %p180 = scmp.ne.s32.totalorder %s175, %s177
    %p181 = scmp.eq.s32.totalorder %s15, 0
    %p182 = por %p180, %p181
    %p183 = scmp.ne.s32.totalorder %s175, %s177
    %p184 = scmp.eq.s32.totalorder %s20, 1
    %p185 = por %p183, %p184
    %p186 = scmp.ne.s32.totalorder %s177, %s178
    %p187 = scmp.eq.s32.totalorder %s20, 0
    %p188 = por %p186, %p187
    %p189 = scmp.ne.s32.totalorder %s177, %s178
    %p190 = scmp.eq.s32.totalorder %s21, 1
    %p191 = por %p189, %p190
    %p193 = scmp.ne.s32.totalorder %s178, %s192
    %p194 = scmp.eq.s32.totalorder %s21, 0
    %p195 = por %p193, %p194
    %s197 = sadd.s32 %s196, 1
    %p200 = scmp.eq.s32.totalorder %s15, 1
    %p201 = scmp.ne.s32.totalorder %s196, %s198
    %p202 = scmp.eq.s32.totalorder %s15, 0
    %p203 = por %p201, %p202
    %p204 = scmp.ne.s32.totalorder %s196, %s198
    %p205 = scmp.eq.s32.totalorder %s20, 1
    %p206 = por %p204, %p205
    %p207 = scmp.ne.s32.totalorder %s198, %s199
    %p208 = scmp.eq.s32.totalorder %s20, 0
    %p209 = por %p207, %p208
    %p210 = scmp.ne.s32.totalorder %s198, %s199
    %p211 = scmp.eq.s32.totalorder %s21, 1
    %p212 = por %p210, %p211
    %p214 = scmp.ne.s32.totalorder %s199, %s213
    %p215 = scmp.eq.s32.totalorder %s21, 0
    %p216 = por %p214, %p215
    %s217 = ssub.s32 %s15, %s22
    %p218 = scmp.eq.s32.totalorder %s217, 0
    %s220 = sadd.s32 %s219, 1
    %s221 = scalar_select %p218, %s219, %s220
    %p224 = pneg %p218
    %p225 = scmp.eq.s32.totalorder %s15, 1
    %p226 = por %p224, %p225
    %p227 = scmp.ne.s32.totalorder %s219, %s222
    %p228 = scmp.eq.s32.totalorder %s15, 0
    %p229 = por %p227, %p228
    %p230 = scmp.ne.s32.totalorder %s219, %s222
    %p231 = scmp.eq.s32.totalorder %s20, 1
    %p232 = por %p230, %p231
    %p233 = scmp.ne.s32.totalorder %s222, %s223
    %p234 = scmp.eq.s32.totalorder %s20, 0
    %p235 = por %p233, %p234
    %p236 = scmp.ne.s32.totalorder %s222, %s223
    %p237 = scmp.eq.s32.totalorder %s21, 1
    %p238 = por %p236, %p237
    %p240 = scmp.ne.s32.totalorder %s223, %s239
    %p241 = scmp.eq.s32.totalorder %s21, 0
    %p242 = por %p240, %p241
    %p243 = scmp.le.s32.totalorder 1, %s15
    %p244 = scmp.lt.s32.totalorder %s15, 3
    %p245 = pnand %p243, %p244
    %p246 = pneg %p245
    // Predicated region
    $region9: #{fc_discriminator_img.1} parent=5 // pred_check
      _
    $region10: #{fc_discriminator_img.1} parent=5 // pred_check_branch
      %248 = sbr.rel (%p245) target = $region12
    $region11: #{fc_discriminator_img.1} parent=5 // pred_region
      %s249 = ssub.s32 %s15, 1
      // Predicated region
      $region13: #{fc_discriminator_img.1} parent=11 // pred_check
        %p250 = pneg %p62
      $region14: #{fc_discriminator_img.1} parent=11 // pred_check_branch
        %252 = sbr.rel (%p250) target = $region16
      $region15: #{fc_discriminator_img.1} parent=11 // pred_region
        _
      $region16: #{fc_discriminator_img.1} parent=11 // pred_fallthru
        _
      // Predicated region
      $region17: #{fc_discriminator_img.1} parent=11 // pred_check
        %p253 = pneg %p83
      $region18: #{fc_discriminator_img.1} parent=11 // pred_check_branch
        %255 = sbr.rel (%p253) target = $region20
      $region19: #{fc_discriminator_img.1} parent=11 // pred_region
        _
      $region20: #{fc_discriminator_img.1} parent=11 // pred_fallthru
        _
      // Predicated region
      $region21: #{fc_discriminator_img.1} parent=11 // pred_check
        %p256 = pneg %p104
      $region22: #{fc_discriminator_img.1} parent=11 // pred_check_branch
        %258 = sbr.rel (%p256) target = $region24
      $region23: #{fc_discriminator_img.1} parent=11 // pred_region
        _
      $region24: #{fc_discriminator_img.1} parent=11 // pred_fallthru
        _
      // Predicated region
      $region25: #{fc_discriminator_img.1} parent=11 // pred_check
        %p259 = pneg %p125
      $region26: #{fc_discriminator_img.1} parent=11 // pred_check_branch
        %261 = sbr.rel (%p259) target = $region28
      $region27: #{fc_discriminator_img.1} parent=11 // pred_region
        _
      $region28: #{fc_discriminator_img.1} parent=11 // pred_fallthru
        _
      // Predicated region
      $region29: #{fc_discriminator_img.1} parent=11 // pred_check
        %p262 = pneg %p146
      $region30: #{fc_discriminator_img.1} parent=11 // pred_check_branch
        %264 = sbr.rel (%p262) target = $region32
      $region31: #{fc_discriminator_img.1} parent=11 // pred_region
        _
      $region32: #{fc_discriminator_img.1} parent=11 // pred_fallthru
        _
      // Predicated region
      $region33: #{fc_discriminator_img.1} parent=11 // pred_check
        %p265 = pneg %p167
      $region34: #{fc_discriminator_img.1} parent=11 // pred_check_branch
        %267 = sbr.rel (%p265) target = $region36
      $region35: #{fc_discriminator_img.1} parent=11 // pred_region
        _
      $region36: #{fc_discriminator_img.1} parent=11 // pred_fallthru
        _
      // Predicated region
      $region37: #{fc_discriminator_img.1} parent=11 // pred_check
        %p268 = pneg %p188
      $region38: #{fc_discriminator_img.1} parent=11 // pred_check_branch
        %270 = sbr.rel (%p268) target = $region40
      $region39: #{fc_discriminator_img.1} parent=11 // pred_region
        _
      $region40: #{fc_discriminator_img.1} parent=11 // pred_fallthru
        _
      // Predicated region
      $region41: #{fc_discriminator_img.1} parent=11 // pred_check
        %p271 = pneg %p209
      $region42: #{fc_discriminator_img.1} parent=11 // pred_check_branch
        %273 = sbr.rel (%p271) target = $region44
      $region43: #{fc_discriminator_img.1} parent=11 // pred_region
        _
      $region44: #{fc_discriminator_img.1} parent=11 // pred_fallthru
        _
    $region12: #{fc_discriminator_img.1} parent=5 // pred_fallthru
      _
    %p274 = scmp.lt.s32.totalorder %s15, 2
    // Predicated region
    $region45: #{fc_discriminator_img.1} parent=5 // pred_check
      %p275 = pneg %p274
    $region46: #{fc_discriminator_img.1} parent=5 // pred_check_branch
      %277 = sbr.rel (%p275) target = $region48
    $region47: #{fc_discriminator_img.1} parent=5 // pred_region
      // Predicated region
      $region49: #{fc_discriminator_img.1} parent=47 // pred_check
        %p278 = pneg %p35
      $region50: #{fc_discriminator_img.1} parent=47 // pred_check_branch
        %280 = sbr.rel (%p278) target = $region52
      $region51: #{fc_discriminator_img.1} parent=47 // pred_region
        %p281 = scmp.lt.s32.totalorder %s15, 1
        %s282 = scalar_select %p281, %s15, 1
        %s283 = smul.addr %s282, 8
        %s284 = smul.addr %s283, 8
        %s285 = scalar_lea.vmem %s0, %s284
      $region52: #{fc_discriminator_img.1} parent=47 // pred_fallthru
        _
    $region48: #{fc_discriminator_img.1} parent=5 // pred_fallthru
      _
    %p286 = scmp.le.s32.totalorder 1, %s15
    %p287 = scmp.lt.s32.totalorder %s15, 3
    %p288 = pnand %p286, %p287
    %p289 = pneg %p288
    // Predicated region
    $region53: #{fc_discriminator_img.1} parent=5 // pred_check
      _
    $region54: #{fc_discriminator_img.1} parent=5 // pred_check_branch
      %291 = sbr.rel (%p288) target = $region56
    $region55: #{fc_discriminator_img.1} parent=5 // pred_region
      %s292 = ssub.s32 %s15, 1
      %p293 = scmp.lt.s32.totalorder %s20, 1
      %s294 = scalar_select %p293, %s20, 1
      %s295 = smul.addr %s294, 8
      %s296 = smul.addr %s295, 8
      %s297 = scalar_lea.vmem %s0, %s296
      %p298 = pneg %p41
      %p299 = pneg %p38
      %p300 = pneg %p62
      %p301 = pneg %p59
      %p302 = pneg %p83
      %p303 = pneg %p80
      %p304 = pneg %p104
      %p305 = pneg %p101
      %p306 = pneg %p125
      %p307 = pneg %p122
      %p308 = pneg %p146
      %p309 = pneg %p143
      %p310 = pneg %p167
      %p311 = pneg %p164
      %p312 = pneg %p188
      %p313 = pneg %p185
      %p314 = pneg %p209
      %p315 = pneg %p206
      %p316 = pneg %p235
      %p317 = pneg %p232
      %p318 = scmp.lt.s32.totalorder %s20, 1
      %s319 = scalar_select %p318, %s20, 1
      %s320 = smul.addr %s319, 2
      %s321 = scalar_lea.vmem %s9, %s320
      %p322 = scmp.lt.s32.totalorder %s20, 1
      %s323 = scalar_select %p322, %s20, 1
      %s324 = smul.addr %s323, 8
      %s325 = smul.addr %s324, 8
      %s326 = scalar_lea.vmem %s0, %s325
      %p327 = scmp.lt.s32.totalorder %s20, 1
      %s328 = scalar_select %p327, %s20, 1
      %s329 = smul.addr %s328, 2
      %s330 = scalar_lea.vmem %s9, %s329
      %331 = vst [vmem:[#allocation2] sm:$0xff] 0.0
      %332 = vst [vmem:[#allocation2 + $0x20] sm:$0xff] 0.0
      %333 = vst [vmem:[#allocation2 + $0x40] sm:$0xff] 0.0
      %334 = vst [vmem:[#allocation2 + $0x60] sm:$0xff] 0.0
      %vm335 = vcmask 138240
      %336 = vst.msk [vmem:[#allocation2 + $0x18] sm:$0xff] %vm335, 0.0
      %337 = vst.msk [vmem:[#allocation2 + $0x38] sm:$0xff] %vm335, 0.0
      %338 = vst.msk [vmem:[#allocation2 + $0x58] sm:$0xff] %vm335, 0.0
      %339 = vst.msk [vmem:[#allocation2 + $0x78] sm:$0xff] %vm335, 0.0
      %v340 = vlaneseq
      %v341 = vand.u32 %v340, 127
      %v342 = vadd.s32 %v341, 128
      %vm343 = vcmp.lt.s32.totalorder %v341, 0
      %v344 = vsub.s32 0, %v341
      %v345 = vsel %vm343, %v344, %v341
      %v346 = vshrl.u32 %v345, 4
      %v347 = vand.u32 %v345, 15
      %v348 = vsub.s32 0, %v347
      %v349 = vsel %vm343, %v348, %v347
      %vm350 = vcmp.lt.s32.totalorder %v342, 0
      %v351 = vsub.s32 0, %v342
      %v352 = vsel %vm350, %v351, %v342
      %v353 = vshrl.u32 %v352, 4
      %v354 = vand.u32 %v352, 15
      %v355 = vsub.s32 0, %v354
      %v356 = vsel %vm350, %v355, %v354
      %vm357 = vcmp.ne.s32.totalorder %v349, 0
      %vm358 = vcmp.ne.s32.totalorder %v356, 0
      %vm359 = vcmp.lt.s32.totalorder %v349, 0
      %vm360 = vcmp.lt.s32.totalorder %v356, 0
      %vm361 = vmand %vm359, %vm357
      %vm362 = vmand %vm360, %vm358
      %v363 = vadd.s32 %v349, 16
      %v364 = vadd.s32 %v356, 16
      %v365 = vsel %vm361, %v363, %v349
      %v366 = vsel %vm362, %v364, %v356
      %vm367 = vcmp.ne.s32.totalorder %v365, 0
      %vm368 = vcmp.ne.s32.totalorder %v366, 0
      %vm369 = vcmp.ne.s32.totalorder %v365, 15
      %vm370 = vcmp.ne.s32.totalorder %v366, 15
      %v371 = vld [vmem:[%s326] sm:$0xff]
      %v372 = vld [vmem:[%s326 + $0x8] sm:$0xff]
      %v373 = vld [vmem:[%s326 + $0x10] sm:$0xff]
      %v374 = vld [vmem:[%s326 + $0x18] sm:$0xff]
      %v375 = vld [vmem:[%s326 + $0x20] sm:$0xff]
      %v376 = vld [vmem:[%s326 + $0x28] sm:$0xff]
      %v377 = vld [vmem:[%s326 + $0x30] sm:$0xff]
      %v378 = vld [vmem:[%s326 + $0x38] sm:$0xff]
      %379 = vst [vmem:[#allocation2 + $0x8] sm:$0xff] %v371
      %380 = vst [vmem:[#allocation2 + $0x10] sm:$0xff] %v372
      %381 = vst [vmem:[#allocation2 + $0x28] sm:$0xff] %v373
      %382 = vst [vmem:[#allocation2 + $0x30] sm:$0xff] %v374
      %383 = vst [vmem:[#allocation2 + $0x48] sm:$0xff] %v375
      %384 = vst [vmem:[#allocation2 + $0x50] sm:$0xff] %v376
      %385 = vst [vmem:[#allocation2 + $0x68] sm:$0xff] %v377
      %386 = vst [vmem:[#allocation2 + $0x70] sm:$0xff] %v378
      %v387 = vld [vmem:[#allocation2] sm:$0xff]
      %v388 = vld [vmem:[#allocation2 + $0x8] sm:$0xff]
      %v389 = vld [vmem:[#allocation2 + $0x10] sm:$0xff]
      %v390 = vld [vmem:[#allocation2 + $0x20] sm:$0xff]
      %v391 = vld [vmem:[#allocation2 + $0x28] sm:$0xff]
      %v392 = vld [vmem:[#allocation2 + $0x30] sm:$0xff]
      %v393 = vld [vmem:[#allocation2 + $0x40] sm:$0xff]
      %v394 = vld [vmem:[#allocation2 + $0x48] sm:$0xff]
      %v395 = vld [vmem:[#allocation2 + $0x50] sm:$0xff]
      %v396 = vld [vmem:[#allocation2 + $0x60] sm:$0xff]
      %v397 = vld [vmem:[#allocation2 + $0x68] sm:$0xff]
      %v398 = vld [vmem:[#allocation2 + $0x70] sm:$0xff]
      %v399 = vsel %vm367, 1, 0
      %v400 = vsel %vm368, 1, 0
      %vm401 = vcmp.eq.s32.totalorder %v399, 1
      %vm402 = vcmp.eq.s32.totalorder %v400, 1
      %415 = vrot.lane.b32.xlu0 %v387, 17
      %v416 = vpop.permute.xlu0 %415
      %417 = vrot.lane.b32.xlu0 %v388, 17
      %v418 = vpop.permute.xlu0 %417
      %419 = vrot.lane.b32.xlu0 %v389, 17
      %v420 = vpop.permute.xlu0 %419
      %421 = vrot.lane.b32.xlu0 %v390, 17
      %v422 = vpop.permute.xlu0 %421
      %423 = vrot.lane.b32.xlu0 %v391, 17
      %v424 = vpop.permute.xlu0 %423
      %425 = vrot.lane.b32.xlu0 %v392, 17
      %v426 = vpop.permute.xlu0 %425
      %427 = vrot.lane.b32.xlu0 %v393, 17
      %v428 = vpop.permute.xlu0 %427
      %429 = vrot.lane.b32.xlu0 %v394, 17
      %v430 = vpop.permute.xlu0 %429
      %431 = vrot.lane.b32.xlu0 %v395, 17
      %v432 = vpop.permute.xlu0 %431
      %433 = vrot.lane.b32.xlu0 %v396, 17
      %v434 = vpop.permute.xlu0 %433
      %435 = vrot.lane.b32.xlu0 %v397, 17
      %v436 = vpop.permute.xlu0 %435
      %437 = vrot.lane.b32.xlu0 %v398, 17
      %v438 = vpop.permute.xlu0 %437
      %v439 = vsel %vm335, %v416, %v418
      %v440 = vsel %vm335, %v418, %v420
      %v441 = vsel %vm335, %v422, %v424
      %v442 = vsel %vm335, %v424, %v426
      %v443 = vsel %vm335, %v428, %v430
      %v444 = vsel %vm335, %v430, %v432
      %v445 = vsel %vm335, %v434, %v436
      %v446 = vsel %vm335, %v436, %v438
      %v455 = vsel %vm401, %v439, 0.0
      %v456 = vsel %vm402, %v440, 0.0
      %v457 = vsel %vm401, %v441, 0.0
      %v458 = vsel %vm402, %v442, 0.0
      %v459 = vsel %vm401, %v443, 0.0
      %v460 = vsel %vm402, %v444, 0.0
      %v461 = vsel %vm401, %v445, 0.0
      %v462 = vsel %vm402, %v446, 0.0
      %v463 = vld [vmem:[%s1] sm:$0xff]
      %v464 = vld [vmem:[%s1 + $0x8] sm:$0xff]
      %v465 = vld [vmem:[%s1 + $0x10] sm:$0xff]
      %v466 = vld [vmem:[%s1 + $0x18] sm:$0xff]
      %v467 = vld [vmem:[%s1 + $0x20] sm:$0xff]
      %v468 = vld [vmem:[%s1 + $0x28] sm:$0xff]
      %v469 = vld [vmem:[%s1 + $0x30] sm:$0xff]
      %v470 = vld [vmem:[%s1 + $0x38] sm:$0xff]
      %471 = vrot.lane.b32.xlu0 %v387, 16
      %v472 = vpop.permute.xlu0 %471
      %473 = vrot.lane.b32.xlu0 %v388, 16
      %v474 = vpop.permute.xlu0 %473
      %475 = vrot.lane.b32.xlu0 %v389, 16
      %v476 = vpop.permute.xlu0 %475
      %477 = vrot.lane.b32.xlu0 %v390, 16
      %v478 = vpop.permute.xlu0 %477
      %479 = vrot.lane.b32.xlu0 %v391, 16
      %v480 = vpop.permute.xlu0 %479
      %481 = vrot.lane.b32.xlu0 %v392, 16
      %v482 = vpop.permute.xlu0 %481
      %483 = vrot.lane.b32.xlu0 %v393, 16
      %v484 = vpop.permute.xlu0 %483
      %485 = vrot.lane.b32.xlu0 %v394, 16
      %v486 = vpop.permute.xlu0 %485
      %487 = vrot.lane.b32.xlu0 %v395, 16
      %v488 = vpop.permute.xlu0 %487
      %489 = vrot.lane.b32.xlu0 %v396, 16
      %v490 = vpop.permute.xlu0 %489
      %491 = vrot.lane.b32.xlu0 %v397, 16
      %v492 = vpop.permute.xlu0 %491
      %493 = vrot.lane.b32.xlu0 %v398, 16
      %v494 = vpop.permute.xlu0 %493
      %vm495 = vcmask 130048
      %v496 = vsel %vm495, %v472, %v474
      %v497 = vsel %vm495, %v474, %v476
      %v498 = vsel %vm495, %v478, %v480
      %v499 = vsel %vm495, %v480, %v482
      %v500 = vsel %vm495, %v484, %v486
      %v501 = vsel %vm495, %v486, %v488
      %v502 = vsel %vm495, %v490, %v492
      %v503 = vsel %vm495, %v492, %v494
      %vm512 = vcmask 261120
      %v514 = vsel %vm512, %v467, 0
      %v517 = vsel %vm512, %v468, 0
      %v520 = vsel %vm512, %v469, 0
      %v523 = vsel %vm512, %v470, 0
      %525 = vmatprep.subr.mxu0 %v497
      %526 = vmatpush1.msra.mxu0 %v496
      %527 = vmatprep.subr.mxu0 %v499
      %528 = vmatpush1.msra.mxu0 %v498
      %529 = vmatprep.subr.mxu0 %v501
      %530 = vmatpush1.msra.mxu0 %v500
      %531 = vmatprep.subr.mxu0 %v503
      %532 = vmatpush1.msra.mxu0 %v502
      %533 = vmatprep.subr.mxu0 0.0
      %534 = vmatpush1.msra.mxu0 0.0
      %535 = vmatprep.subr.mxu0 0.0
      %536 = vmatpush1.msra.mxu0 0.0
      %537 = vmatprep.subr.mxu0 0.0
      %538 = vmatpush1.msra.mxu0 0.0
      %539 = vmatprep.subr.mxu0 0.0
      %540 = vmatpush1.msra.mxu0 0.0
      %541 = vmatprep.subr.mxu0 0.0
      %542 = vmatpush1.msra.mxu0 0.0
      %543 = vmatprep.subr.mxu0 0.0
      %544 = vmatpush1.msra.mxu0 0.0
      %545 = vmatprep.subr.mxu0 0.0
      %546 = vmatpush1.msra.mxu0 0.0
      %547 = vmatprep.subr.mxu0 0.0
      %548 = vmatpush1.msra.mxu0 0.0
      %549 = vmatprep.subr.mxu0 0.0
      %550 = vmatpush1.msra.mxu0 0.0
      %551 = vmatprep.subr.mxu0 0.0
      %552 = vmatpush1.msra.mxu0 0.0
      %553 = vmatprep.subr.mxu0 0.0
      %554 = vmatpush1.msra.mxu0 0.0
      %555 = vmatprep.subr.mxu0 0.0
      %556 = vmatpush1.msra.mxu0 0.0
      %557 = vmatprep.subr.mxu0 0.0
      %558 = vmatpush1.msra.mxu0 0.0
      %559 = vmatprep.subr.mxu0 0.0
      %560 = vmatpush1.msra.mxu0 0.0
      %561 = vmatprep.subr.mxu0 0.0
      %562 = vmatpush1.msra.mxu0 0.0
      %563 = vmatprep.subr.mxu0 0.0
      %564 = vmatpush1.msra.mxu0 0.0
      %565 = vmatprep.subr.mxu0 0.0
      %566 = vmatpush1.msra.mxu0 0.0
      %567 = vmatprep.subr.mxu0 0.0
      %568 = vmatpush1.msra.mxu0 0.0
      %569 = vmatprep.subr.mxu0 0.0
      %570 = vmatpush1.msra.mxu0 0.0
      %571 = vmatprep.subr.mxu0 0.0
      %572 = vmatpush1.msra.mxu0 0.0
      %573 = vmatprep.subr.mxu0 0.0
      %574 = vmatpush1.msra.mxu0 0.0
      %575 = vmatprep.subr.mxu0 0.0
      %576 = vmatpush1.msra.mxu0 0.0
      %577 = vmatprep.subr.mxu0 0.0
      %578 = vmatpush1.msra.mxu0 0.0
      %579 = vmatprep.subr.mxu0 0.0
      %580 = vmatpush1.msra.mxu0 0.0
      %581 = vmatprep.subr.mxu0 0.0
      %582 = vmatpush1.msra.mxu0 0.0
      %583 = vmatprep.subr.mxu0 0.0
      %584 = vmatpush1.msra.mxu0 0.0
      %585 = vmatprep.subr.mxu0 0.0
      %586 = vmatpush1.msra.mxu0 0.0
      %587 = vmatprep.subr.mxu0 0.0
      %588 = vmatpush1.msra.mxu0 0.0
      %589 = vmatprep.mubr.f32.mxu0 0.0
      %590 = vmatmul.mubr.f32.gmra.mrb[0].mxu0 %v514
      %v591 = vpop.f32.mrb[0].mxu0
      %v592 = vadd.f32 0.0, %v591
      %v593 = vpop.f32.mrb[0].mxu0
      %v594 = vadd.f32 0.0, %v593
      %595 = vmatprep.mubr.f32.mxu0 0.0
      %596 = vmatmul.mubr.f32.gmra.mrb[0].mxu0 %v517
      %v597 = vpop.f32.mrb[0].mxu0
      %v598 = vadd.f32 0.0, %v597
      %v599 = vpop.f32.mrb[0].mxu0
      %v600 = vadd.f32 0.0, %v599
      %601 = vmatprep.mubr.f32.mxu0 0.0
      %602 = vmatmul.mubr.f32.gmra.mrb[0].mxu0 %v520
      %v603 = vpop.f32.mrb[0].mxu0
      %v604 = vadd.f32 0.0, %v603
      %v605 = vpop.f32.mrb[0].mxu0
      %v606 = vadd.f32 0.0, %v605
      %607 = vmatprep.mubr.f32.mxu0 0.0
      %608 = vmatmul.mubr.f32.gmra.mrb[0].mxu0 %v523
      %v609 = vpop.f32.mrb[0].mxu0
      %v610 = vadd.f32 0.0, %v609
      %v611 = vpop.f32.mrb[0].mxu0
      %v612 = vadd.f32 0.0, %v611
      %613 = vdwg.mxu0
      %v615 = vsel %vm512, %v463, 0
      %v618 = vsel %vm512, %v464, 0
      %v621 = vsel %vm512, %v465, 0
      %v624 = vsel %vm512, %v466, 0
      %626 = vmatprep.subr.mxu0 %v456
      %627 = vmatpush1.msra.mxu0 %v455
      %628 = vmatprep.subr.mxu0 %v458
      %629 = vmatpush1.msra.mxu0 %v457
      %630 = vmatprep.subr.mxu0 %v460
      %631 = vmatpush1.msra.mxu0 %v459
      %632 = vmatprep.subr.mxu0 %v462
      %633 = vmatpush1.msra.mxu0 %v461
      %634 = vmatprep.subr.mxu0 0.0
      %635 = vmatpush1.msra.mxu0 0.0
      %636 = vmatprep.subr.mxu0 0.0
      %637 = vmatpush1.msra.mxu0 0.0
      %638 = vmatprep.subr.mxu0 0.0
      %639 = vmatpush1.msra.mxu0 0.0
      %640 = vmatprep.subr.mxu0 0.0
      %641 = vmatpush1.msra.mxu0 0.0
      %642 = vmatprep.subr.mxu0 0.0
      %643 = vmatpush1.msra.mxu0 0.0
      %644 = vmatprep.subr.mxu0 0.0
      %645 = vmatpush1.msra.mxu0 0.0
      %646 = vmatprep.subr.mxu0 0.0
      %647 = vmatpush1.msra.mxu0 0.0
      %648 = vmatprep.subr.mxu0 0.0
      %649 = vmatpush1.msra.mxu0 0.0
      %650 = vmatprep.subr.mxu0 0.0
      %651 = vmatpush1.msra.mxu0 0.0
      %652 = vmatprep.subr.mxu0 0.0
      %653 = vmatpush1.msra.mxu0 0.0
      %654 = vmatprep.subr.mxu0 0.0
      %655 = vmatpush1.msra.mxu0 0.0
      %656 = vmatprep.subr.mxu0 0.0
      %657 = vmatpush1.msra.mxu0 0.0
      %658 = vmatprep.subr.mxu0 0.0
      %659 = vmatpush1.msra.mxu0 0.0
      %660 = vmatprep.subr.mxu0 0.0
      %661 = vmatpush1.msra.mxu0 0.0
      %662 = vmatprep.subr.mxu0 0.0
      %663 = vmatpush1.msra.mxu0 0.0
      %664 = vmatprep.subr.mxu0 0.0
      %665 = vmatpush1.msra.mxu0 0.0
      %666 = vmatprep.subr.mxu0 0.0
      %667 = vmatpush1.msra.mxu0 0.0
      %668 = vmatprep.subr.mxu0 0.0
      %669 = vmatpush1.msra.mxu0 0.0
      %670 = vmatprep.subr.mxu0 0.0
      %671 = vmatpush1.msra.mxu0 0.0
      %672 = vmatprep.subr.mxu0 0.0
      %673 = vmatpush1.msra.mxu0 0.0
      %674 = vmatprep.subr.mxu0 0.0
      %675 = vmatpush1.msra.mxu0 0.0
      %676 = vmatprep.subr.mxu0 0.0
      %677 = vmatpush1.msra.mxu0 0.0
      %678 = vmatprep.subr.mxu0 0.0
      %679 = vmatpush1.msra.mxu0 0.0
      %680 = vmatprep.subr.mxu0 0.0
      %681 = vmatpush1.msra.mxu0 0.0
      %682 = vmatprep.subr.mxu0 0.0
      %683 = vmatpush1.msra.mxu0 0.0
      %684 = vmatprep.subr.mxu0 0.0
      %685 = vmatpush1.msra.mxu0 0.0
      %686 = vmatprep.subr.mxu0 0.0
      %687 = vmatpush1.msra.mxu0 0.0
      %688 = vmatprep.subr.mxu0 0.0
      %689 = vmatpush1.msra.mxu0 0.0
      %690 = vmatprep.mubr.f32.mxu0 0.0
      %691 = vmatmul.mubr.f32.gmra.mrb[0].mxu0 %v615
      %v692 = vpop.f32.mrb[0].mxu0
      %v693 = vadd.f32 %v592, %v692
      %v694 = vpop.f32.mrb[0].mxu0
      %v695 = vadd.f32 %v594, %v694
      %696 = vmatprep.mubr.f32.mxu0 0.0
      %697 = vmatmul.mubr.f32.gmra.mrb[0].mxu0 %v618
      %v698 = vpop.f32.mrb[0].mxu0
      %v699 = vadd.f32 %v598, %v698
      %v700 = vpop.f32.mrb[0].mxu0
      %v701 = vadd.f32 %v600, %v700
      %702 = vmatprep.mubr.f32.mxu0 0.0
      %703 = vmatmul.mubr.f32.gmra.mrb[0].mxu0 %v621
      %v704 = vpop.f32.mrb[0].mxu0
      %v705 = vadd.f32 %v604, %v704
      %v706 = vpop.f32.mrb[0].mxu0
      %v707 = vadd.f32 %v606, %v706
      %708 = vmatprep.mubr.f32.mxu0 0.0
      %709 = vmatmul.mubr.f32.gmra.mrb[0].mxu0 %v624
      %v710 = vpop.f32.mrb[0].mxu0
      %v711 = vadd.f32 %v610, %v710
      %v712 = vpop.f32.mrb[0].mxu0
      %v713 = vadd.f32 %v612, %v712
      %714 = vdwg.mxu0
      %v715 = vsel %vm369, 1, 0
      %v716 = vsel %vm370, 1, 0
      %vm717 = vcmp.eq.s32.totalorder %v715, 1
      %vm718 = vcmp.eq.s32.totalorder %v716, 1
      %719 = vrot.lane.b32.xlu0 %v387, 15
      %v720 = vpop.permute.xlu0 %719
      %721 = vrot.lane.b32.xlu0 %v388, 15
      %v722 = vpop.permute.xlu0 %721
      %723 = vrot.lane.b32.xlu0 %v389, 15
      %v724 = vpop.permute.xlu0 %723
      %725 = vrot.lane.b32.xlu0 %v390, 15
      %v726 = vpop.permute.xlu0 %725
      %727 = vrot.lane.b32.xlu0 %v391, 15
      %v728 = vpop.permute.xlu0 %727
      %729 = vrot.lane.b32.xlu0 %v392, 15
      %v730 = vpop.permute.xlu0 %729
      %731 = vrot.lane.b32.xlu0 %v393, 15
      %v732 = vpop.permute.xlu0 %731
      %733 = vrot.lane.b32.xlu0 %v394, 15
      %v734 = vpop.permute.xlu0 %733
      %735 = vrot.lane.b32.xlu0 %v395, 15
      %v736 = vpop.permute.xlu0 %735
      %737 = vrot.lane.b32.xlu0 %v396, 15
      %v738 = vpop.permute.xlu0 %737
      %739 = vrot.lane.b32.xlu0 %v397, 15
      %v740 = vpop.permute.xlu0 %739
      %741 = vrot.lane.b32.xlu0 %v398, 15
      %v742 = vpop.permute.xlu0 %741
      %vm743 = vcmask 121856
      %v744 = vsel %vm743, %v720, %v722
      %v745 = vsel %vm743, %v722, %v724
      %v746 = vsel %vm743, %v726, %v728
      %v747 = vsel %vm743, %v728, %v730
      %v748 = vsel %vm743, %v732, %v734
      %v749 = vsel %vm743, %v734, %v736
      %v750 = vsel %vm743, %v738, %v740
      %v751 = vsel %vm743, %v740, %v742
      %v760 = vsel %vm717, %v744, 0.0
      %v761 = vsel %vm718, %v745, 0.0
      %v762 = vsel %vm717, %v746, 0.0
      %v763 = vsel %vm718, %v747, 0.0
      %v764 = vsel %vm717, %v748, 0.0
      %v765 = vsel %vm718, %v749, 0.0
      %v766 = vsel %vm717, %v750, 0.0
      %v767 = vsel %vm718, %v751, 0.0
      %v768 = vld [vmem:[%s1 + $0x40] sm:$0xff]
      %v769 = vld [vmem:[%s1 + $0x48] sm:$0xff]
      %v770 = vld [vmem:[%s1 + $0x50] sm:$0xff]
      %v771 = vld [vmem:[%s1 + $0x58] sm:$0xff]
      %v773 = vsel %vm512, %v768, 0
      %v776 = vsel %vm512, %v769, 0
      %v779 = vsel %vm512, %v770, 0
      %v782 = vsel %vm512, %v771, 0
      %784 = vmatprep.subr.mxu0 %v761
      %785 = vmatpush1.msra.mxu0 %v760
      %786 = vmatprep.subr.mxu0 %v763
      %787 = vmatpush1.msra.mxu0 %v762
      %788 = vmatprep.subr.mxu0 %v765
      %789 = vmatpush1.msra.mxu0 %v764
      %790 = vmatprep.subr.mxu0 %v767
      %791 = vmatpush1.msra.mxu0 %v766
      %792 = vmatprep.subr.mxu0 0.0
      %793 = vmatpush1.msra.mxu0 0.0
      %794 = vmatprep.subr.mxu0 0.0
      %795 = vmatpush1.msra.mxu0 0.0
      %796 = vmatprep.subr.mxu0 0.0
      %797 = vmatpush1.msra.mxu0 0.0
      %798 = vmatprep.subr.mxu0 0.0
      %799 = vmatpush1.msra.mxu0 0.0
      %800 = vmatprep.subr.mxu0 0.0
      %801 = vmatpush1.msra.mxu0 0.0
      %802 = vmatprep.subr.mxu0 0.0
      %803 = vmatpush1.msra.mxu0 0.0
      %804 = vmatprep.subr.mxu0 0.0
      %805 = vmatpush1.msra.mxu0 0.0
      %806 = vmatprep.subr.mxu0 0.0
      %807 = vmatpush1.msra.mxu0 0.0
      %808 = vmatprep.subr.mxu0 0.0
      %809 = vmatpush1.msra.mxu0 0.0
      %810 = vmatprep.subr.mxu0 0.0
      %811 = vmatpush1.msra.mxu0 0.0
      %812 = vmatprep.subr.mxu0 0.0
      %813 = vmatpush1.msra.mxu0 0.0
      %814 = vmatprep.subr.mxu0 0.0
      %815 = vmatpush1.msra.mxu0 0.0
      %816 = vmatprep.subr.mxu0 0.0
      %817 = vmatpush1.msra.mxu0 0.0
      %818 = vmatprep.subr.mxu0 0.0
      %819 = vmatpush1.msra.mxu0 0.0
      %820 = vmatprep.subr.mxu0 0.0
      %821 = vmatpush1.msra.mxu0 0.0
      %822 = vmatprep.subr.mxu0 0.0
      %823 = vmatpush1.msra.mxu0 0.0
      %824 = vmatprep.subr.mxu0 0.0
      %825 = vmatpush1.msra.mxu0 0.0
      %826 = vmatprep.subr.mxu0 0.0
      %827 = vmatpush1.msra.mxu0 0.0
      %828 = vmatprep.subr.mxu0 0.0
      %829 = vmatpush1.msra.mxu0 0.0
      %830 = vmatprep.subr.mxu0 0.0
      %831 = vmatpush1.msra.mxu0 0.0
      %832 = vmatprep.subr.mxu0 0.0
      %833 = vmatpush1.msra.mxu0 0.0
      %834 = vmatprep.subr.mxu0 0.0
      %835 = vmatpush1.msra.mxu0 0.0
      %836 = vmatprep.subr.mxu0 0.0
      %837 = vmatpush1.msra.mxu0 0.0
      %838 = vmatprep.subr.mxu0 0.0
      %839 = vmatpush1.msra.mxu0 0.0
      %840 = vmatprep.subr.mxu0 0.0
      %841 = vmatpush1.msra.mxu0 0.0
      %842 = vmatprep.subr.mxu0 0.0
      %843 = vmatpush1.msra.mxu0 0.0
      %844 = vmatprep.subr.mxu0 0.0
      %845 = vmatpush1.msra.mxu0 0.0
      %846 = vmatprep.subr.mxu0 0.0
      %847 = vmatpush1.msra.mxu0 0.0
      %848 = vmatprep.mubr.f32.mxu0 0.0
      %849 = vmatmul.mubr.f32.gmra.mrb[0].mxu0 %v773
      %v850 = vpop.f32.mrb[0].mxu0
      %v851 = vadd.f32 0.0, %v850
      %v852 = vpop.f32.mrb[0].mxu0
      %v853 = vadd.f32 0.0, %v852
      %854 = vmatprep.mubr.f32.mxu0 0.0
      %855 = vmatmul.mubr.f32.gmra.mrb[0].mxu0 %v776
      %v856 = vpop.f32.mrb[0].mxu0
      %v857 = vadd.f32 0.0, %v856
      %v858 = vpop.f32.mrb[0].mxu0
      %v859 = vadd.f32 0.0, %v858
      %860 = vmatprep.mubr.f32.mxu0 0.0
      %861 = vmatmul.mubr.f32.gmra.mrb[0].mxu0 %v779
      %v862 = vpop.f32.mrb[0].mxu0
      %v863 = vadd.f32 0.0, %v862
      %v864 = vpop.f32.mrb[0].mxu0
      %v865 = vadd.f32 0.0, %v864
      %866 = vmatprep.mubr.f32.mxu0 0.0
      %867 = vmatmul.mubr.f32.gmra.mrb[0].mxu0 %v782
      %v868 = vpop.f32.mrb[0].mxu0
      %v869 = vadd.f32 0.0, %v868
      %v870 = vpop.f32.mrb[0].mxu0
      %v871 = vadd.f32 0.0, %v870
      %872 = vdwg.mxu0
      %v873 = vadd.f32 %v693, %v851
      %v874 = vadd.f32 %v695, %v853
      %v875 = vadd.f32 %v699, %v857
      %v876 = vadd.f32 %v701, %v859
      %v877 = vadd.f32 %v705, %v863
      %v878 = vadd.f32 %v707, %v865
      %v879 = vadd.f32 %v711, %v869
      %v880 = vadd.f32 %v713, %v871
      %881 = vrot.lane.b32.xlu0 %v387, 1
      %v882 = vpop.permute.xlu0 %881
      %883 = vrot.lane.b32.xlu0 %v388, 1
      %v884 = vpop.permute.xlu0 %883
      %885 = vrot.lane.b32.xlu0 %v389, 1
      %v886 = vpop.permute.xlu0 %885
      %887 = vrot.lane.b32.xlu0 %v390, 1
      %v888 = vpop.permute.xlu0 %887
      %889 = vrot.lane.b32.xlu0 %v391, 1
      %v890 = vpop.permute.xlu0 %889
      %891 = vrot.lane.b32.xlu0 %v392, 1
      %v892 = vpop.permute.xlu0 %891
      %893 = vrot.lane.b32.xlu0 %v393, 1
      %v894 = vpop.permute.xlu0 %893
      %895 = vrot.lane.b32.xlu0 %v394, 1
      %v896 = vpop.permute.xlu0 %895
      %897 = vrot.lane.b32.xlu0 %v395, 1
      %v898 = vpop.permute.xlu0 %897
      %899 = vrot.lane.b32.xlu0 %v396, 1
      %v900 = vpop.permute.xlu0 %899
      %901 = vrot.lane.b32.xlu0 %v397, 1
      %v902 = vpop.permute.xlu0 %901
      %903 = vrot.lane.b32.xlu0 %v398, 1
      %v904 = vpop.permute.xlu0 %903
      %vm905 = vcmask 7168
      %v906 = vsel %vm905, %v882, %v884
      %v907 = vsel %vm905, %v884, %v886
      %v908 = vsel %vm905, %v888, %v890
      %v909 = vsel %vm905, %v890, %v892
      %v910 = vsel %vm905, %v894, %v896
      %v911 = vsel %vm905, %v896, %v898
      %v912 = vsel %vm905, %v900, %v902
      %v913 = vsel %vm905, %v902, %v904
      %v922 = vsel %vm401, %v906, 0.0
      %v923 = vsel %vm402, %v907, 0.0
      %v924 = vsel %vm401, %v908, 0.0
      %v925 = vsel %vm402, %v909, 0.0
      %v926 = vsel %vm401, %v910, 0.0
      %v927 = vsel %vm402, %v911, 0.0
      %v928 = vsel %vm401, %v912, 0.0
      %v929 = vsel %vm402, %v913, 0.0
      %v930 = vld [vmem:[%s1 + $0x60] sm:$0xff]
      %v931 = vld [vmem:[%s1 + $0x68] sm:$0xff]
      %v932 = vld [vmem:[%s1 + $0x70] sm:$0xff]
      %v933 = vld [vmem:[%s1 + $0x78] sm:$0xff]
      %v935 = vsel %vm512, %v930, 0
      %v938 = vsel %vm512, %v931, 0
      %v941 = vsel %vm512, %v932, 0
      %v944 = vsel %vm512, %v933, 0
      %946 = vmatprep.subr.mxu0 %v923
      %947 = vmatpush1.msra.mxu0 %v922
      %948 = vmatprep.subr.mxu0 %v925
      %949 = vmatpush1.msra.mxu0 %v924
      %950 = vmatprep.subr.mxu0 %v927
      %951 = vmatpush1.msra.mxu0 %v926
      %952 = vmatprep.subr.mxu0 %v929
      %953 = vmatpush1.msra.mxu0 %v928
      %954 = vmatprep.subr.mxu0 0.0
      %955 = vmatpush1.msra.mxu0 0.0
      %956 = vmatprep.subr.mxu0 0.0
      %957 = vmatpush1.msra.mxu0 0.0
      %958 = vmatprep.subr.mxu0 0.0
      %959 = vmatpush1.msra.mxu0 0.0
      %960 = vmatprep.subr.mxu0 0.0
      %961 = vmatpush1.msra.mxu0 0.0
      %962 = vmatprep.subr.mxu0 0.0
      %963 = vmatpush1.msra.mxu0 0.0
      %964 = vmatprep.subr.mxu0 0.0
      %965 = vmatpush1.msra.mxu0 0.0
      %966 = vmatprep.subr.mxu0 0.0
      %967 = vmatpush1.msra.mxu0 0.0
      %968 = vmatprep.subr.mxu0 0.0
      %969 = vmatpush1.msra.mxu0 0.0
      %970 = vmatprep.subr.mxu0 0.0
      %971 = vmatpush1.msra.mxu0 0.0
      %972 = vmatprep.subr.mxu0 0.0
      %973 = vmatpush1.msra.mxu0 0.0
      %974 = vmatprep.subr.mxu0 0.0
      %975 = vmatpush1.msra.mxu0 0.0
      %976 = vmatprep.subr.mxu0 0.0
      %977 = vmatpush1.msra.mxu0 0.0
      %978 = vmatprep.subr.mxu0 0.0
      %979 = vmatpush1.msra.mxu0 0.0
      %980 = vmatprep.subr.mxu0 0.0
      %981 = vmatpush1.msra.mxu0 0.0
      %982 = vmatprep.subr.mxu0 0.0
      %983 = vmatpush1.msra.mxu0 0.0
      %984 = vmatprep.subr.mxu0 0.0
      %985 = vmatpush1.msra.mxu0 0.0
      %986 = vmatprep.subr.mxu0 0.0
      %987 = vmatpush1.msra.mxu0 0.0
      %988 = vmatprep.subr.mxu0 0.0
      %989 = vmatpush1.msra.mxu0 0.0
      %990 = vmatprep.subr.mxu0 0.0
      %991 = vmatpush1.msra.mxu0 0.0
      %992 = vmatprep.subr.mxu0 0.0
      %993 = vmatpush1.msra.mxu0 0.0
      %994 = vmatprep.subr.mxu0 0.0
      %995 = vmatpush1.msra.mxu0 0.0
      %996 = vmatprep.subr.mxu0 0.0
      %997 = vmatpush1.msra.mxu0 0.0
      %998 = vmatprep.subr.mxu0 0.0
      %999 = vmatpush1.msra.mxu0 0.0
      %1000 = vmatprep.subr.mxu0 0.0
      %1001 = vmatpush1.msra.mxu0 0.0
      %1002 = vmatprep.subr.mxu0 0.0
      %1003 = vmatpush1.msra.mxu0 0.0
      %1004 = vmatprep.subr.mxu0 0.0
      %1005 = vmatpush1.msra.mxu0 0.0
      %1006 = vmatprep.subr.mxu0 0.0
      %1007 = vmatpush1.msra.mxu0 0.0
      %1008 = vmatprep.subr.mxu0 0.0
      %1009 = vmatpush1.msra.mxu0 0.0
      %1010 = vmatprep.mubr.f32.mxu0 0.0
      %1011 = vmatmul.mubr.f32.gmra.mrb[0].mxu0 %v935
      %v1012 = vpop.f32.mrb[0].mxu0
      %v1013 = vadd.f32 0.0, %v1012
      %v1014 = vpop.f32.mrb[0].mxu0
      %v1015 = vadd.f32 0.0, %v1014
      %1016 = vmatprep.mubr.f32.mxu0 0.0
      %1017 = vmatmul.mubr.f32.gmra.mrb[0].mxu0 %v938
      %v1018 = vpop.f32.mrb[0].mxu0
      %v1019 = vadd.f32 0.0, %v1018
      %v1020 = vpop.f32.mrb[0].mxu0
      %v1021 = vadd.f32 0.0, %v1020
      %1022 = vmatprep.mubr.f32.mxu0 0.0
      %1023 = vmatmul.mubr.f32.gmra.mrb[0].mxu0 %v941
      %v1024 = vpop.f32.mrb[0].mxu0
      %v1025 = vadd.f32 0.0, %v1024
      %v1026 = vpop.f32.mrb[0].mxu0
      %v1027 = vadd.f32 0.0, %v1026
      %1028 = vmatprep.mubr.f32.mxu0 0.0
      %1029 = vmatmul.mubr.f32.gmra.mrb[0].mxu0 %v944
      %v1030 = vpop.f32.mrb[0].mxu0
      %v1031 = vadd.f32 0.0, %v1030
      %v1032 = vpop.f32.mrb[0].mxu0
      %v1033 = vadd.f32 0.0, %v1032
      %1034 = vdwg.mxu0
      %v1035 = vadd.f32 %v873, %v1013
      %v1036 = vadd.f32 %v874, %v1015
      %v1037 = vadd.f32 %v875, %v1019
      %v1038 = vadd.f32 %v876, %v1021
      %v1039 = vadd.f32 %v877, %v1025
      %v1040 = vadd.f32 %v878, %v1027
      %v1041 = vadd.f32 %v879, %v1031
      %v1042 = vadd.f32 %v880, %v1033
      %v1043 = vld [vmem:[%s1 + $0x80] sm:$0xff]
      %v1044 = vld [vmem:[%s1 + $0x88] sm:$0xff]
      %v1045 = vld [vmem:[%s1 + $0x90] sm:$0xff]
      %v1046 = vld [vmem:[%s1 + $0x98] sm:$0xff]
      %v1048 = vsel %vm512, %v1043, 0
      %v1051 = vsel %vm512, %v1044, 0
      %v1054 = vsel %vm512, %v1045, 0
      %v1057 = vsel %vm512, %v1046, 0
      %1059 = vmatprep.subr.mxu0 %v389
      %1060 = vmatpush1.msra.mxu0 %v388
      %1061 = vmatprep.subr.mxu0 %v392
      %1062 = vmatpush1.msra.mxu0 %v391
      %1063 = vmatprep.subr.mxu0 %v395
      %1064 = vmatpush1.msra.mxu0 %v394
      %1065 = vmatprep.subr.mxu0 %v398
      %1066 = vmatpush1.msra.mxu0 %v397
      %1067 = vmatprep.subr.mxu0 0.0
      %1068 = vmatpush1.msra.mxu0 0.0
      %1069 = vmatprep.subr.mxu0 0.0
      %1070 = vmatpush1.msra.mxu0 0.0
      %1071 = vmatprep.subr.mxu0 0.0
      %1072 = vmatpush1.msra.mxu0 0.0
      %1073 = vmatprep.subr.mxu0 0.0
      %1074 = vmatpush1.msra.mxu0 0.0
      %1075 = vmatprep.subr.mxu0 0.0
      %1076 = vmatpush1.msra.mxu0 0.0
      %1077 = vmatprep.subr.mxu0 0.0
      %1078 = vmatpush1.msra.mxu0 0.0
      %1079 = vmatprep.subr.mxu0 0.0
      %1080 = vmatpush1.msra.mxu0 0.0
      %1081 = vmatprep.subr.mxu0 0.0
      %1082 = vmatpush1.msra.mxu0 0.0
      %1083 = vmatprep.subr.mxu0 0.0
      %1084 = vmatpush1.msra.mxu0 0.0
      %1085 = vmatprep.subr.mxu0 0.0
      %1086 = vmatpush1.msra.mxu0 0.0
      %1087 = vmatprep.subr.mxu0 0.0
      %1088 = vmatpush1.msra.mxu0 0.0
      %1089 = vmatprep.subr.mxu0 0.0
      %1090 = vmatpush1.msra.mxu0 0.0
      %1091 = vmatprep.subr.mxu0 0.0
      %1092 = vmatpush1.msra.mxu0 0.0
      %1093 = vmatprep.subr.mxu0 0.0
      %1094 = vmatpush1.msra.mxu0 0.0
      %1095 = vmatprep.subr.mxu0 0.0
      %1096 = vmatpush1.msra.mxu0 0.0
      %1097 = vmatprep.subr.mxu0 0.0
      %1098 = vmatpush1.msra.mxu0 0.0
      %1099 = vmatprep.subr.mxu0 0.0
      %1100 = vmatpush1.msra.mxu0 0.0
      %1101 = vmatprep.subr.mxu0 0.0
      %1102 = vmatpush1.msra.mxu0 0.0
      %1103 = vmatprep.subr.mxu0 0.0
      %1104 = vmatpush1.msra.mxu0 0.0
      %1105 = vmatprep.subr.mxu0 0.0
      %1106 = vmatpush1.msra.mxu0 0.0
      %1107 = vmatprep.subr.mxu0 0.0
      %1108 = vmatpush1.msra.mxu0 0.0
      %1109 = vmatprep.subr.mxu0 0.0
      %1110 = vmatpush1.msra.mxu0 0.0
      %1111 = vmatprep.subr.mxu0 0.0
      %1112 = vmatpush1.msra.mxu0 0.0
      %1113 = vmatprep.subr.mxu0 0.0
      %1114 = vmatpush1.msra.mxu0 0.0
      %1115 = vmatprep.subr.mxu0 0.0
      %1116 = vmatpush1.msra.mxu0 0.0
      %1117 = vmatprep.subr.mxu0 0.0
      %1118 = vmatpush1.msra.mxu0 0.0
      %1119 = vmatprep.subr.mxu0 0.0
      %1120 = vmatpush1.msra.mxu0 0.0
      %1121 = vmatprep.subr.mxu0 0.0
      %1122 = vmatpush1.msra.mxu0 0.0
      %1123 = vmatprep.mubr.f32.mxu0 0.0
      %1124 = vmatmul.mubr.f32.gmra.mrb[0].mxu0 %v1048
      %v1125 = vpop.f32.mrb[0].mxu0
      %v1126 = vadd.f32 0.0, %v1125
      %v1127 = vpop.f32.mrb[0].mxu0
      %v1128 = vadd.f32 0.0, %v1127
      %1129 = vmatprep.mubr.f32.mxu0 0.0
      %1130 = vmatmul.mubr.f32.gmra.mrb[0].mxu0 %v1051
      %v1131 = vpop.f32.mrb[0].mxu0
      %v1132 = vadd.f32 0.0, %v1131
      %v1133 = vpop.f32.mrb[0].mxu0
      %v1134 = vadd.f32 0.0, %v1133
      %1135 = vmatprep.mubr.f32.mxu0 0.0
      %1136 = vmatmul.mubr.f32.gmra.mrb[0].mxu0 %v1054
      %v1137 = vpop.f32.mrb[0].mxu0
      %v1138 = vadd.f32 0.0, %v1137
      %v1139 = vpop.f32.mrb[0].mxu0
      %v1140 = vadd.f32 0.0, %v1139
      %1141 = vmatprep.mubr.f32.mxu0 0.0
      %1142 = vmatmul.mubr.f32.gmra.mrb[0].mxu0 %v1057
      %v1143 = vpop.f32.mrb[0].mxu0
      %v1144 = vadd.f32 0.0, %v1143
      %v1145 = vpop.f32.mrb[0].mxu0
      %v1146 = vadd.f32 0.0, %v1145
      %1147 = vdwg.mxu0
      %v1148 = vadd.f32 %v1035, %v1126
      %v1149 = vadd.f32 %v1036, %v1128
      %v1150 = vadd.f32 %v1037, %v1132
      %v1151 = vadd.f32 %v1038, %v1134
      %v1152 = vadd.f32 %v1039, %v1138
      %v1153 = vadd.f32 %v1040, %v1140
      %v1154 = vadd.f32 %v1041, %v1144
      %v1155 = vadd.f32 %v1042, %v1146
      %v1156 = vld [vmem:[#allocation2 + $0x8] sm:$0xff]
      %v1157 = vld [vmem:[#allocation2 + $0x10] sm:$0xff]
      %v1158 = vld [vmem:[#allocation2 + $0x18] sm:$0xff]
      %v1159 = vld [vmem:[#allocation2 + $0x28] sm:$0xff]
      %v1160 = vld [vmem:[#allocation2 + $0x30] sm:$0xff]
      %v1161 = vld [vmem:[#allocation2 + $0x38] sm:$0xff]
      %v1162 = vld [vmem:[#allocation2 + $0x48] sm:$0xff]
      %v1163 = vld [vmem:[#allocation2 + $0x50] sm:$0xff]
      %v1164 = vld [vmem:[#allocation2 + $0x58] sm:$0xff]
      %v1165 = vld [vmem:[#allocation2 + $0x68] sm:$0xff]
      %v1166 = vld [vmem:[#allocation2 + $0x70] sm:$0xff]
      %v1167 = vld [vmem:[#allocation2 + $0x78] sm:$0xff]
      %1180 = vrot.lane.b32.xlu0 %v1156, 127
      %v1181 = vpop.permute.xlu0 %1180
      %1182 = vrot.lane.b32.xlu0 %v1157, 127
      %v1183 = vpop.permute.xlu0 %1182
      %1184 = vrot.lane.b32.xlu0 %v1158, 127
      %v1185 = vpop.permute.xlu0 %1184
      %1186 = vrot.lane.b32.xlu0 %v1159, 127
      %v1187 = vpop.permute.xlu0 %1186
      %1188 = vrot.lane.b32.xlu0 %v1160, 127
      %v1189 = vpop.permute.xlu0 %1188
      %1190 = vrot.lane.b32.xlu0 %v1161, 127
      %v1191 = vpop.permute.xlu0 %1190
      %1192 = vrot.lane.b32.xlu0 %v1162, 127
      %v1193 = vpop.permute.xlu0 %1192
      %1194 = vrot.lane.b32.xlu0 %v1163, 127
      %v1195 = vpop.permute.xlu0 %1194
      %1196 = vrot.lane.b32.xlu0 %v1164, 127
      %v1197 = vpop.permute.xlu0 %1196
      %1198 = vrot.lane.b32.xlu0 %v1165, 127
      %v1199 = vpop.permute.xlu0 %1198
      %1200 = vrot.lane.b32.xlu0 %v1166, 127
      %v1201 = vpop.permute.xlu0 %1200
      %1202 = vrot.lane.b32.xlu0 %v1167, 127
      %v1203 = vpop.permute.xlu0 %1202
      %vm1204 = vcmask 1039360
      %v1205 = vsel %vm1204, %v1181, %v1183
      %v1206 = vsel %vm1204, %v1183, %v1185
      %v1207 = vsel %vm1204, %v1187, %v1189
      %v1208 = vsel %vm1204, %v1189, %v1191
      %v1209 = vsel %vm1204, %v1193, %v1195
      %v1210 = vsel %vm1204, %v1195, %v1197
      %v1211 = vsel %vm1204, %v1199, %v1201
      %v1212 = vsel %vm1204, %v1201, %v1203
      %v1221 = vsel %vm717, %v1205, 0.0
      %v1222 = vsel %vm718, %v1206, 0.0
      %v1223 = vsel %vm717, %v1207, 0.0
      %v1224 = vsel %vm718, %v1208, 0.0
      %v1225 = vsel %vm717, %v1209, 0.0
      %v1226 = vsel %vm718, %v1210, 0.0
      %v1227 = vsel %vm717, %v1211, 0.0
      %v1228 = vsel %vm718, %v1212, 0.0
      %v1229 = vld [vmem:[%s1 + $0xa0] sm:$0xff]
      %v1230 = vld [vmem:[%s1 + $0xa8] sm:$0xff]
      %v1231 = vld [vmem:[%s1 + $0xb0] sm:$0xff]
      %v1232 = vld [vmem:[%s1 + $0xb8] sm:$0xff]
      %v1234 = vsel %vm512, %v1229, 0
      %v1237 = vsel %vm512, %v1230, 0
      %v1240 = vsel %vm512, %v1231, 0
      %v1243 = vsel %vm512, %v1232, 0
      %1245 = vmatprep.subr.mxu0 %v1222
      %1246 = vmatpush1.msra.mxu0 %v1221
      %1247 = vmatprep.subr.mxu0 %v1224
      %1248 = vmatpush1.msra.mxu0 %v1223
      %1249 = vmatprep.subr.mxu0 %v1226
      %1250 = vmatpush1.msra.mxu0 %v1225
      %1251 = vmatprep.subr.mxu0 %v1228
      %1252 = vmatpush1.msra.mxu0 %v1227
      %1253 = vmatprep.subr.mxu0 0.0
      %1254 = vmatpush1.msra.mxu0 0.0
      %1255 = vmatprep.subr.mxu0 0.0
      %1256 = vmatpush1.msra.mxu0 0.0
      %1257 = vmatprep.subr.mxu0 0.0
      %1258 = vmatpush1.msra.mxu0 0.0
      %1259 = vmatprep.subr.mxu0 0.0
      %1260 = vmatpush1.msra.mxu0 0.0
      %1261 = vmatprep.subr.mxu0 0.0
      %1262 = vmatpush1.msra.mxu0 0.0
      %1263 = vmatprep.subr.mxu0 0.0
      %1264 = vmatpush1.msra.mxu0 0.0
      %1265 = vmatprep.subr.mxu0 0.0
      %1266 = vmatpush1.msra.mxu0 0.0
      %1267 = vmatprep.subr.mxu0 0.0
      %1268 = vmatpush1.msra.mxu0 0.0
      %1269 = vmatprep.subr.mxu0 0.0
      %1270 = vmatpush1.msra.mxu0 0.0
      %1271 = vmatprep.subr.mxu0 0.0
      %1272 = vmatpush1.msra.mxu0 0.0
      %1273 = vmatprep.subr.mxu0 0.0
      %1274 = vmatpush1.msra.mxu0 0.0
      %1275 = vmatprep.subr.mxu0 0.0
      %1276 = vmatpush1.msra.mxu0 0.0
      %1277 = vmatprep.subr.mxu0 0.0
      %1278 = vmatpush1.msra.mxu0 0.0
      %1279 = vmatprep.subr.mxu0 0.0
      %1280 = vmatpush1.msra.mxu0 0.0
      %1281 = vmatprep.subr.mxu0 0.0
      %1282 = vmatpush1.msra.mxu0 0.0
      %1283 = vmatprep.subr.mxu0 0.0
      %1284 = vmatpush1.msra.mxu0 0.0
      %1285 = vmatprep.subr.mxu0 0.0
      %1286 = vmatpush1.msra.mxu0 0.0
      %1287 = vmatprep.subr.mxu0 0.0
      %1288 = vmatpush1.msra.mxu0 0.0
      %1289 = vmatprep.subr.mxu0 0.0
      %1290 = vmatpush1.msra.mxu0 0.0
      %1291 = vmatprep.subr.mxu0 0.0
      %1292 = vmatpush1.msra.mxu0 0.0
      %1293 = vmatprep.subr.mxu0 0.0
      %1294 = vmatpush1.msra.mxu0 0.0
      %1295 = vmatprep.subr.mxu0 0.0
      %1296 = vmatpush1.msra.mxu0 0.0
      %1297 = vmatprep.subr.mxu0 0.0
      %1298 = vmatpush1.msra.mxu0 0.0
      %1299 = vmatprep.subr.mxu0 0.0
      %1300 = vmatpush1.msra.mxu0 0.0
      %1301 = vmatprep.subr.mxu0 0.0
      %1302 = vmatpush1.msra.mxu0 0.0
      %1303 = vmatprep.subr.mxu0 0.0
      %1304 = vmatpush1.msra.mxu0 0.0
      %1305 = vmatprep.subr.mxu0 0.0
      %1306 = vmatpush1.msra.mxu0 0.0
      %1307 = vmatprep.subr.mxu0 0.0
      %1308 = vmatpush1.msra.mxu0 0.0
      %1309 = vmatprep.mubr.f32.mxu0 0.0
      %1310 = vmatmul.mubr.f32.gmra.mrb[0].mxu0 %v1234
      %v1311 = vpop.f32.mrb[0].mxu0
      %v1312 = vadd.f32 0.0, %v1311
      %v1313 = vpop.f32.mrb[0].mxu0
      %v1314 = vadd.f32 0.0, %v1313
      %1315 = vmatprep.mubr.f32.mxu0 0.0
      %1316 = vmatmul.mubr.f32.gmra.mrb[0].mxu0 %v1237
      %v1317 = vpop.f32.mrb[0].mxu0
      %v1318 = vadd.f32 0.0, %v1317
      %v1319 = vpop.f32.mrb[0].mxu0
      %v1320 = vadd.f32 0.0, %v1319
      %1321 = vmatprep.mubr.f32.mxu0 0.0
      %1322 = vmatmul.mubr.f32.gmra.mrb[0].mxu0 %v1240
      %v1323 = vpop.f32.mrb[0].mxu0
      %v1324 = vadd.f32 0.0, %v1323
      %v1325 = vpop.f32.mrb[0].mxu0
      %v1326 = vadd.f32 0.0, %v1325
      %1327 = vmatprep.mubr.f32.mxu0 0.0
      %1328 = vmatmul.mubr.f32.gmra.mrb[0].mxu0 %v1243
      %v1329 = vpop.f32.mrb[0].mxu0
      %v1330 = vadd.f32 0.0, %v1329
      %v1331 = vpop.f32.mrb[0].mxu0
      %v1332 = vadd.f32 0.0, %v1331
      %1333 = vdwg.mxu0
      %v1334 = vadd.f32 %v1148, %v1312
      %v1335 = vadd.f32 %v1149, %v1314
      %v1336 = vadd.f32 %v1150, %v1318
      %v1337 = vadd.f32 %v1151, %v1320
      %v1338 = vadd.f32 %v1152, %v1324
      %v1339 = vadd.f32 %v1153, %v1326
      %v1340 = vadd.f32 %v1154, %v1330
      %v1341 = vadd.f32 %v1155, %v1332
      %1342 = vrot.lane.b32.xlu0 %v1156, 113
      %v1343 = vpop.permute.xlu0 %1342
      %1344 = vrot.lane.b32.xlu0 %v1157, 113
      %v1345 = vpop.permute.xlu0 %1344
      %1346 = vrot.lane.b32.xlu0 %v1158, 113
      %v1347 = vpop.permute.xlu0 %1346
      %1348 = vrot.lane.b32.xlu0 %v1159, 113
      %v1349 = vpop.permute.xlu0 %1348
      %1350 = vrot.lane.b32.xlu0 %v1160, 113
      %v1351 = vpop.permute.xlu0 %1350
      %1352 = vrot.lane.b32.xlu0 %v1161, 113
      %v1353 = vpop.permute.xlu0 %1352
      %1354 = vrot.lane.b32.xlu0 %v1162, 113
      %v1355 = vpop.permute.xlu0 %1354
      %1356 = vrot.lane.b32.xlu0 %v1163, 113
      %v1357 = vpop.permute.xlu0 %1356
      %1358 = vrot.lane.b32.xlu0 %v1164, 113
      %v1359 = vpop.permute.xlu0 %1358
      %1360 = vrot.lane.b32.xlu0 %v1165, 113
      %v1361 = vpop.permute.xlu0 %1360
      %1362 = vrot.lane.b32.xlu0 %v1166, 113
      %v1363 = vpop.permute.xlu0 %1362
      %1364 = vrot.lane.b32.xlu0 %v1167, 113
      %v1365 = vpop.permute.xlu0 %1364
      %vm1366 = vcmask 924672
      %v1367 = vsel %vm1366, %v1343, %v1345
      %v1368 = vsel %vm1366, %v1345, %v1347
      %v1369 = vsel %vm1366, %v1349, %v1351
      %v1370 = vsel %vm1366, %v1351, %v1353
      %v1371 = vsel %vm1366, %v1355, %v1357
      %v1372 = vsel %vm1366, %v1357, %v1359
      %v1373 = vsel %vm1366, %v1361, %v1363
      %v1374 = vsel %vm1366, %v1363, %v1365
      %v1383 = vsel %vm401, %v1367, 0.0
      %v1384 = vsel %vm402, %v1368, 0.0
      %v1385 = vsel %vm401, %v1369, 0.0
      %v1386 = vsel %vm402, %v1370, 0.0
      %v1387 = vsel %vm401, %v1371, 0.0
      %v1388 = vsel %vm402, %v1372, 0.0
      %v1389 = vsel %vm401, %v1373, 0.0
      %v1390 = vsel %vm402, %v1374, 0.0
      %v1391 = vld [vmem:[%s1 + $0xc0] sm:$0xff]
      %v1392 = vld [vmem:[%s1 + $0xc8] sm:$0xff]
      %v1393 = vld [vmem:[%s1 + $0xd0] sm:$0xff]
      %v1394 = vld [vmem:[%s1 + $0xd8] sm:$0xff]
      %v1396 = vsel %vm512, %v1391, 0
      %v1399 = vsel %vm512, %v1392, 0
      %v1402 = vsel %vm512, %v1393, 0
      %v1405 = vsel %vm512, %v1394, 0
      %1407 = vmatprep.subr.mxu0 %v1384
      %1408 = vmatpush1.msra.mxu0 %v1383
      %1409 = vmatprep.subr.mxu0 %v1386
      %1410 = vmatpush1.msra.mxu0 %v1385
      %1411 = vmatprep.subr.mxu0 %v1388
      %1412 = vmatpush1.msra.mxu0 %v1387
      %1413 = vmatprep.subr.mxu0 %v1390
      %1414 = vmatpush1.msra.mxu0 %v1389
      %1415 = vmatprep.subr.mxu0 0.0
      %1416 = vmatpush1.msra.mxu0 0.0
      %1417 = vmatprep.subr.mxu0 0.0
      %1418 = vmatpush1.msra.mxu0 0.0
      %1419 = vmatprep.subr.mxu0 0.0
      %1420 = vmatpush1.msra.mxu0 0.0
      %1421 = vmatprep.subr.mxu0 0.0
      %1422 = vmatpush1.msra.mxu0 0.0
      %1423 = vmatprep.subr.mxu0 0.0
      %1424 = vmatpush1.msra.mxu0 0.0
      %1425 = vmatprep.subr.mxu0 0.0
      %1426 = vmatpush1.msra.mxu0 0.0
      %1427 = vmatprep.subr.mxu0 0.0
      %1428 = vmatpush1.msra.mxu0 0.0
      %1429 = vmatprep.subr.mxu0 0.0
      %1430 = vmatpush1.msra.mxu0 0.0
      %1431 = vmatprep.subr.mxu0 0.0
      %1432 = vmatpush1.msra.mxu0 0.0
      %1433 = vmatprep.subr.mxu0 0.0
      %1434 = vmatpush1.msra.mxu0 0.0
      %1435 = vmatprep.subr.mxu0 0.0
      %1436 = vmatpush1.msra.mxu0 0.0
      %1437 = vmatprep.subr.mxu0 0.0
      %1438 = vmatpush1.msra.mxu0 0.0
      %1439 = vmatprep.subr.mxu0 0.0
      %1440 = vmatpush1.msra.mxu0 0.0
      %1441 = vmatprep.subr.mxu0 0.0
      %1442 = vmatpush1.msra.mxu0 0.0
      %1443 = vmatprep.subr.mxu0 0.0
      %1444 = vmatpush1.msra.mxu0 0.0
      %1445 = vmatprep.subr.mxu0 0.0
      %1446 = vmatpush1.msra.mxu0 0.0
      %1447 = vmatprep.subr.mxu0 0.0
      %1448 = vmatpush1.msra.mxu0 0.0
      %1449 = vmatprep.subr.mxu0 0.0
      %1450 = vmatpush1.msra.mxu0 0.0
      %1451 = vmatprep.subr.mxu0 0.0
      %1452 = vmatpush1.msra.mxu0 0.0
      %1453 = vmatprep.subr.mxu0 0.0
      %1454 = vmatpush1.msra.mxu0 0.0
      %1455 = vmatprep.subr.mxu0 0.0
      %1456 = vmatpush1.msra.mxu0 0.0
      %1457 = vmatprep.subr.mxu0 0.0
      %1458 = vmatpush1.msra.mxu0 0.0
      %1459 = vmatprep.subr.mxu0 0.0
      %1460 = vmatpush1.msra.mxu0 0.0
      %1461 = vmatprep.subr.mxu0 0.0
      %1462 = vmatpush1.msra.mxu0 0.0
      %1463 = vmatprep.subr.mxu0 0.0
      %1464 = vmatpush1.msra.mxu0 0.0
      %1465 = vmatprep.subr.mxu0 0.0
      %1466 = vmatpush1.msra.mxu0 0.0
      %1467 = vmatprep.subr.mxu0 0.0
      %1468 = vmatpush1.msra.mxu0 0.0
      %1469 = vmatprep.subr.mxu0 0.0
      %1470 = vmatpush1.msra.mxu0 0.0
      %1471 = vmatprep.mubr.f32.mxu0 0.0
      %1472 = vmatmul.mubr.f32.gmra.mrb[0].mxu0 %v1396
      %v1473 = vpop.f32.mrb[0].mxu0
      %v1474 = vadd.f32 0.0, %v1473
      %v1475 = vpop.f32.mrb[0].mxu0
      %v1476 = vadd.f32 0.0, %v1475
      %1477 = vmatprep.mubr.f32.mxu0 0.0
      %1478 = vmatmul.mubr.f32.gmra.mrb[0].mxu0 %v1399
      %v1479 = vpop.f32.mrb[0].mxu0
      %v1480 = vadd.f32 0.0, %v1479
      %v1481 = vpop.f32.mrb[0].mxu0
      %v1482 = vadd.f32 0.0, %v1481
      %1483 = vmatprep.mubr.f32.mxu0 0.0
      %1484 = vmatmul.mubr.f32.gmra.mrb[0].mxu0 %v1402
      %v1485 = vpop.f32.mrb[0].mxu0
      %v1486 = vadd.f32 0.0, %v1485
      %v1487 = vpop.f32.mrb[0].mxu0
      %v1488 = vadd.f32 0.0, %v1487
      %1489 = vmatprep.mubr.f32.mxu0 0.0
      %1490 = vmatmul.mubr.f32.gmra.mrb[0].mxu0 %v1405
      %v1491 = vpop.f32.mrb[0].mxu0
      %v1492 = vadd.f32 0.0, %v1491
      %v1493 = vpop.f32.mrb[0].mxu0
      %v1494 = vadd.f32 0.0, %v1493
      %1495 = vdwg.mxu0
      %v1496 = vadd.f32 %v1334, %v1474
      %v1497 = vadd.f32 %v1335, %v1476
      %v1498 = vadd.f32 %v1336, %v1480
      %v1499 = vadd.f32 %v1337, %v1482
      %v1500 = vadd.f32 %v1338, %v1486
      %v1501 = vadd.f32 %v1339, %v1488
      %v1502 = vadd.f32 %v1340, %v1492
      %v1503 = vadd.f32 %v1341, %v1494
      %v1504 = vld [vmem:[%s1 + $0xe0] sm:$0xff]
      %v1505 = vld [vmem:[%s1 + $0xe8] sm:$0xff]
      %v1506 = vld [vmem:[%s1 + $0xf0] sm:$0xff]
      %v1507 = vld [vmem:[%s1 + $0xf8] sm:$0xff]
      %1508 = vrot.lane.b32.xlu0 %v1156, 112
      %v1509 = vpop.permute.xlu0 %1508
      %1510 = vrot.lane.b32.xlu0 %v1157, 112
      %v1511 = vpop.permute.xlu0 %1510
      %1512 = vrot.lane.b32.xlu0 %v1158, 112
      %v1513 = vpop.permute.xlu0 %1512
      %1514 = vrot.lane.b32.xlu0 %v1159, 112
      %v1515 = vpop.permute.xlu0 %1514
      %1516 = vrot.lane.b32.xlu0 %v1160, 112
      %v1517 = vpop.permute.xlu0 %1516
      %1518 = vrot.lane.b32.xlu0 %v1161, 112
      %v1519 = vpop.permute.xlu0 %1518
      %1520 = vrot.lane.b32.xlu0 %v1162, 112
      %v1521 = vpop.permute.xlu0 %1520
      %1522 = vrot.lane.b32.xlu0 %v1163, 112
      %v1523 = vpop.permute.xlu0 %1522
      %1524 = vrot.lane.b32.xlu0 %v1164, 112
      %v1525 = vpop.permute.xlu0 %1524
      %1526 = vrot.lane.b32.xlu0 %v1165, 112
      %v1527 = vpop.permute.xlu0 %1526
      %1528 = vrot.lane.b32.xlu0 %v1166, 112
      %v1529 = vpop.permute.xlu0 %1528
      %1530 = vrot.lane.b32.xlu0 %v1167, 112
      %v1531 = vpop.permute.xlu0 %1530
      %vm1532 = vcmask 916480
      %v1533 = vsel %vm1532, %v1509, %v1511
      %v1534 = vsel %vm1532, %v1511, %v1513
      %v1535 = vsel %vm1532, %v1515, %v1517
      %v1536 = vsel %vm1532, %v1517, %v1519
      %v1537 = vsel %vm1532, %v1521, %v1523
      %v1538 = vsel %vm1532, %v1523, %v1525
      %v1539 = vsel %vm1532, %v1527, %v1529
      %v1540 = vsel %vm1532, %v1529, %v1531
      %v1550 = vsel %vm512, %v1504, 0
      %v1553 = vsel %vm512, %v1505, 0
      %v1556 = vsel %vm512, %v1506, 0
      %v1559 = vsel %vm512, %v1507, 0
      %1561 = vmatprep.subr.mxu0 %v1534
      %1562 = vmatpush1.msra.mxu0 %v1533
      %1563 = vmatprep.subr.mxu0 %v1536
      %1564 = vmatpush1.msra.mxu0 %v1535
      %1565 = vmatprep.subr.mxu0 %v1538
      %1566 = vmatpush1.msra.mxu0 %v1537
      %1567 = vmatprep.subr.mxu0 %v1540
      %1568 = vmatpush1.msra.mxu0 %v1539
      %1569 = vmatprep.subr.mxu0 0.0
      %1570 = vmatpush1.msra.mxu0 0.0
      %1571 = vmatprep.subr.mxu0 0.0
      %1572 = vmatpush1.msra.mxu0 0.0
      %1573 = vmatprep.subr.mxu0 0.0
      %1574 = vmatpush1.msra.mxu0 0.0
      %1575 = vmatprep.subr.mxu0 0.0
      %1576 = vmatpush1.msra.mxu0 0.0
      %1577 = vmatprep.subr.mxu0 0.0
      %1578 = vmatpush1.msra.mxu0 0.0
      %1579 = vmatprep.subr.mxu0 0.0
      %1580 = vmatpush1.msra.mxu0 0.0
      %1581 = vmatprep.subr.mxu0 0.0
      %1582 = vmatpush1.msra.mxu0 0.0
      %1583 = vmatprep.subr.mxu0 0.0
      %1584 = vmatpush1.msra.mxu0 0.0
      %1585 = vmatprep.subr.mxu0 0.0
      %1586 = vmatpush1.msra.mxu0 0.0
      %1587 = vmatprep.subr.mxu0 0.0
      %1588 = vmatpush1.msra.mxu0 0.0
      %1589 = vmatprep.subr.mxu0 0.0
      %1590 = vmatpush1.msra.mxu0 0.0
      %1591 = vmatprep.subr.mxu0 0.0
      %1592 = vmatpush1.msra.mxu0 0.0
      %1593 = vmatprep.subr.mxu0 0.0
      %1594 = vmatpush1.msra.mxu0 0.0
      %1595 = vmatprep.subr.mxu0 0.0
      %1596 = vmatpush1.msra.mxu0 0.0
      %1597 = vmatprep.subr.mxu0 0.0
      %1598 = vmatpush1.msra.mxu0 0.0
      %1599 = vmatprep.subr.mxu0 0.0
      %1600 = vmatpush1.msra.mxu0 0.0
      %1601 = vmatprep.subr.mxu0 0.0
      %1602 = vmatpush1.msra.mxu0 0.0
      %1603 = vmatprep.subr.mxu0 0.0
      %1604 = vmatpush1.msra.mxu0 0.0
      %1605 = vmatprep.subr.mxu0 0.0
      %1606 = vmatpush1.msra.mxu0 0.0
      %1607 = vmatprep.subr.mxu0 0.0
      %1608 = vmatpush1.msra.mxu0 0.0
      %1609 = vmatprep.subr.mxu0 0.0
      %1610 = vmatpush1.msra.mxu0 0.0
      %1611 = vmatprep.subr.mxu0 0.0
      %1612 = vmatpush1.msra.mxu0 0.0
      %1613 = vmatprep.subr.mxu0 0.0
      %1614 = vmatpush1.msra.mxu0 0.0
      %1615 = vmatprep.subr.mxu0 0.0
      %1616 = vmatpush1.msra.mxu0 0.0
      %1617 = vmatprep.subr.mxu0 0.0
      %1618 = vmatpush1.msra.mxu0 0.0
      %1619 = vmatprep.subr.mxu0 0.0
      %1620 = vmatpush1.msra.mxu0 0.0
      %1621 = vmatprep.subr.mxu0 0.0
      %1622 = vmatpush1.msra.mxu0 0.0
      %1623 = vmatprep.subr.mxu0 0.0
      %1624 = vmatpush1.msra.mxu0 0.0
      %1625 = vmatprep.mubr.f32.mxu0 0.0
      %1626 = vmatmul.mubr.f32.gmra.mrb[0].mxu0 %v1550
      %v1627 = vpop.f32.mrb[0].mxu0
      %v1628 = vadd.f32 0.0, %v1627
      %v1629 = vpop.f32.mrb[0].mxu0
      %v1630 = vadd.f32 0.0, %v1629
      %1631 = vmatprep.mubr.f32.mxu0 0.0
      %1632 = vmatmul.mubr.f32.gmra.mrb[0].mxu0 %v1553
      %v1633 = vpop.f32.mrb[0].mxu0
      %v1634 = vadd.f32 0.0, %v1633
      %v1635 = vpop.f32.mrb[0].mxu0
      %v1636 = vadd.f32 0.0, %v1635
      %1637 = vmatprep.mubr.f32.mxu0 0.0
      %1638 = vmatmul.mubr.f32.gmra.mrb[0].mxu0 %v1556
      %v1639 = vpop.f32.mrb[0].mxu0
      %v1640 = vadd.f32 0.0, %v1639
      %v1641 = vpop.f32.mrb[0].mxu0
      %v1642 = vadd.f32 0.0, %v1641
      %1643 = vmatprep.mubr.f32.mxu0 0.0
      %1644 = vmatmul.mubr.f32.gmra.mrb[0].mxu0 %v1559
      %v1645 = vpop.f32.mrb[0].mxu0
      %v1646 = vadd.f32 0.0, %v1645
      %v1647 = vpop.f32.mrb[0].mxu0
      %v1648 = vadd.f32 0.0, %v1647
      %1649 = vdwg.mxu0
      %v1650 = vadd.f32 %v1496, %v1628
      %v1651 = vadd.f32 %v1497, %v1630
      %v1652 = vadd.f32 %v1498, %v1634
      %v1653 = vadd.f32 %v1499, %v1636
      %v1654 = vadd.f32 %v1500, %v1640
      %v1655 = vadd.f32 %v1501, %v1642
      %v1656 = vadd.f32 %v1502, %v1646
      %v1657 = vadd.f32 %v1503, %v1648
      %1658 = vrot.lane.b32.xlu0 %v1156, 111
      %v1659 = vpop.permute.xlu0 %1658
      %1660 = vrot.lane.b32.xlu0 %v1157, 111
      %v1661 = vpop.permute.xlu0 %1660
      %1662 = vrot.lane.b32.xlu0 %v1158, 111
      %v1663 = vpop.permute.xlu0 %1662
      %1664 = vrot.lane.b32.xlu0 %v1159, 111
      %v1665 = vpop.permute.xlu0 %1664
      %1666 = vrot.lane.b32.xlu0 %v1160, 111
      %v1667 = vpop.permute.xlu0 %1666
      %1668 = vrot.lane.b32.xlu0 %v1161, 111
      %v1669 = vpop.permute.xlu0 %1668
      %1670 = vrot.lane.b32.xlu0 %v1162, 111
      %v1671 = vpop.permute.xlu0 %1670
      %1672 = vrot.lane.b32.xlu0 %v1163, 111
      %v1673 = vpop.permute.xlu0 %1672
      %1674 = vrot.lane.b32.xlu0 %v1164, 111
      %v1675 = vpop.permute.xlu0 %1674
      %1676 = vrot.lane.b32.xlu0 %v1165, 111
      %v1677 = vpop.permute.xlu0 %1676
      %1678 = vrot.lane.b32.xlu0 %v1166, 111
      %v1679 = vpop.permute.xlu0 %1678
      %1680 = vrot.lane.b32.xlu0 %v1167, 111
      %v1681 = vpop.permute.xlu0 %1680
      %vm1682 = vcmask 908288
      %v1683 = vsel %vm1682, %v1659, %v1661
      %v1684 = vsel %vm1682, %v1661, %v1663
      %v1685 = vsel %vm1682, %v1665, %v1667
      %v1686 = vsel %vm1682, %v1667, %v1669
      %v1687 = vsel %vm1682, %v1671, %v1673
      %v1688 = vsel %vm1682, %v1673, %v1675
      %v1689 = vsel %vm1682, %v1677, %v1679
      %v1690 = vsel %vm1682, %v1679, %v1681
      %v1699 = vsel %vm717, %v1683, 0.0
      %v1700 = vsel %vm718, %v1684, 0.0
      %v1701 = vsel %vm717, %v1685, 0.0
      %v1702 = vsel %vm718, %v1686, 0.0
      %v1703 = vsel %vm717, %v1687, 0.0
      %v1704 = vsel %vm718, %v1688, 0.0
      %v1705 = vsel %vm717, %v1689, 0.0
      %v1706 = vsel %vm718, %v1690, 0.0
      %v1707 = vld [vmem:[%s1 + $0x100] sm:$0xff]
      %v1708 = vld [vmem:[%s1 + $0x108] sm:$0xff]
      %v1709 = vld [vmem:[%s1 + $0x110] sm:$0xff]
      %v1710 = vld [vmem:[%s1 + $0x118] sm:$0xff]
      %v1712 = vsel %vm512, %v1707, 0
      %v1715 = vsel %vm512, %v1708, 0
      %v1718 = vsel %vm512, %v1709, 0
      %v1721 = vsel %vm512, %v1710, 0
      %1723 = vmatprep.subr.mxu0 %v1700
      %1724 = vmatpush1.msra.mxu0 %v1699
      %1725 = vmatprep.subr.mxu0 %v1702
      %1726 = vmatpush1.msra.mxu0 %v1701
      %1727 = vmatprep.subr.mxu0 %v1704
      %1728 = vmatpush1.msra.mxu0 %v1703
      %1729 = vmatprep.subr.mxu0 %v1706
      %1730 = vmatpush1.msra.mxu0 %v1705
      %1731 = vmatprep.subr.mxu0 0.0
      %1732 = vmatpush1.msra.mxu0 0.0
      %1733 = vmatprep.subr.mxu0 0.0
      %1734 = vmatpush1.msra.mxu0 0.0
      %1735 = vmatprep.subr.mxu0 0.0
      %1736 = vmatpush1.msra.mxu0 0.0
      %1737 = vmatprep.subr.mxu0 0.0
      %1738 = vmatpush1.msra.mxu0 0.0
      %1739 = vmatprep.subr.mxu0 0.0
      %1740 = vmatpush1.msra.mxu0 0.0
      %1741 = vmatprep.subr.mxu0 0.0
      %1742 = vmatpush1.msra.mxu0 0.0
      %1743 = vmatprep.subr.mxu0 0.0
      %1744 = vmatpush1.msra.mxu0 0.0
      %1745 = vmatprep.subr.mxu0 0.0
      %1746 = vmatpush1.msra.mxu0 0.0
      %1747 = vmatprep.subr.mxu0 0.0
      %1748 = vmatpush1.msra.mxu0 0.0
      %1749 = vmatprep.subr.mxu0 0.0
      %1750 = vmatpush1.msra.mxu0 0.0
      %1751 = vmatprep.subr.mxu0 0.0
      %1752 = vmatpush1.msra.mxu0 0.0
      %1753 = vmatprep.subr.mxu0 0.0
      %1754 = vmatpush1.msra.mxu0 0.0
      %1755 = vmatprep.subr.mxu0 0.0
      %1756 = vmatpush1.msra.mxu0 0.0
      %1757 = vmatprep.subr.mxu0 0.0
      %1758 = vmatpush1.msra.mxu0 0.0
      %1759 = vmatprep.subr.mxu0 0.0
      %1760 = vmatpush1.msra.mxu0 0.0
      %1761 = vmatprep.subr.mxu0 0.0
      %1762 = vmatpush1.msra.mxu0 0.0
      %1763 = vmatprep.subr.mxu0 0.0
      %1764 = vmatpush1.msra.mxu0 0.0
      %1765 = vmatprep.subr.mxu0 0.0
      %1766 = vmatpush1.msra.mxu0 0.0
      %1767 = vmatprep.subr.mxu0 0.0
      %1768 = vmatpush1.msra.mxu0 0.0
      %1769 = vmatprep.subr.mxu0 0.0
      %1770 = vmatpush1.msra.mxu0 0.0
      %1771 = vmatprep.subr.mxu0 0.0
      %1772 = vmatpush1.msra.mxu0 0.0
      %1773 = vmatprep.subr.mxu0 0.0
      %1774 = vmatpush1.msra.mxu0 0.0
      %1775 = vmatprep.subr.mxu0 0.0
      %1776 = vmatpush1.msra.mxu0 0.0
      %1777 = vmatprep.subr.mxu0 0.0
      %1778 = vmatpush1.msra.mxu0 0.0
      %1779 = vmatprep.subr.mxu0 0.0
      %1780 = vmatpush1.msra.mxu0 0.0
      %1781 = vmatprep.subr.mxu0 0.0
      %1782 = vmatpush1.msra.mxu0 0.0
      %1783 = vmatprep.subr.mxu0 0.0
      %1784 = vmatpush1.msra.mxu0 0.0
      %1785 = vmatprep.subr.mxu0 0.0
      %1786 = vmatpush1.msra.mxu0 0.0
      %1787 = vmatprep.mubr.f32.mxu0 0.0
      %1788 = vmatmul.mubr.f32.gmra.mrb[0].mxu0 %v1712
      %v1789 = vpop.f32.mrb[0].mxu0
      %v1790 = vadd.f32 0.0, %v1789
      %v1791 = vpop.f32.mrb[0].mxu0
      %v1792 = vadd.f32 0.0, %v1791
      %1793 = vmatprep.mubr.f32.mxu0 0.0
      %1794 = vmatmul.mubr.f32.gmra.mrb[0].mxu0 %v1715
      %v1795 = vpop.f32.mrb[0].mxu0
      %v1796 = vadd.f32 0.0, %v1795
      %v1797 = vpop.f32.mrb[0].mxu0
      %v1798 = vadd.f32 0.0, %v1797
      %1799 = vmatprep.mubr.f32.mxu0 0.0
      %1800 = vmatmul.mubr.f32.gmra.mrb[0].mxu0 %v1718
      %v1801 = vpop.f32.mrb[0].mxu0
      %v1802 = vadd.f32 0.0, %v1801
      %v1803 = vpop.f32.mrb[0].mxu0
      %v1804 = vadd.f32 0.0, %v1803
      %1805 = vmatprep.mubr.f32.mxu0 0.0
      %1806 = vmatmul.mubr.f32.gmra.mrb[0].mxu0 %v1721
      %v1807 = vpop.f32.mrb[0].mxu0
      %v1808 = vadd.f32 0.0, %v1807
      %v1809 = vpop.f32.mrb[0].mxu0
      %v1810 = vadd.f32 0.0, %v1809
      %1811 = vdwg.mxu0
      %v1812 = vadd.f32 %v1650, %v1790
      %v1813 = vadd.f32 %v1651, %v1792
      %v1814 = vadd.f32 %v1652, %v1796
      %v1815 = vadd.f32 %v1653, %v1798
      %v1816 = vadd.f32 %v1654, %v1802
      %v1817 = vadd.f32 %v1655, %v1804
      %v1818 = vadd.f32 %v1656, %v1808
      %v1819 = vadd.f32 %v1657, %v1810
      %v1820 = vld [vmem:[%s2] sm:$0xff]
      %v1821 = vld [vmem:[%s2 + $0x8] sm:$0xff]
      %v1822 = vld [vmem:[%s2 + $0x10] sm:$0xff]
      %v1823 = vld [vmem:[%s2 + $0x18] sm:$0xff]
      %1825 = vset.pattern.permute.xlu0 0
      %1826 = vperm.xlu0 %1825, %v1820
      %v1827 = vpop.permute.xlu0 %1826
      %1830 = vset.pattern.permute.xlu0 0
      %1831 = vperm.xlu0 %1830, %v1821
      %v1832 = vpop.permute.xlu0 %1831
      %1835 = vset.pattern.permute.xlu0 0
      %1836 = vperm.xlu0 %1835, %v1822
      %v1837 = vpop.permute.xlu0 %1836
      %1840 = vset.pattern.permute.xlu0 0
      %1841 = vperm.xlu0 %1840, %v1823
      %v1842 = vpop.permute.xlu0 %1841
      %v1844 = vadd.f32 %v1812, %v1827
      %v1845 = vadd.f32 %v1813, %v1827
      %v1846 = vadd.f32 %v1814, %v1832
      %v1847 = vadd.f32 %v1815, %v1832
      %v1848 = vadd.f32 %v1816, %v1837
      %v1849 = vadd.f32 %v1817, %v1837
      %v1850 = vadd.f32 %v1818, %v1842
      %v1851 = vadd.f32 %v1819, %v1842
      %vm1852 = vcmp.gt.f32.partialorder %v1844, 0.0
      %vm1853 = vcmp.gt.f32.partialorder %v1845, 0.0
      %vm1854 = vcmp.gt.f32.partialorder %v1846, 0.0
      %vm1855 = vcmp.gt.f32.partialorder %v1847, 0.0
      %vm1856 = vcmp.gt.f32.partialorder %v1848, 0.0
      %vm1857 = vcmp.gt.f32.partialorder %v1849, 0.0
      %vm1858 = vcmp.gt.f32.partialorder %v1850, 0.0
      %vm1859 = vcmp.gt.f32.partialorder %v1851, 0.0
      %v1860 = vmul.f32 %v1844, 0.2
      %v1861 = vmul.f32 %v1845, 0.2
      %v1862 = vmul.f32 %v1846, 0.2
      %v1863 = vmul.f32 %v1847, 0.2
      %v1864 = vmul.f32 %v1848, 0.2
      %v1865 = vmul.f32 %v1849, 0.2
      %v1866 = vmul.f32 %v1850, 0.2
      %v1867 = vmul.f32 %v1851, 0.2
      %v1868 = vsel %vm1852, %v1844, %v1860
      %v1869 = vsel %vm1853, %v1845, %v1861
      %v1870 = vsel %vm1854, %v1846, %v1862
      %v1871 = vsel %vm1855, %v1847, %v1863
      %v1872 = vsel %vm1856, %v1848, %v1864
      %v1873 = vsel %vm1857, %v1849, %v1865
      %v1874 = vsel %vm1858, %v1850, %v1866
      %v1875 = vsel %vm1859, %v1851, %v1867
      %1876 = vst [vmem:[#allocation2 + $0x8] sm:$0xff] %v1868
      %1877 = vst [vmem:[#allocation2 + $0x10] sm:$0xff] %v1869
      %1878 = vst [vmem:[#allocation2 + $0x28] sm:$0xff] %v1870
      %1879 = vst [vmem:[#allocation2 + $0x30] sm:$0xff] %v1871
      %1880 = vst [vmem:[#allocation2 + $0x48] sm:$0xff] %v1872
      %1881 = vst [vmem:[#allocation2 + $0x50] sm:$0xff] %v1873
      %1882 = vst [vmem:[#allocation2 + $0x68] sm:$0xff] %v1874
      %1883 = vst [vmem:[#allocation2 + $0x70] sm:$0xff] %v1875
      %v1884 = vld [vmem:[#allocation2] sm:$0xff]
      %v1885 = vld [vmem:[#allocation2 + $0x8] sm:$0xff]
      %v1886 = vld [vmem:[#allocation2 + $0x10] sm:$0xff]
      %v1887 = vld [vmem:[#allocation2 + $0x20] sm:$0xff]
      %v1888 = vld [vmem:[#allocation2 + $0x28] sm:$0xff]
      %v1889 = vld [vmem:[#allocation2 + $0x30] sm:$0xff]
      %v1890 = vld [vmem:[#allocation2 + $0x40] sm:$0xff]
      %v1891 = vld [vmem:[#allocation2 + $0x48] sm:$0xff]
      %v1892 = vld [vmem:[#allocation2 + $0x50] sm:$0xff]
      %v1893 = vld [vmem:[#allocation2 + $0x60] sm:$0xff]
      %v1894 = vld [vmem:[#allocation2 + $0x68] sm:$0xff]
      %v1895 = vld [vmem:[#allocation2 + $0x70] sm:$0xff]
      %1908 = vrot.lane.b32.xlu0 %v1884, 17
      %v1909 = vpop.permute.xlu0 %1908
      %1910 = vrot.lane.b32.xlu0 %v1885, 17
      %v1911 = vpop.permute.xlu0 %1910
      %1912 = vrot.lane.b32.xlu0 %v1886, 17
      %v1913 = vpop.permute.xlu0 %1912
      %1914 = vrot.lane.b32.xlu0 %v1887, 17
      %v1915 = vpop.permute.xlu0 %1914
      %1916 = vrot.lane.b32.xlu0 %v1888, 17
      %v1917 = vpop.permute.xlu0 %1916
      %1918 = vrot.lane.b32.xlu0 %v1889, 17
      %v1919 = vpop.permute.xlu0 %1918
      %1920 = vrot.lane.b32.xlu0 %v1890, 17
      %v1921 = vpop.permute.xlu0 %1920
      %1922 = vrot.lane.b32.xlu0 %v1891, 17
      %v1923 = vpop.permute.xlu0 %1922
      %1924 = vrot.lane.b32.xlu0 %v1892, 17
      %v1925 = vpop.permute.xlu0 %1924
      %1926 = vrot.lane.b32.xlu0 %v1893, 17
      %v1927 = vpop.permute.xlu0 %1926
      %1928 = vrot.lane.b32.xlu0 %v1894, 17
      %v1929 = vpop.permute.xlu0 %1928
      %1930 = vrot.lane.b32.xlu0 %v1895, 17
      %v1931 = vpop.permute.xlu0 %1930
      %v1932 = vsel %vm335, %v1909, %v1911
      %v1933 = vsel %vm335, %v1911, %v1913
      %v1934 = vsel %vm335, %v1915, %v1917
      %v1935 = vsel %vm335, %v1917, %v1919
      %v1936 = vsel %vm335, %v1921, %v1923
      %v1937 = vsel %vm335, %v1923, %v1925
      %v1938 = vsel %vm335, %v1927, %v1929
      %v1939 = vsel %vm335, %v1929, %v1931
      %v1948 = vsel %vm401, %v1932, 0.0
      %v1949 = vsel %vm402, %v1933, 0.0
      %v1950 = vsel %vm401, %v1934, 0.0
      %v1951 = vsel %vm402, %v1935, 0.0
      %v1952 = vsel %vm401, %v1936, 0.0
      %v1953 = vsel %vm402, %v1937, 0.0
      %v1954 = vsel %vm401, %v1938, 0.0
      %v1955 = vsel %vm402, %v1939, 0.0
      %v1956 = vld [vmem:[%s3] sm:$0xff]
      %v1957 = vld [vmem:[%s3 + $0x8] sm:$0xff]
      %v1958 = vld [vmem:[%s3 + $0x10] sm:$0xff]
      %v1959 = vld [vmem:[%s3 + $0x18] sm:$0xff]
      %v1960 = vld [vmem:[%s3 + $0x20] sm:$0xff]
      %v1961 = vld [vmem:[%s3 + $0x28] sm:$0xff]
      %v1962 = vld [vmem:[%s3 + $0x30] sm:$0xff]
      %v1963 = vld [vmem:[%s3 + $0x38] sm:$0xff]
      %1964 = vrot.lane.b32.xlu0 %v1884, 16
      %v1965 = vpop.permute.xlu0 %1964
      %1966 = vrot.lane.b32.xlu0 %v1885, 16
      %v1967 = vpop.permute.xlu0 %1966
      %1968 = vrot.lane.b32.xlu0 %v1886, 16
      %v1969 = vpop.permute.xlu0 %1968
      %1970 = vrot.lane.b32.xlu0 %v1887, 16
      %v1971 = vpop.permute.xlu0 %1970
      %1972 = vrot.lane.b32.xlu0 %v1888, 16
      %v1973 = vpop.permute.xlu0 %1972
      %1974 = vrot.lane.b32.xlu0 %v1889, 16
      %v1975 = vpop.permute.xlu0 %1974
      %1976 = vrot.lane.b32.xlu0 %v1890, 16
      %v1977 = vpop.permute.xlu0 %1976
      %1978 = vrot.lane.b32.xlu0 %v1891, 16
      %v1979 = vpop.permute.xlu0 %1978
      %1980 = vrot.lane.b32.xlu0 %v1892, 16
      %v1981 = vpop.permute.xlu0 %1980
      %1982 = vrot.lane.b32.xlu0 %v1893, 16
      %v1983 = vpop.permute.xlu0 %1982
      %1984 = vrot.lane.b32.xlu0 %v1894, 16
      %v1985 = vpop.permute.xlu0 %1984
      %1986 = vrot.lane.b32.xlu0 %v1895, 16
      %v1987 = vpop.permute.xlu0 %1986
      %v1988 = vsel %vm495, %v1965, %v1967
      %v1989 = vsel %vm495, %v1967, %v1969
      %v1990 = vsel %vm495, %v1971, %v1973
      %v1991 = vsel %vm495, %v1973, %v1975
      %v1992 = vsel %vm495, %v1977, %v1979
      %v1993 = vsel %vm495, %v1979, %v1981
      %v1994 = vsel %vm495, %v1983, %v1985
      %v1995 = vsel %vm495, %v1985, %v1987
      %v2005 = vsel %vm512, %v1960, 0
      %v2008 = vsel %vm512, %v1961, 0
      %v2011 = vsel %vm512, %v1962, 0
      %v2014 = vsel %vm512, %v1963, 0
      %2016 = vmatprep.subr.mxu0 %v1989
      %2017 = vmatpush1.msra.mxu0 %v1988
      %2018 = vmatprep.subr.mxu0 %v1991
      %2019 = vmatpush1.msra.mxu0 %v1990
      %2020 = vmatprep.subr.mxu0 %v1993
      %2021 = vmatpush1.msra.mxu0 %v1992
      %2022 = vmatprep.subr.mxu0 %v1995
      %2023 = vmatpush1.msra.mxu0 %v1994
      %2024 = vmatprep.subr.mxu0 0.0
      %2025 = vmatpush1.msra.mxu0 0.0
      %2026 = vmatprep.subr.mxu0 0.0
      %2027 = vmatpush1.msra.mxu0 0.0
      %2028 = vmatprep.subr.mxu0 0.0
      %2029 = vmatpush1.msra.mxu0 0.0
      %2030 = vmatprep.subr.mxu0 0.0
      %2031 = vmatpush1.msra.mxu0 0.0
      %2032 = vmatprep.subr.mxu0 0.0
      %2033 = vmatpush1.msra.mxu0 0.0
      %2034 = vmatprep.subr.mxu0 0.0
      %2035 = vmatpush1.msra.mxu0 0.0
      %2036 = vmatprep.subr.mxu0 0.0
      %2037 = vmatpush1.msra.mxu0 0.0
      %2038 = vmatprep.subr.mxu0 0.0
      %2039 = vmatpush1.msra.mxu0 0.0
      %2040 = vmatprep.subr.mxu0 0.0
      %2041 = vmatpush1.msra.mxu0 0.0
      %2042 = vmatprep.subr.mxu0 0.0
      %2043 = vmatpush1.msra.mxu0 0.0
      %2044 = vmatprep.subr.mxu0 0.0
      %2045 = vmatpush1.msra.mxu0 0.0
      %2046 = vmatprep.subr.mxu0 0.0
      %2047 = vmatpush1.msra.mxu0 0.0
      %2048 = vmatprep.subr.mxu0 0.0
      %2049 = vmatpush1.msra.mxu0 0.0
      %2050 = vmatprep.subr.mxu0 0.0
      %2051 = vmatpush1.msra.mxu0 0.0
      %2052 = vmatprep.subr.mxu0 0.0
      %2053 = vmatpush1.msra.mxu0 0.0
      %2054 = vmatprep.subr.mxu0 0.0
      %2055 = vmatpush1.msra.mxu0 0.0
      %2056 = vmatprep.subr.mxu0 0.0
      %2057 = vmatpush1.msra.mxu0 0.0
      %2058 = vmatprep.subr.mxu0 0.0
      %2059 = vmatpush1.msra.mxu0 0.0
      %2060 = vmatprep.subr.mxu0 0.0
      %2061 = vmatpush1.msra.mxu0 0.0
      %2062 = vmatprep.subr.mxu0 0.0
      %2063 = vmatpush1.msra.mxu0 0.0
      %2064 = vmatprep.subr.mxu0 0.0
      %2065 = vmatpush1.msra.mxu0 0.0
      %2066 = vmatprep.subr.mxu0 0.0
      %2067 = vmatpush1.msra.mxu0 0.0
      %2068 = vmatprep.subr.mxu0 0.0
      %2069 = vmatpush1.msra.mxu0 0.0
      %2070 = vmatprep.subr.mxu0 0.0
      %2071 = vmatpush1.msra.mxu0 0.0
      %2072 = vmatprep.subr.mxu0 0.0
      %2073 = vmatpush1.msra.mxu0 0.0
      %2074 = vmatprep.subr.mxu0 0.0
      %2075 = vmatpush1.msra.mxu0 0.0
      %2076 = vmatprep.subr.mxu0 0.0
      %2077 = vmatpush1.msra.mxu0 0.0
      %2078 = vmatprep.subr.mxu0 0.0
      %2079 = vmatpush1.msra.mxu0 0.0
      %2080 = vmatprep.mubr.f32.mxu0 0.0
      %2081 = vmatmul.mubr.f32.gmra.mrb[0].mxu0 %v2005
      %v2082 = vpop.f32.mrb[0].mxu0
      %v2083 = vadd.f32 0.0, %v2082
      %v2084 = vpop.f32.mrb[0].mxu0
      %v2085 = vadd.f32 0.0, %v2084
      %2086 = vmatprep.mubr.f32.mxu0 0.0
      %2087 = vmatmul.mubr.f32.gmra.mrb[0].mxu0 %v2008
      %v2088 = vpop.f32.mrb[0].mxu0
      %v2089 = vadd.f32 0.0, %v2088
      %v2090 = vpop.f32.mrb[0].mxu0
      %v2091 = vadd.f32 0.0, %v2090
      %2092 = vmatprep.mubr.f32.mxu0 0.0
      %2093 = vmatmul.mubr.f32.gmra.mrb[0].mxu0 %v2011
      %v2094 = vpop.f32.mrb[0].mxu0
      %v2095 = vadd.f32 0.0, %v2094
      %v2096 = vpop.f32.mrb[0].mxu0
      %v2097 = vadd.f32 0.0, %v2096
      %2098 = vmatprep.mubr.f32.mxu0 0.0
      %2099 = vmatmul.mubr.f32.gmra.mrb[0].mxu0 %v2014
      %v2100 = vpop.f32.mrb[0].mxu0
      %v2101 = vadd.f32 0.0, %v2100
      %v2102 = vpop.f32.mrb[0].mxu0
      %v2103 = vadd.f32 0.0, %v2102
      %2104 = vdwg.mxu0
      %v2106 = vsel %vm512, %v1956, 0
      %v2109 = vsel %vm512, %v1957, 0
      %v2112 = vsel %vm512, %v1958, 0
      %v2115 = vsel %vm512, %v1959, 0
      %2117 = vmatprep.subr.mxu0 %v1949
      %2118 = vmatpush1.msra.mxu0 %v1948
      %2119 = vmatprep.subr.mxu0 %v1951
      %2120 = vmatpush1.msra.mxu0 %v1950
      %2121 = vmatprep.subr.mxu0 %v1953
      %2122 = vmatpush1.msra.mxu0 %v1952
      %2123 = vmatprep.subr.mxu0 %v1955
      %2124 = vmatpush1.msra.mxu0 %v1954
      %2125 = vmatprep.subr.mxu0 0.0
      %2126 = vmatpush1.msra.mxu0 0.0
      %2127 = vmatprep.subr.mxu0 0.0
      %2128 = vmatpush1.msra.mxu0 0.0
      %2129 = vmatprep.subr.mxu0 0.0
      %2130 = vmatpush1.msra.mxu0 0.0
      %2131 = vmatprep.subr.mxu0 0.0
      %2132 = vmatpush1.msra.mxu0 0.0
      %2133 = vmatprep.subr.mxu0 0.0
      %2134 = vmatpush1.msra.mxu0 0.0
      %2135 = vmatprep.subr.mxu0 0.0
      %2136 = vmatpush1.msra.mxu0 0.0
      %2137 = vmatprep.subr.mxu0 0.0
      %2138 = vmatpush1.msra.mxu0 0.0
      %2139 = vmatprep.subr.mxu0 0.0
      %2140 = vmatpush1.msra.mxu0 0.0
      %2141 = vmatprep.subr.mxu0 0.0
      %2142 = vmatpush1.msra.mxu0 0.0
      %2143 = vmatprep.subr.mxu0 0.0
      %2144 = vmatpush1.msra.mxu0 0.0
      %2145 = vmatprep.subr.mxu0 0.0
      %2146 = vmatpush1.msra.mxu0 0.0
      %2147 = vmatprep.subr.mxu0 0.0
      %2148 = vmatpush1.msra.mxu0 0.0
      %2149 = vmatprep.subr.mxu0 0.0
      %2150 = vmatpush1.msra.mxu0 0.0
      %2151 = vmatprep.subr.mxu0 0.0
      %2152 = vmatpush1.msra.mxu0 0.0
      %2153 = vmatprep.subr.mxu0 0.0
      %2154 = vmatpush1.msra.mxu0 0.0
      %2155 = vmatprep.subr.mxu0 0.0
      %2156 = vmatpush1.msra.mxu0 0.0
      %2157 = vmatprep.subr.mxu0 0.0
      %2158 = vmatpush1.msra.mxu0 0.0
      %2159 = vmatprep.subr.mxu0 0.0
      %2160 = vmatpush1.msra.mxu0 0.0
      %2161 = vmatprep.subr.mxu0 0.0
      %2162 = vmatpush1.msra.mxu0 0.0
      %2163 = vmatprep.subr.mxu0 0.0
      %2164 = vmatpush1.msra.mxu0 0.0
      %2165 = vmatprep.subr.mxu0 0.0
      %2166 = vmatpush1.msra.mxu0 0.0
      %2167 = vmatprep.subr.mxu0 0.0
      %2168 = vmatpush1.msra.mxu0 0.0
      %2169 = vmatprep.subr.mxu0 0.0
      %2170 = vmatpush1.msra.mxu0 0.0
      %2171 = vmatprep.subr.mxu0 0.0
      %2172 = vmatpush1.msra.mxu0 0.0
      %2173 = vmatprep.subr.mxu0 0.0
      %2174 = vmatpush1.msra.mxu0 0.0
      %2175 = vmatprep.subr.mxu0 0.0
      %2176 = vmatpush1.msra.mxu0 0.0
      %2177 = vmatprep.subr.mxu0 0.0
      %2178 = vmatpush1.msra.mxu0 0.0
      %2179 = vmatprep.subr.mxu0 0.0
      %2180 = vmatpush1.msra.mxu0 0.0
      %2181 = vmatprep.mubr.f32.mxu0 0.0
      %2182 = vmatmul.mubr.f32.gmra.mrb[0].mxu0 %v2106
      %v2183 = vpop.f32.mrb[0].mxu0
      %v2184 = vadd.f32 %v2083, %v2183
      %v2185 = vpop.f32.mrb[0].mxu0
      %v2186 = vadd.f32 %v2085, %v2185
      %2187 = vmatprep.mubr.f32.mxu0 0.0
      %2188 = vmatmul.mubr.f32.gmra.mrb[0].mxu0 %v2109
      %v2189 = vpop.f32.mrb[0].mxu0
      %v2190 = vadd.f32 %v2089, %v2189
      %v2191 = vpop.f32.mrb[0].mxu0
      %v2192 = vadd.f32 %v2091, %v2191
      %2193 = vmatprep.mubr.f32.mxu0 0.0
      %2194 = vmatmul.mubr.f32.gmra.mrb[0].mxu0 %v2112
      %v2195 = vpop.f32.mrb[0].mxu0
      %v2196 = vadd.f32 %v2095, %v2195
      %v2197 = vpop.f32.mrb[0].mxu0
      %v2198 = vadd.f32 %v2097, %v2197
      %2199 = vmatprep.mubr.f32.mxu0 0.0
      %2200 = vmatmul.mubr.f32.gmra.mrb[0].mxu0 %v2115
      %v2201 = vpop.f32.mrb[0].mxu0
      %v2202 = vadd.f32 %v2101, %v2201
      %v2203 = vpop.f32.mrb[0].mxu0
      %v2204 = vadd.f32 %v2103, %v2203
      %2205 = vdwg.mxu0
      %2206 = vrot.lane.b32.xlu0 %v1884, 15
      %v2207 = vpop.permute.xlu0 %2206
      %2208 = vrot.lane.b32.xlu0 %v1885, 15
      %v2209 = vpop.permute.xlu0 %2208
      %2210 = vrot.lane.b32.xlu0 %v1886, 15
      %v2211 = vpop.permute.xlu0 %2210
      %2212 = vrot.lane.b32.xlu0 %v1887, 15
      %v2213 = vpop.permute.xlu0 %2212
      %2214 = vrot.lane.b32.xlu0 %v1888, 15
      %v2215 = vpop.permute.xlu0 %2214
      %2216 = vrot.lane.b32.xlu0 %v1889, 15
      %v2217 = vpop.permute.xlu0 %2216
      %2218 = vrot.lane.b32.xlu0 %v1890, 15
      %v2219 = vpop.permute.xlu0 %2218
      %2220 = vrot.lane.b32.xlu0 %v1891, 15
      %v2221 = vpop.permute.xlu0 %2220
      %2222 = vrot.lane.b32.xlu0 %v1892, 15
      %v2223 = vpop.permute.xlu0 %2222
      %2224 = vrot.lane.b32.xlu0 %v1893, 15
      %v2225 = vpop.permute.xlu0 %2224
      %2226 = vrot.lane.b32.xlu0 %v1894, 15
      %v2227 = vpop.permute.xlu0 %2226
      %2228 = vrot.lane.b32.xlu0 %v1895, 15
      %v2229 = vpop.permute.xlu0 %2228
      %v2230 = vsel %vm743, %v2207, %v2209
      %v2231 = vsel %vm743, %v2209, %v2211
      %v2232 = vsel %vm743, %v2213, %v2215
      %v2233 = vsel %vm743, %v2215, %v2217
      %v2234 = vsel %vm743, %v2219, %v2221
      %v2235 = vsel %vm743, %v2221, %v2223
      %v2236 = vsel %vm743, %v2225, %v2227
      %v2237 = vsel %vm743, %v2227, %v2229
      %v2246 = vsel %vm717, %v2230, 0.0
      %v2247 = vsel %vm718, %v2231, 0.0
      %v2248 = vsel %vm717, %v2232, 0.0
      %v2249 = vsel %vm718, %v2233, 0.0
      %v2250 = vsel %vm717, %v2234, 0.0
      %v2251 = vsel %vm718, %v2235, 0.0
      %v2252 = vsel %vm717, %v2236, 0.0
      %v2253 = vsel %vm718, %v2237, 0.0
      %v2254 = vld [vmem:[%s3 + $0x40] sm:$0xff]
      %v2255 = vld [vmem:[%s3 + $0x48] sm:$0xff]
      %v2256 = vld [vmem:[%s3 + $0x50] sm:$0xff]
      %v2257 = vld [vmem:[%s3 + $0x58] sm:$0xff]
      %v2259 = vsel %vm512, %v2254, 0
      %v2262 = vsel %vm512, %v2255, 0
      %v2265 = vsel %vm512, %v2256, 0
      %v2268 = vsel %vm512, %v2257, 0
      %2270 = vmatprep.subr.mxu0 %v2247
      %2271 = vmatpush1.msra.mxu0 %v2246
      %2272 = vmatprep.subr.mxu0 %v2249
      %2273 = vmatpush1.msra.mxu0 %v2248
      %2274 = vmatprep.subr.mxu0 %v2251
      %2275 = vmatpush1.msra.mxu0 %v2250
      %2276 = vmatprep.subr.mxu0 %v2253
      %2277 = vmatpush1.msra.mxu0 %v2252
      %2278 = vmatprep.subr.mxu0 0.0
      %2279 = vmatpush1.msra.mxu0 0.0
      %2280 = vmatprep.subr.mxu0 0.0
      %2281 = vmatpush1.msra.mxu0 0.0
      %2282 = vmatprep.subr.mxu0 0.0
      %2283 = vmatpush1.msra.mxu0 0.0
      %2284 = vmatprep.subr.mxu0 0.0
      %2285 = vmatpush1.msra.mxu0 0.0
      %2286 = vmatprep.subr.mxu0 0.0
      %2287 = vmatpush1.msra.mxu0 0.0
      %2288 = vmatprep.subr.mxu0 0.0
      %2289 = vmatpush1.msra.mxu0 0.0
      %2290 = vmatprep.subr.mxu0 0.0
      %2291 = vmatpush1.msra.mxu0 0.0
      %2292 = vmatprep.subr.mxu0 0.0
      %2293 = vmatpush1.msra.mxu0 0.0
      %2294 = vmatprep.subr.mxu0 0.0
      %2295 = vmatpush1.msra.mxu0 0.0
      %2296 = vmatprep.subr.mxu0 0.0
      %2297 = vmatpush1.msra.mxu0 0.0
      %2298 = vmatprep.subr.mxu0 0.0
      %2299 = vmatpush1.msra.mxu0 0.0
      %2300 = vmatprep.subr.mxu0 0.0
      %2301 = vmatpush1.msra.mxu0 0.0
      %2302 = vmatprep.subr.mxu0 0.0
      %2303 = vmatpush1.msra.mxu0 0.0
      %2304 = vmatprep.subr.mxu0 0.0
      %2305 = vmatpush1.msra.mxu0 0.0
      %2306 = vmatprep.subr.mxu0 0.0
      %2307 = vmatpush1.msra.mxu0 0.0
      %2308 = vmatprep.subr.mxu0 0.0
      %2309 = vmatpush1.msra.mxu0 0.0
      %2310 = vmatprep.subr.mxu0 0.0
      %2311 = vmatpush1.msra.mxu0 0.0
      %2312 = vmatprep.subr.mxu0 0.0
      %2313 = vmatpush1.msra.mxu0 0.0
      %2314 = vmatprep.subr.mxu0 0.0
      %2315 = vmatpush1.msra.mxu0 0.0
      %2316 = vmatprep.subr.mxu0 0.0
      %2317 = vmatpush1.msra.mxu0 0.0
      %2318 = vmatprep.subr.mxu0 0.0
      %2319 = vmatpush1.msra.mxu0 0.0
      %2320 = vmatprep.subr.mxu0 0.0
      %2321 = vmatpush1.msra.mxu0 0.0
      %2322 = vmatprep.subr.mxu0 0.0
      %2323 = vmatpush1.msra.mxu0 0.0
      %2324 = vmatprep.subr.mxu0 0.0
      %2325 = vmatpush1.msra.mxu0 0.0
      %2326 = vmatprep.subr.mxu0 0.0
      %2327 = vmatpush1.msra.mxu0 0.0
      %2328 = vmatprep.subr.mxu0 0.0
      %2329 = vmatpush1.msra.mxu0 0.0
      %2330 = vmatprep.subr.mxu0 0.0
      %2331 = vmatpush1.msra.mxu0 0.0
      %2332 = vmatprep.subr.mxu0 0.0
      %2333 = vmatpush1.msra.mxu0 0.0
      %2334 = vmatprep.mubr.f32.mxu0 0.0
      %2335 = vmatmul.mubr.f32.gmra.mrb[0].mxu0 %v2259
      %v2336 = vpop.f32.mrb[0].mxu0
      %v2337 = vadd.f32 0.0, %v2336
      %v2338 = vpop.f32.mrb[0].mxu0
      %v2339 = vadd.f32 0.0, %v2338
      %2340 = vmatprep.mubr.f32.mxu0 0.0
      %2341 = vmatmul.mubr.f32.gmra.mrb[0].mxu0 %v2262
      %v2342 = vpop.f32.mrb[0].mxu0
      %v2343 = vadd.f32 0.0, %v2342
      %v2344 = vpop.f32.mrb[0].mxu0
      %v2345 = vadd.f32 0.0, %v2344
      %2346 = vmatprep.mubr.f32.mxu0 0.0
      %2347 = vmatmul.mubr.f32.gmra.mrb[0].mxu0 %v2265
      %v2348 = vpop.f32.mrb[0].mxu0
      %v2349 = vadd.f32 0.0, %v2348
      %v2350 = vpop.f32.mrb[0].mxu0
      %v2351 = vadd.f32 0.0, %v2350
      %2352 = vmatprep.mubr.f32.mxu0 0.0
      %2353 = vmatmul.mubr.f32.gmra.mrb[0].mxu0 %v2268
      %v2354 = vpop.f32.mrb[0].mxu0
      %v2355 = vadd.f32 0.0, %v2354
      %v2356 = vpop.f32.mrb[0].mxu0
      %v2357 = vadd.f32 0.0, %v2356
      %2358 = vdwg.mxu0
      %v2359 = vadd.f32 %v2184, %v2337
      %v2360 = vadd.f32 %v2186, %v2339
      %v2361 = vadd.f32 %v2190, %v2343
      %v2362 = vadd.f32 %v2192, %v2345
      %v2363 = vadd.f32 %v2196, %v2349
      %v2364 = vadd.f32 %v2198, %v2351
      %v2365 = vadd.f32 %v2202, %v2355
      %v2366 = vadd.f32 %v2204, %v2357
      %2367 = vrot.lane.b32.xlu0 %v1884, 1
      %v2368 = vpop.permute.xlu0 %2367
      %2369 = vrot.lane.b32.xlu0 %v1885, 1
      %v2370 = vpop.permute.xlu0 %2369
      %2371 = vrot.lane.b32.xlu0 %v1886, 1
      %v2372 = vpop.permute.xlu0 %2371
      %2373 = vrot.lane.b32.xlu0 %v1887, 1
      %v2374 = vpop.permute.xlu0 %2373
      %2375 = vrot.lane.b32.xlu0 %v1888, 1
      %v2376 = vpop.permute.xlu0 %2375
      %2377 = vrot.lane.b32.xlu0 %v1889, 1
      %v2378 = vpop.permute.xlu0 %2377
      %2379 = vrot.lane.b32.xlu0 %v1890, 1
      %v2380 = vpop.permute.xlu0 %2379
      %2381 = vrot.lane.b32.xlu0 %v1891, 1
      %v2382 = vpop.permute.xlu0 %2381
      %2383 = vrot.lane.b32.xlu0 %v1892, 1
      %v2384 = vpop.permute.xlu0 %2383
      %2385 = vrot.lane.b32.xlu0 %v1893, 1
      %v2386 = vpop.permute.xlu0 %2385
      %2387 = vrot.lane.b32.xlu0 %v1894, 1
      %v2388 = vpop.permute.xlu0 %2387
      %2389 = vrot.lane.b32.xlu0 %v1895, 1
      %v2390 = vpop.permute.xlu0 %2389
      %v2391 = vsel %vm905, %v2368, %v2370
      %v2392 = vsel %vm905, %v2370, %v2372
      %v2393 = vsel %vm905, %v2374, %v2376
      %v2394 = vsel %vm905, %v2376, %v2378
      %v2395 = vsel %vm905, %v2380, %v2382
      %v2396 = vsel %vm905, %v2382, %v2384
      %v2397 = vsel %vm905, %v2386, %v2388
      %v2398 = vsel %vm905, %v2388, %v2390
      %v2407 = vsel %vm401, %v2391, 0.0
      %v2408 = vsel %vm402, %v2392, 0.0
      %v2409 = vsel %vm401, %v2393, 0.0
      %v2410 = vsel %vm402, %v2394, 0.0
      %v2411 = vsel %vm401, %v2395, 0.0
      %v2412 = vsel %vm402, %v2396, 0.0
      %v2413 = vsel %vm401, %v2397, 0.0
      %v2414 = vsel %vm402, %v2398, 0.0
      %v2415 = vld [vmem:[%s3 + $0x60] sm:$0xff]
      %v2416 = vld [vmem:[%s3 + $0x68] sm:$0xff]
      %v2417 = vld [vmem:[%s3 + $0x70] sm:$0xff]
      %v2418 = vld [vmem:[%s3 + $0x78] sm:$0xff]
      %v2420 = vsel %vm512, %v2415, 0
      %v2423 = vsel %vm512, %v2416, 0
      %v2426 = vsel %vm512, %v2417, 0
      %v2429 = vsel %vm512, %v2418, 0
      %2431 = vmatprep.subr.mxu0 %v2408
      %2432 = vmatpush1.msra.mxu0 %v2407
      %2433 = vmatprep.subr.mxu0 %v2410
      %2434 = vmatpush1.msra.mxu0 %v2409
      %2435 = vmatprep.subr.mxu0 %v2412
      %2436 = vmatpush1.msra.mxu0 %v2411
      %2437 = vmatprep.subr.mxu0 %v2414
      %2438 = vmatpush1.msra.mxu0 %v2413
      %2439 = vmatprep.subr.mxu0 0.0
      %2440 = vmatpush1.msra.mxu0 0.0
      %2441 = vmatprep.subr.mxu0 0.0
      %2442 = vmatpush1.msra.mxu0 0.0
      %2443 = vmatprep.subr.mxu0 0.0
      %2444 = vmatpush1.msra.mxu0 0.0
      %2445 = vmatprep.subr.mxu0 0.0
      %2446 = vmatpush1.msra.mxu0 0.0
      %2447 = vmatprep.subr.mxu0 0.0
      %2448 = vmatpush1.msra.mxu0 0.0
      %2449 = vmatprep.subr.mxu0 0.0
      %2450 = vmatpush1.msra.mxu0 0.0
      %2451 = vmatprep.subr.mxu0 0.0
      %2452 = vmatpush1.msra.mxu0 0.0
      %2453 = vmatprep.subr.mxu0 0.0
      %2454 = vmatpush1.msra.mxu0 0.0
      %2455 = vmatprep.subr.mxu0 0.0
      %2456 = vmatpush1.msra.mxu0 0.0
      %2457 = vmatprep.subr.mxu0 0.0
      %2458 = vmatpush1.msra.mxu0 0.0
      %2459 = vmatprep.subr.mxu0 0.0
      %2460 = vmatpush1.msra.mxu0 0.0
      %2461 = vmatprep.subr.mxu0 0.0
      %2462 = vmatpush1.msra.mxu0 0.0
      %2463 = vmatprep.subr.mxu0 0.0
      %2464 = vmatpush1.msra.mxu0 0.0
      %2465 = vmatprep.subr.mxu0 0.0
      %2466 = vmatpush1.msra.mxu0 0.0
      %2467 = vmatprep.subr.mxu0 0.0
      %2468 = vmatpush1.msra.mxu0 0.0
      %2469 = vmatprep.subr.mxu0 0.0
      %2470 = vmatpush1.msra.mxu0 0.0
      %2471 = vmatprep.subr.mxu0 0.0
      %2472 = vmatpush1.msra.mxu0 0.0
      %2473 = vmatprep.subr.mxu0 0.0
      %2474 = vmatpush1.msra.mxu0 0.0
      %2475 = vmatprep.subr.mxu0 0.0
      %2476 = vmatpush1.msra.mxu0 0.0
      %2477 = vmatprep.subr.mxu0 0.0
      %2478 = vmatpush1.msra.mxu0 0.0
      %2479 = vmatprep.subr.mxu0 0.0
      %2480 = vmatpush1.msra.mxu0 0.0
      %2481 = vmatprep.subr.mxu0 0.0
      %2482 = vmatpush1.msra.mxu0 0.0
      %2483 = vmatprep.subr.mxu0 0.0
      %2484 = vmatpush1.msra.mxu0 0.0
      %2485 = vmatprep.subr.mxu0 0.0
      %2486 = vmatpush1.msra.mxu0 0.0
      %2487 = vmatprep.subr.mxu0 0.0
      %2488 = vmatpush1.msra.mxu0 0.0
      %2489 = vmatprep.subr.mxu0 0.0
      %2490 = vmatpush1.msra.mxu0 0.0
      %2491 = vmatprep.subr.mxu0 0.0
      %2492 = vmatpush1.msra.mxu0 0.0
      %2493 = vmatprep.subr.mxu0 0.0
      %2494 = vmatpush1.msra.mxu0 0.0
      %2495 = vmatprep.mubr.f32.mxu0 0.0
      %2496 = vmatmul.mubr.f32.gmra.mrb[0].mxu0 %v2420
      %v2497 = vpop.f32.mrb[0].mxu0
      %v2498 = vadd.f32 0.0, %v2497
      %v2499 = vpop.f32.mrb[0].mxu0
      %v2500 = vadd.f32 0.0, %v2499
      %2501 = vmatprep.mubr.f32.mxu0 0.0
      %2502 = vmatmul.mubr.f32.gmra.mrb[0].mxu0 %v2423
      %v2503 = vpop.f32.mrb[0].mxu0
      %v2504 = vadd.f32 0.0, %v2503
      %v2505 = vpop.f32.mrb[0].mxu0
      %v2506 = vadd.f32 0.0, %v2505
      %2507 = vmatprep.mubr.f32.mxu0 0.0
      %2508 = vmatmul.mubr.f32.gmra.mrb[0].mxu0 %v2426
      %v2509 = vpop.f32.mrb[0].mxu0
      %v2510 = vadd.f32 0.0, %v2509
      %v2511 = vpop.f32.mrb[0].mxu0
      %v2512 = vadd.f32 0.0, %v2511
      %2513 = vmatprep.mubr.f32.mxu0 0.0
      %2514 = vmatmul.mubr.f32.gmra.mrb[0].mxu0 %v2429
      %v2515 = vpop.f32.mrb[0].mxu0
      %v2516 = vadd.f32 0.0, %v2515
      %v2517 = vpop.f32.mrb[0].mxu0
      %v2518 = vadd.f32 0.0, %v2517
      %2519 = vdwg.mxu0
      %v2520 = vadd.f32 %v2359, %v2498
      %v2521 = vadd.f32 %v2360, %v2500
      %v2522 = vadd.f32 %v2361, %v2504
      %v2523 = vadd.f32 %v2362, %v2506
      %v2524 = vadd.f32 %v2363, %v2510
      %v2525 = vadd.f32 %v2364, %v2512
      %v2526 = vadd.f32 %v2365, %v2516
      %v2527 = vadd.f32 %v2366, %v2518
      %v2528 = vld [vmem:[%s3 + $0x80] sm:$0xff]
      %v2529 = vld [vmem:[%s3 + $0x88] sm:$0xff]
      %v2530 = vld [vmem:[%s3 + $0x90] sm:$0xff]
      %v2531 = vld [vmem:[%s3 + $0x98] sm:$0xff]
      %v2533 = vsel %vm512, %v2528, 0
      %v2536 = vsel %vm512, %v2529, 0
      %v2539 = vsel %vm512, %v2530, 0
      %v2542 = vsel %vm512, %v2531, 0
      %2544 = vmatprep.subr.mxu0 %v1886
      %2545 = vmatpush1.msra.mxu0 %v1885
      %2546 = vmatprep.subr.mxu0 %v1889
      %2547 = vmatpush1.msra.mxu0 %v1888
      %2548 = vmatprep.subr.mxu0 %v1892
      %2549 = vmatpush1.msra.mxu0 %v1891
      %2550 = vmatprep.subr.mxu0 %v1895
      %2551 = vmatpush1.msra.mxu0 %v1894
      %2552 = vmatprep.subr.mxu0 0.0
      %2553 = vmatpush1.msra.mxu0 0.0
      %2554 = vmatprep.subr.mxu0 0.0
      %2555 = vmatpush1.msra.mxu0 0.0
      %2556 = vmatprep.subr.mxu0 0.0
      %2557 = vmatpush1.msra.mxu0 0.0
      %2558 = vmatprep.subr.mxu0 0.0
      %2559 = vmatpush1.msra.mxu0 0.0
      %2560 = vmatprep.subr.mxu0 0.0
      %2561 = vmatpush1.msra.mxu0 0.0
      %2562 = vmatprep.subr.mxu0 0.0
      %2563 = vmatpush1.msra.mxu0 0.0
      %2564 = vmatprep.subr.mxu0 0.0
      %2565 = vmatpush1.msra.mxu0 0.0
      %2566 = vmatprep.subr.mxu0 0.0
      %2567 = vmatpush1.msra.mxu0 0.0
      %2568 = vmatprep.subr.mxu0 0.0
      %2569 = vmatpush1.msra.mxu0 0.0
      %2570 = vmatprep.subr.mxu0 0.0
      %2571 = vmatpush1.msra.mxu0 0.0
      %2572 = vmatprep.subr.mxu0 0.0
      %2573 = vmatpush1.msra.mxu0 0.0
      %2574 = vmatprep.subr.mxu0 0.0
      %2575 = vmatpush1.msra.mxu0 0.0
      %2576 = vmatprep.subr.mxu0 0.0
      %2577 = vmatpush1.msra.mxu0 0.0
      %2578 = vmatprep.subr.mxu0 0.0
      %2579 = vmatpush1.msra.mxu0 0.0
      %2580 = vmatprep.subr.mxu0 0.0
      %2581 = vmatpush1.msra.mxu0 0.0
      %2582 = vmatprep.subr.mxu0 0.0
      %2583 = vmatpush1.msra.mxu0 0.0
      %2584 = vmatprep.subr.mxu0 0.0
      %2585 = vmatpush1.msra.mxu0 0.0
      %2586 = vmatprep.subr.mxu0 0.0
      %2587 = vmatpush1.msra.mxu0 0.0
      %2588 = vmatprep.subr.mxu0 0.0
      %2589 = vmatpush1.msra.mxu0 0.0
      %2590 = vmatprep.subr.mxu0 0.0
      %2591 = vmatpush1.msra.mxu0 0.0
      %2592 = vmatprep.subr.mxu0 0.0
      %2593 = vmatpush1.msra.mxu0 0.0
      %2594 = vmatprep.subr.mxu0 0.0
      %2595 = vmatpush1.msra.mxu0 0.0
      %2596 = vmatprep.subr.mxu0 0.0
      %2597 = vmatpush1.msra.mxu0 0.0
      %2598 = vmatprep.subr.mxu0 0.0
      %2599 = vmatpush1.msra.mxu0 0.0
      %2600 = vmatprep.subr.mxu0 0.0
      %2601 = vmatpush1.msra.mxu0 0.0
      %2602 = vmatprep.subr.mxu0 0.0
      %2603 = vmatpush1.msra.mxu0 0.0
      %2604 = vmatprep.subr.mxu0 0.0
      %2605 = vmatpush1.msra.mxu0 0.0
      %2606 = vmatprep.subr.mxu0 0.0
      %2607 = vmatpush1.msra.mxu0 0.0
      %2608 = vmatprep.mubr.f32.mxu0 0.0
      %2609 = vmatmul.mubr.f32.gmra.mrb[0].mxu0 %v2533
      %v2610 = vpop.f32.mrb[0].mxu0
      %v2611 = vadd.f32 0.0, %v2610
      %v2612 = vpop.f32.mrb[0].mxu0
      %v2613 = vadd.f32 0.0, %v2612
      %2614 = vmatprep.mubr.f32.mxu0 0.0
      %2615 = vmatmul.mubr.f32.gmra.mrb[0].mxu0 %v2536
      %v2616 = vpop.f32.mrb[0].mxu0
      %v2617 = vadd.f32 0.0, %v2616
      %v2618 = vpop.f32.mrb[0].mxu0
      %v2619 = vadd.f32 0.0, %v2618
      %2620 = vmatprep.mubr.f32.mxu0 0.0
      %2621 = vmatmul.mubr.f32.gmra.mrb[0].mxu0 %v2539
      %v2622 = vpop.f32.mrb[0].mxu0
      %v2623 = vadd.f32 0.0, %v2622
      %v2624 = vpop.f32.mrb[0].mxu0
      %v2625 = vadd.f32 0.0, %v2624
      %2626 = vmatprep.mubr.f32.mxu0 0.0
      %2627 = vmatmul.mubr.f32.gmra.mrb[0].mxu0 %v2542
      %v2628 = vpop.f32.mrb[0].mxu0
      %v2629 = vadd.f32 0.0, %v2628
      %v2630 = vpop.f32.mrb[0].mxu0
      %v2631 = vadd.f32 0.0, %v2630
      %2632 = vdwg.mxu0
      %v2633 = vadd.f32 %v2520, %v2611
      %v2634 = vadd.f32 %v2521, %v2613
      %v2635 = vadd.f32 %v2522, %v2617
      %v2636 = vadd.f32 %v2523, %v2619
      %v2637 = vadd.f32 %v2524, %v2623
      %v2638 = vadd.f32 %v2525, %v2625
      %v2639 = vadd.f32 %v2526, %v2629
      %v2640 = vadd.f32 %v2527, %v2631
      %v2641 = vld [vmem:[#allocation2 + $0x8] sm:$0xff]
      %v2642 = vld [vmem:[#allocation2 + $0x10] sm:$0xff]
      %v2643 = vld [vmem:[#allocation2 + $0x18] sm:$0xff]
      %v2644 = vld [vmem:[#allocation2 + $0x28] sm:$0xff]
      %v2645 = vld [vmem:[#allocation2 + $0x30] sm:$0xff]
      %v2646 = vld [vmem:[#allocation2 + $0x38] sm:$0xff]
      %v2647 = vld [vmem:[#allocation2 + $0x48] sm:$0xff]
      %v2648 = vld [vmem:[#allocation2 + $0x50] sm:$0xff]
      %v2649 = vld [vmem:[#allocation2 + $0x58] sm:$0xff]
      %v2650 = vld [vmem:[#allocation2 + $0x68] sm:$0xff]
      %v2651 = vld [vmem:[#allocation2 + $0x70] sm:$0xff]
      %v2652 = vld [vmem:[#allocation2 + $0x78] sm:$0xff]
      %2665 = vrot.lane.b32.xlu0 %v2641, 127
      %v2666 = vpop.permute.xlu0 %2665
      %2667 = vrot.lane.b32.xlu0 %v2642, 127
      %v2668 = vpop.permute.xlu0 %2667
      %2669 = vrot.lane.b32.xlu0 %v2643, 127
      %v2670 = vpop.permute.xlu0 %2669
      %2671 = vrot.lane.b32.xlu0 %v2644, 127
      %v2672 = vpop.permute.xlu0 %2671
      %2673 = vrot.lane.b32.xlu0 %v2645, 127
      %v2674 = vpop.permute.xlu0 %2673
      %2675 = vrot.lane.b32.xlu0 %v2646, 127
      %v2676 = vpop.permute.xlu0 %2675
      %2677 = vrot.lane.b32.xlu0 %v2647, 127
      %v2678 = vpop.permute.xlu0 %2677
      %2679 = vrot.lane.b32.xlu0 %v2648, 127
      %v2680 = vpop.permute.xlu0 %2679
      %2681 = vrot.lane.b32.xlu0 %v2649, 127
      %v2682 = vpop.permute.xlu0 %2681
      %2683 = vrot.lane.b32.xlu0 %v2650, 127
      %v2684 = vpop.permute.xlu0 %2683
      %2685 = vrot.lane.b32.xlu0 %v2651, 127
      %v2686 = vpop.permute.xlu0 %2685
      %2687 = vrot.lane.b32.xlu0 %v2652, 127
      %v2688 = vpop.permute.xlu0 %2687
      %v2689 = vsel %vm1204, %v2666, %v2668
      %v2690 = vsel %vm1204, %v2668, %v2670
      %v2691 = vsel %vm1204, %v2672, %v2674
      %v2692 = vsel %vm1204, %v2674, %v2676
      %v2693 = vsel %vm1204, %v2678, %v2680
      %v2694 = vsel %vm1204, %v2680, %v2682
      %v2695 = vsel %vm1204, %v2684, %v2686
      %v2696 = vsel %vm1204, %v2686, %v2688
      %v2705 = vsel %vm717, %v2689, 0.0
      %v2706 = vsel %vm718, %v2690, 0.0
      %v2707 = vsel %vm717, %v2691, 0.0
      %v2708 = vsel %vm718, %v2692, 0.0
      %v2709 = vsel %vm717, %v2693, 0.0
      %v2710 = vsel %vm718, %v2694, 0.0
      %v2711 = vsel %vm717, %v2695, 0.0
      %v2712 = vsel %vm718, %v2696, 0.0
      %v2713 = vld [vmem:[%s3 + $0xa0] sm:$0xff]
      %v2714 = vld [vmem:[%s3 + $0xa8] sm:$0xff]
      %v2715 = vld [vmem:[%s3 + $0xb0] sm:$0xff]
      %v2716 = vld [vmem:[%s3 + $0xb8] sm:$0xff]
      %v2718 = vsel %vm512, %v2713, 0
      %v2721 = vsel %vm512, %v2714, 0
      %v2724 = vsel %vm512, %v2715, 0
      %v2727 = vsel %vm512, %v2716, 0
      %2729 = vmatprep.subr.mxu0 %v2706
      %2730 = vmatpush1.msra.mxu0 %v2705
      %2731 = vmatprep.subr.mxu0 %v2708
      %2732 = vmatpush1.msra.mxu0 %v2707
      %2733 = vmatprep.subr.mxu0 %v2710
      %2734 = vmatpush1.msra.mxu0 %v2709
      %2735 = vmatprep.subr.mxu0 %v2712
      %2736 = vmatpush1.msra.mxu0 %v2711
      %2737 = vmatprep.subr.mxu0 0.0
      %2738 = vmatpush1.msra.mxu0 0.0
      %2739 = vmatprep.subr.mxu0 0.0
      %2740 = vmatpush1.msra.mxu0 0.0
      %2741 = vmatprep.subr.mxu0 0.0
      %2742 = vmatpush1.msra.mxu0 0.0
      %2743 = vmatprep.subr.mxu0 0.0
      %2744 = vmatpush1.msra.mxu0 0.0
      %2745 = vmatprep.subr.mxu0 0.0
      %2746 = vmatpush1.msra.mxu0 0.0
      %2747 = vmatprep.subr.mxu0 0.0
      %2748 = vmatpush1.msra.mxu0 0.0
      %2749 = vmatprep.subr.mxu0 0.0
      %2750 = vmatpush1.msra.mxu0 0.0
      %2751 = vmatprep.subr.mxu0 0.0
      %2752 = vmatpush1.msra.mxu0 0.0
      %2753 = vmatprep.subr.mxu0 0.0
      %2754 = vmatpush1.msra.mxu0 0.0
      %2755 = vmatprep.subr.mxu0 0.0
      %2756 = vmatpush1.msra.mxu0 0.0
      %2757 = vmatprep.subr.mxu0 0.0
      %2758 = vmatpush1.msra.mxu0 0.0
      %2759 = vmatprep.subr.mxu0 0.0
      %2760 = vmatpush1.msra.mxu0 0.0
      %2761 = vmatprep.subr.mxu0 0.0
      %2762 = vmatpush1.msra.mxu0 0.0
      %2763 = vmatprep.subr.mxu0 0.0
      %2764 = vmatpush1.msra.mxu0 0.0
      %2765 = vmatprep.subr.mxu0 0.0
      %2766 = vmatpush1.msra.mxu0 0.0
      %2767 = vmatprep.subr.mxu0 0.0
      %2768 = vmatpush1.msra.mxu0 0.0
      %2769 = vmatprep.subr.mxu0 0.0
      %2770 = vmatpush1.msra.mxu0 0.0
      %2771 = vmatprep.subr.mxu0 0.0
      %2772 = vmatpush1.msra.mxu0 0.0
      %2773 = vmatprep.subr.mxu0 0.0
      %2774 = vmatpush1.msra.mxu0 0.0
      %2775 = vmatprep.subr.mxu0 0.0
      %2776 = vmatpush1.msra.mxu0 0.0
      %2777 = vmatprep.subr.mxu0 0.0
      %2778 = vmatpush1.msra.mxu0 0.0
      %2779 = vmatprep.subr.mxu0 0.0
      %2780 = vmatpush1.msra.mxu0 0.0
      %2781 = vmatprep.subr.mxu0 0.0
      %2782 = vmatpush1.msra.mxu0 0.0
      %2783 = vmatprep.subr.mxu0 0.0
      %2784 = vmatpush1.msra.mxu0 0.0
      %2785 = vmatprep.subr.mxu0 0.0
      %2786 = vmatpush1.msra.mxu0 0.0
      %2787 = vmatprep.subr.mxu0 0.0
      %2788 = vmatpush1.msra.mxu0 0.0
      %2789 = vmatprep.subr.mxu0 0.0
      %2790 = vmatpush1.msra.mxu0 0.0
      %2791 = vmatprep.subr.mxu0 0.0
      %2792 = vmatpush1.msra.mxu0 0.0
      %2793 = vmatprep.mubr.f32.mxu0 0.0
      %2794 = vmatmul.mubr.f32.gmra.mrb[0].mxu0 %v2718
      %v2795 = vpop.f32.mrb[0].mxu0
      %v2796 = vadd.f32 0.0, %v2795
      %v2797 = vpop.f32.mrb[0].mxu0
      %v2798 = vadd.f32 0.0, %v2797
      %2799 = vmatprep.mubr.f32.mxu0 0.0
      %2800 = vmatmul.mubr.f32.gmra.mrb[0].mxu0 %v2721
      %v2801 = vpop.f32.mrb[0].mxu0
      %v2802 = vadd.f32 0.0, %v2801
      %v2803 = vpop.f32.mrb[0].mxu0
      %v2804 = vadd.f32 0.0, %v2803
      %2805 = vmatprep.mubr.f32.mxu0 0.0
      %2806 = vmatmul.mubr.f32.gmra.mrb[0].mxu0 %v2724
      %v2807 = vpop.f32.mrb[0].mxu0
      %v2808 = vadd.f32 0.0, %v2807
      %v2809 = vpop.f32.mrb[0].mxu0
      %v2810 = vadd.f32 0.0, %v2809
      %2811 = vmatprep.mubr.f32.mxu0 0.0
      %2812 = vmatmul.mubr.f32.gmra.mrb[0].mxu0 %v2727
      %v2813 = vpop.f32.mrb[0].mxu0
      %v2814 = vadd.f32 0.0, %v2813
      %v2815 = vpop.f32.mrb[0].mxu0
      %v2816 = vadd.f32 0.0, %v2815
      %2817 = vdwg.mxu0
      %v2818 = vadd.f32 %v2633, %v2796
      %v2819 = vadd.f32 %v2634, %v2798
      %v2820 = vadd.f32 %v2635, %v2802
      %v2821 = vadd.f32 %v2636, %v2804
      %v2822 = vadd.f32 %v2637, %v2808
      %v2823 = vadd.f32 %v2638, %v2810
      %v2824 = vadd.f32 %v2639, %v2814
      %v2825 = vadd.f32 %v2640, %v2816
      %2826 = vrot.lane.b32.xlu0 %v2641, 113
      %v2827 = vpop.permute.xlu0 %2826
      %2828 = vrot.lane.b32.xlu0 %v2642, 113
      %v2829 = vpop.permute.xlu0 %2828
      %2830 = vrot.lane.b32.xlu0 %v2643, 113
      %v2831 = vpop.permute.xlu0 %2830
      %2832 = vrot.lane.b32.xlu0 %v2644, 113
      %v2833 = vpop.permute.xlu0 %2832
      %2834 = vrot.lane.b32.xlu0 %v2645, 113
      %v2835 = vpop.permute.xlu0 %2834
      %2836 = vrot.lane.b32.xlu0 %v2646, 113
      %v2837 = vpop.permute.xlu0 %2836
      %2838 = vrot.lane.b32.xlu0 %v2647, 113
      %v2839 = vpop.permute.xlu0 %2838
      %2840 = vrot.lane.b32.xlu0 %v2648, 113
      %v2841 = vpop.permute.xlu0 %2840
      %2842 = vrot.lane.b32.xlu0 %v2649, 113
      %v2843 = vpop.permute.xlu0 %2842
      %2844 = vrot.lane.b32.xlu0 %v2650, 113
      %v2845 = vpop.permute.xlu0 %2844
      %2846 = vrot.lane.b32.xlu0 %v2651, 113
      %v2847 = vpop.permute.xlu0 %2846
      %2848 = vrot.lane.b32.xlu0 %v2652, 113
      %v2849 = vpop.permute.xlu0 %2848
      %v2850 = vsel %vm1366, %v2827, %v2829
      %v2851 = vsel %vm1366, %v2829, %v2831
      %v2852 = vsel %vm1366, %v2833, %v2835
      %v2853 = vsel %vm1366, %v2835, %v2837
      %v2854 = vsel %vm1366, %v2839, %v2841
      %v2855 = vsel %vm1366, %v2841, %v2843
      %v2856 = vsel %vm1366, %v2845, %v2847
      %v2857 = vsel %vm1366, %v2847, %v2849
      %v2866 = vsel %vm401, %v2850, 0.0
      %v2867 = vsel %vm402, %v2851, 0.0
      %v2868 = vsel %vm401, %v2852, 0.0
      %v2869 = vsel %vm402, %v2853, 0.0
      %v2870 = vsel %vm401, %v2854, 0.0
      %v2871 = vsel %vm402, %v2855, 0.0
      %v2872 = vsel %vm401, %v2856, 0.0
      %v2873 = vsel %vm402, %v2857, 0.0
      %v2874 = vld [vmem:[%s3 + $0xc0] sm:$0xff]
      %v2875 = vld [vmem:[%s3 + $0xc8] sm:$0xff]
      %v2876 = vld [vmem:[%s3 + $0xd0] sm:$0xff]
      %v2877 = vld [vmem:[%s3 + $0xd8] sm:$0xff]
      %v2879 = vsel %vm512, %v2874, 0
      %v2882 = vsel %vm512, %v2875, 0
      %v2885 = vsel %vm512, %v2876, 0
      %v2888 = vsel %vm512, %v2877, 0
      %2890 = vmatprep.subr.mxu0 %v2867
      %2891 = vmatpush1.msra.mxu0 %v2866
      %2892 = vmatprep.subr.mxu0 %v2869
      %2893 = vmatpush1.msra.mxu0 %v2868
      %2894 = vmatprep.subr.mxu0 %v2871
      %2895 = vmatpush1.msra.mxu0 %v2870
      %2896 = vmatprep.subr.mxu0 %v2873
      %2897 = vmatpush1.msra.mxu0 %v2872
      %2898 = vmatprep.subr.mxu0 0.0
      %2899 = vmatpush1.msra.mxu0 0.0
      %2900 = vmatprep.subr.mxu0 0.0
      %2901 = vmatpush1.msra.mxu0 0.0
      %2902 = vmatprep.subr.mxu0 0.0
      %2903 = vmatpush1.msra.mxu0 0.0
      %2904 = vmatprep.subr.mxu0 0.0
      %2905 = vmatpush1.msra.mxu0 0.0
      %2906 = vmatprep.subr.mxu0 0.0
      %2907 = vmatpush1.msra.mxu0 0.0
      %2908 = vmatprep.subr.mxu0 0.0
      %2909 = vmatpush1.msra.mxu0 0.0
      %2910 = vmatprep.subr.mxu0 0.0
      %2911 = vmatpush1.msra.mxu0 0.0
      %2912 = vmatprep.subr.mxu0 0.0
      %2913 = vmatpush1.msra.mxu0 0.0
      %2914 = vmatprep.subr.mxu0 0.0
      %2915 = vmatpush1.msra.mxu0 0.0
      %2916 = vmatprep.subr.mxu0 0.0
      %2917 = vmatpush1.msra.mxu0 0.0
      %2918 = vmatprep.subr.mxu0 0.0
      %2919 = vmatpush1.msra.mxu0 0.0
      %2920 = vmatprep.subr.mxu0 0.0
      %2921 = vmatpush1.msra.mxu0 0.0
      %2922 = vmatprep.subr.mxu0 0.0
      %2923 = vmatpush1.msra.mxu0 0.0
      %2924 = vmatprep.subr.mxu0 0.0
      %2925 = vmatpush1.msra.mxu0 0.0
      %2926 = vmatprep.subr.mxu0 0.0
      %2927 = vmatpush1.msra.mxu0 0.0
      %2928 = vmatprep.subr.mxu0 0.0
      %2929 = vmatpush1.msra.mxu0 0.0
      %2930 = vmatprep.subr.mxu0 0.0
      %2931 = vmatpush1.msra.mxu0 0.0
      %2932 = vmatprep.subr.mxu0 0.0
      %2933 = vmatpush1.msra.mxu0 0.0
      %2934 = vmatprep.subr.mxu0 0.0
      %2935 = vmatpush1.msra.mxu0 0.0
      %2936 = vmatprep.subr.mxu0 0.0
      %2937 = vmatpush1.msra.mxu0 0.0
      %2938 = vmatprep.subr.mxu0 0.0
      %2939 = vmatpush1.msra.mxu0 0.0
      %2940 = vmatprep.subr.mxu0 0.0
      %2941 = vmatpush1.msra.mxu0 0.0
      %2942 = vmatprep.subr.mxu0 0.0
      %2943 = vmatpush1.msra.mxu0 0.0
      %2944 = vmatprep.subr.mxu0 0.0
      %2945 = vmatpush1.msra.mxu0 0.0
      %2946 = vmatprep.subr.mxu0 0.0
      %2947 = vmatpush1.msra.mxu0 0.0
      %2948 = vmatprep.subr.mxu0 0.0
      %2949 = vmatpush1.msra.mxu0 0.0
      %2950 = vmatprep.subr.mxu0 0.0
      %2951 = vmatpush1.msra.mxu0 0.0
      %2952 = vmatprep.subr.mxu0 0.0
      %2953 = vmatpush1.msra.mxu0 0.0
      %2954 = vmatprep.mubr.f32.mxu0 0.0
      %2955 = vmatmul.mubr.f32.gmra.mrb[0].mxu0 %v2879
      %v2956 = vpop.f32.mrb[0].mxu0
      %v2957 = vadd.f32 0.0, %v2956
      %v2958 = vpop.f32.mrb[0].mxu0
      %v2959 = vadd.f32 0.0, %v2958
      %2960 = vmatprep.mubr.f32.mxu0 0.0
      %2961 = vmatmul.mubr.f32.gmra.mrb[0].mxu0 %v2882
      %v2962 = vpop.f32.mrb[0].mxu0
      %v2963 = vadd.f32 0.0, %v2962
      %v2964 = vpop.f32.mrb[0].mxu0
      %v2965 = vadd.f32 0.0, %v2964
      %2966 = vmatprep.mubr.f32.mxu0 0.0
      %2967 = vmatmul.mubr.f32.gmra.mrb[0].mxu0 %v2885
      %v2968 = vpop.f32.mrb[0].mxu0
      %v2969 = vadd.f32 0.0, %v2968
      %v2970 = vpop.f32.mrb[0].mxu0
      %v2971 = vadd.f32 0.0, %v2970
      %2972 = vmatprep.mubr.f32.mxu0 0.0
      %2973 = vmatmul.mubr.f32.gmra.mrb[0].mxu0 %v2888
      %v2974 = vpop.f32.mrb[0].mxu0
      %v2975 = vadd.f32 0.0, %v2974
      %v2976 = vpop.f32.mrb[0].mxu0
      %v2977 = vadd.f32 0.0, %v2976
      %2978 = vdwg.mxu0
      %v2979 = vadd.f32 %v2818, %v2957
      %v2980 = vadd.f32 %v2819, %v2959
      %v2981 = vadd.f32 %v2820, %v2963
      %v2982 = vadd.f32 %v2821, %v2965
      %v2983 = vadd.f32 %v2822, %v2969
      %v2984 = vadd.f32 %v2823, %v2971
      %v2985 = vadd.f32 %v2824, %v2975
      %v2986 = vadd.f32 %v2825, %v2977
      %v2987 = vld [vmem:[%s3 + $0xe0] sm:$0xff]
      %v2988 = vld [vmem:[%s3 + $0xe8] sm:$0xff]
      %v2989 = vld [vmem:[%s3 + $0xf0] sm:$0xff]
      %v2990 = vld [vmem:[%s3 + $0xf8] sm:$0xff]
      %2991 = vrot.lane.b32.xlu0 %v2641, 112
      %v2992 = vpop.permute.xlu0 %2991
      %2993 = vrot.lane.b32.xlu0 %v2642, 112
      %v2994 = vpop.permute.xlu0 %2993
      %2995 = vrot.lane.b32.xlu0 %v2643, 112
      %v2996 = vpop.permute.xlu0 %2995
      %2997 = vrot.lane.b32.xlu0 %v2644, 112
      %v2998 = vpop.permute.xlu0 %2997
      %2999 = vrot.lane.b32.xlu0 %v2645, 112
      %v3000 = vpop.permute.xlu0 %2999
      %3001 = vrot.lane.b32.xlu0 %v2646, 112
      %v3002 = vpop.permute.xlu0 %3001
      %3003 = vrot.lane.b32.xlu0 %v2647, 112
      %v3004 = vpop.permute.xlu0 %3003
      %3005 = vrot.lane.b32.xlu0 %v2648, 112
      %v3006 = vpop.permute.xlu0 %3005
      %3007 = vrot.lane.b32.xlu0 %v2649, 112
      %v3008 = vpop.permute.xlu0 %3007
      %3009 = vrot.lane.b32.xlu0 %v2650, 112
      %v3010 = vpop.permute.xlu0 %3009
      %3011 = vrot.lane.b32.xlu0 %v2651, 112
      %v3012 = vpop.permute.xlu0 %3011
      %3013 = vrot.lane.b32.xlu0 %v2652, 112
      %v3014 = vpop.permute.xlu0 %3013
      %v3015 = vsel %vm1532, %v2992, %v2994
      %v3016 = vsel %vm1532, %v2994, %v2996
      %v3017 = vsel %vm1532, %v2998, %v3000
      %v3018 = vsel %vm1532, %v3000, %v3002
      %v3019 = vsel %vm1532, %v3004, %v3006
      %v3020 = vsel %vm1532, %v3006, %v3008
      %v3021 = vsel %vm1532, %v3010, %v3012
      %v3022 = vsel %vm1532, %v3012, %v3014
      %v3032 = vsel %vm512, %v2987, 0
      %v3035 = vsel %vm512, %v2988, 0
      %v3038 = vsel %vm512, %v2989, 0
      %v3041 = vsel %vm512, %v2990, 0
      %3043 = vmatprep.subr.mxu0 %v3016
      %3044 = vmatpush1.msra.mxu0 %v3015
      %3045 = vmatprep.subr.mxu0 %v3018
      %3046 = vmatpush1.msra.mxu0 %v3017
      %3047 = vmatprep.subr.mxu0 %v3020
      %3048 = vmatpush1.msra.mxu0 %v3019
      %3049 = vmatprep.subr.mxu0 %v3022
      %3050 = vmatpush1.msra.mxu0 %v3021
      %3051 = vmatprep.subr.mxu0 0.0
      %3052 = vmatpush1.msra.mxu0 0.0
      %3053 = vmatprep.subr.mxu0 0.0
      %3054 = vmatpush1.msra.mxu0 0.0
      %3055 = vmatprep.subr.mxu0 0.0
      %3056 = vmatpush1.msra.mxu0 0.0
      %3057 = vmatprep.subr.mxu0 0.0
      %3058 = vmatpush1.msra.mxu0 0.0
      %3059 = vmatprep.subr.mxu0 0.0
      %3060 = vmatpush1.msra.mxu0 0.0
      %3061 = vmatprep.subr.mxu0 0.0
      %3062 = vmatpush1.msra.mxu0 0.0
      %3063 = vmatprep.subr.mxu0 0.0
      %3064 = vmatpush1.msra.mxu0 0.0
      %3065 = vmatprep.subr.mxu0 0.0
      %3066 = vmatpush1.msra.mxu0 0.0
      %3067 = vmatprep.subr.mxu0 0.0
      %3068 = vmatpush1.msra.mxu0 0.0
      %3069 = vmatprep.subr.mxu0 0.0
      %3070 = vmatpush1.msra.mxu0 0.0
      %3071 = vmatprep.subr.mxu0 0.0
      %3072 = vmatpush1.msra.mxu0 0.0
      %3073 = vmatprep.subr.mxu0 0.0
      %3074 = vmatpush1.msra.mxu0 0.0
      %3075 = vmatprep.subr.mxu0 0.0
      %3076 = vmatpush1.msra.mxu0 0.0
      %3077 = vmatprep.subr.mxu0 0.0
      %3078 = vmatpush1.msra.mxu0 0.0
      %3079 = vmatprep.subr.mxu0 0.0
      %3080 = vmatpush1.msra.mxu0 0.0
      %3081 = vmatprep.subr.mxu0 0.0
      %3082 = vmatpush1.msra.mxu0 0.0
      %3083 = vmatprep.subr.mxu0 0.0
      %3084 = vmatpush1.msra.mxu0 0.0
      %3085 = vmatprep.subr.mxu0 0.0
      %3086 = vmatpush1.msra.mxu0 0.0
      %3087 = vmatprep.subr.mxu0 0.0
      %3088 = vmatpush1.msra.mxu0 0.0
      %3089 = vmatprep.subr.mxu0 0.0
      %3090 = vmatpush1.msra.mxu0 0.0
      %3091 = vmatprep.subr.mxu0 0.0
      %3092 = vmatpush1.msra.mxu0 0.0
      %3093 = vmatprep.subr.mxu0 0.0
      %3094 = vmatpush1.msra.mxu0 0.0
      %3095 = vmatprep.subr.mxu0 0.0
      %3096 = vmatpush1.msra.mxu0 0.0
      %3097 = vmatprep.subr.mxu0 0.0
      %3098 = vmatpush1.msra.mxu0 0.0
      %3099 = vmatprep.subr.mxu0 0.0
      %3100 = vmatpush1.msra.mxu0 0.0
      %3101 = vmatprep.subr.mxu0 0.0
      %3102 = vmatpush1.msra.mxu0 0.0
      %3103 = vmatprep.subr.mxu0 0.0
      %3104 = vmatpush1.msra.mxu0 0.0
      %3105 = vmatprep.subr.mxu0 0.0
      %3106 = vmatpush1.msra.mxu0 0.0
      %3107 = vmatprep.mubr.f32.mxu0 0.0
      %3108 = vmatmul.mubr.f32.gmra.mrb[0].mxu0 %v3032
      %v3109 = vpop.f32.mrb[0].mxu0
      %v3110 = vadd.f32 0.0, %v3109
      %v3111 = vpop.f32.mrb[0].mxu0
      %v3112 = vadd.f32 0.0, %v3111
      %3113 = vmatprep.mubr.f32.mxu0 0.0
      %3114 = vmatmul.mubr.f32.gmra.mrb[0].mxu0 %v3035
      %v3115 = vpop.f32.mrb[0].mxu0
      %v3116 = vadd.f32 0.0, %v3115
      %v3117 = vpop.f32.mrb[0].mxu0
      %v3118 = vadd.f32 0.0, %v3117
      %3119 = vmatprep.mubr.f32.mxu0 0.0
      %3120 = vmatmul.mubr.f32.gmra.mrb[0].mxu0 %v3038
      %v3121 = vpop.f32.mrb[0].mxu0
      %v3122 = vadd.f32 0.0, %v3121
      %v3123 = vpop.f32.mrb[0].mxu0
      %v3124 = vadd.f32 0.0, %v3123
      %3125 = vmatprep.mubr.f32.mxu0 0.0
      %3126 = vmatmul.mubr.f32.gmra.mrb[0].mxu0 %v3041
      %v3127 = vpop.f32.mrb[0].mxu0
      %v3128 = vadd.f32 0.0, %v3127
      %v3129 = vpop.f32.mrb[0].mxu0
      %v3130 = vadd.f32 0.0, %v3129
      %3131 = vdwg.mxu0
      %v3132 = vadd.f32 %v2979, %v3110
      %v3133 = vadd.f32 %v2980, %v3112
      %v3134 = vadd.f32 %v2981, %v3116
      %v3135 = vadd.f32 %v2982, %v3118
      %v3136 = vadd.f32 %v2983, %v3122
      %v3137 = vadd.f32 %v2984, %v3124
      %v3138 = vadd.f32 %v2985, %v3128
      %v3139 = vadd.f32 %v2986, %v3130
      %3140 = vrot.lane.b32.xlu0 %v2641, 111
      %v3141 = vpop.permute.xlu0 %3140
      %3142 = vrot.lane.b32.xlu0 %v2642, 111
      %v3143 = vpop.permute.xlu0 %3142
      %3144 = vrot.lane.b32.xlu0 %v2643, 111
      %v3145 = vpop.permute.xlu0 %3144
      %3146 = vrot.lane.b32.xlu0 %v2644, 111
      %v3147 = vpop.permute.xlu0 %3146
      %3148 = vrot.lane.b32.xlu0 %v2645, 111
      %v3149 = vpop.permute.xlu0 %3148
      %3150 = vrot.lane.b32.xlu0 %v2646, 111
      %v3151 = vpop.permute.xlu0 %3150
      %3152 = vrot.lane.b32.xlu0 %v2647, 111
      %v3153 = vpop.permute.xlu0 %3152
      %3154 = vrot.lane.b32.xlu0 %v2648, 111
      %v3155 = vpop.permute.xlu0 %3154
      %3156 = vrot.lane.b32.xlu0 %v2649, 111
      %v3157 = vpop.permute.xlu0 %3156
      %3158 = vrot.lane.b32.xlu0 %v2650, 111
      %v3159 = vpop.permute.xlu0 %3158
      %3160 = vrot.lane.b32.xlu0 %v2651, 111
      %v3161 = vpop.permute.xlu0 %3160
      %3162 = vrot.lane.b32.xlu0 %v2652, 111
      %v3163 = vpop.permute.xlu0 %3162
      %v3164 = vsel %vm1682, %v3141, %v3143
      %v3165 = vsel %vm1682, %v3143, %v3145
      %v3166 = vsel %vm1682, %v3147, %v3149
      %v3167 = vsel %vm1682, %v3149, %v3151
      %v3168 = vsel %vm1682, %v3153, %v3155
      %v3169 = vsel %vm1682, %v3155, %v3157
      %v3170 = vsel %vm1682, %v3159, %v3161
      %v3171 = vsel %vm1682, %v3161, %v3163
      %v3180 = vsel %vm717, %v3164, 0.0
      %v3181 = vsel %vm718, %v3165, 0.0
      %v3182 = vsel %vm717, %v3166, 0.0
      %v3183 = vsel %vm718, %v3167, 0.0
      %v3184 = vsel %vm717, %v3168, 0.0
      %v3185 = vsel %vm718, %v3169, 0.0
      %v3186 = vsel %vm717, %v3170, 0.0
      %v3187 = vsel %vm718, %v3171, 0.0
      %v3188 = vld [vmem:[%s3 + $0x100] sm:$0xff]
      %v3189 = vld [vmem:[%s3 + $0x108] sm:$0xff]
      %v3190 = vld [vmem:[%s3 + $0x110] sm:$0xff]
      %v3191 = vld [vmem:[%s3 + $0x118] sm:$0xff]
      %v3193 = vsel %vm512, %v3188, 0
      %v3196 = vsel %vm512, %v3189, 0
      %v3199 = vsel %vm512, %v3190, 0
      %v3202 = vsel %vm512, %v3191, 0
      %3204 = vmatprep.subr.mxu0 %v3181
      %3205 = vmatpush1.msra.mxu0 %v3180
      %3206 = vmatprep.subr.mxu0 %v3183
      %3207 = vmatpush1.msra.mxu0 %v3182
      %3208 = vmatprep.subr.mxu0 %v3185
      %3209 = vmatpush1.msra.mxu0 %v3184
      %3210 = vmatprep.subr.mxu0 %v3187
      %3211 = vmatpush1.msra.mxu0 %v3186
      %3212 = vmatprep.subr.mxu0 0.0
      %3213 = vmatpush1.msra.mxu0 0.0
      %3214 = vmatprep.subr.mxu0 0.0
      %3215 = vmatpush1.msra.mxu0 0.0
      %3216 = vmatprep.subr.mxu0 0.0
      %3217 = vmatpush1.msra.mxu0 0.0
      %3218 = vmatprep.subr.mxu0 0.0
      %3219 = vmatpush1.msra.mxu0 0.0
      %3220 = vmatprep.subr.mxu0 0.0
      %3221 = vmatpush1.msra.mxu0 0.0
      %3222 = vmatprep.subr.mxu0 0.0
      %3223 = vmatpush1.msra.mxu0 0.0
      %3224 = vmatprep.subr.mxu0 0.0
      %3225 = vmatpush1.msra.mxu0 0.0
      %3226 = vmatprep.subr.mxu0 0.0
      %3227 = vmatpush1.msra.mxu0 0.0
      %3228 = vmatprep.subr.mxu0 0.0
      %3229 = vmatpush1.msra.mxu0 0.0
      %3230 = vmatprep.subr.mxu0 0.0
      %3231 = vmatpush1.msra.mxu0 0.0
      %3232 = vmatprep.subr.mxu0 0.0
      %3233 = vmatpush1.msra.mxu0 0.0
      %3234 = vmatprep.subr.mxu0 0.0
      %3235 = vmatpush1.msra.mxu0 0.0
      %3236 = vmatprep.subr.mxu0 0.0
      %3237 = vmatpush1.msra.mxu0 0.0
      %3238 = vmatprep.subr.mxu0 0.0
      %3239 = vmatpush1.msra.mxu0 0.0
      %3240 = vmatprep.subr.mxu0 0.0
      %3241 = vmatpush1.msra.mxu0 0.0
      %3242 = vmatprep.subr.mxu0 0.0
      %3243 = vmatpush1.msra.mxu0 0.0
      %3244 = vmatprep.subr.mxu0 0.0
      %3245 = vmatpush1.msra.mxu0 0.0
      %3246 = vmatprep.subr.mxu0 0.0
      %3247 = vmatpush1.msra.mxu0 0.0
      %3248 = vmatprep.subr.mxu0 0.0
      %3249 = vmatpush1.msra.mxu0 0.0
      %3250 = vmatprep.subr.mxu0 0.0
      %3251 = vmatpush1.msra.mxu0 0.0
      %3252 = vmatprep.subr.mxu0 0.0
      %3253 = vmatpush1.msra.mxu0 0.0
      %3254 = vmatprep.subr.mxu0 0.0
      %3255 = vmatpush1.msra.mxu0 0.0
      %3256 = vmatprep.subr.mxu0 0.0
      %3257 = vmatpush1.msra.mxu0 0.0
      %3258 = vmatprep.subr.mxu0 0.0
      %3259 = vmatpush1.msra.mxu0 0.0
      %3260 = vmatprep.subr.mxu0 0.0
      %3261 = vmatpush1.msra.mxu0 0.0
      %3262 = vmatprep.subr.mxu0 0.0
      %3263 = vmatpush1.msra.mxu0 0.0
      %3264 = vmatprep.subr.mxu0 0.0
      %3265 = vmatpush1.msra.mxu0 0.0
      %3266 = vmatprep.subr.mxu0 0.0
      %3267 = vmatpush1.msra.mxu0 0.0
      %3268 = vmatprep.mubr.f32.mxu0 0.0
      %3269 = vmatmul.mubr.f32.gmra.mrb[0].mxu0 %v3193
      %v3270 = vpop.f32.mrb[0].mxu0
      %v3271 = vadd.f32 0.0, %v3270
      %v3272 = vpop.f32.mrb[0].mxu0
      %v3273 = vadd.f32 0.0, %v3272
      %3274 = vmatprep.mubr.f32.mxu0 0.0
      %3275 = vmatmul.mubr.f32.gmra.mrb[0].mxu0 %v3196
      %v3276 = vpop.f32.mrb[0].mxu0
      %v3277 = vadd.f32 0.0, %v3276
      %v3278 = vpop.f32.mrb[0].mxu0
      %v3279 = vadd.f32 0.0, %v3278
      %3280 = vmatprep.mubr.f32.mxu0 0.0
      %3281 = vmatmul.mubr.f32.gmra.mrb[0].mxu0 %v3199
      %v3282 = vpop.f32.mrb[0].mxu0
      %v3283 = vadd.f32 0.0, %v3282
      %v3284 = vpop.f32.mrb[0].mxu0
      %v3285 = vadd.f32 0.0, %v3284
      %3286 = vmatprep.mubr.f32.mxu0 0.0
      %3287 = vmatmul.mubr.f32.gmra.mrb[0].mxu0 %v3202
      %v3288 = vpop.f32.mrb[0].mxu0
      %v3289 = vadd.f32 0.0, %v3288
      %v3290 = vpop.f32.mrb[0].mxu0
      %v3291 = vadd.f32 0.0, %v3290
      %3292 = vdwg.mxu0
      %v3293 = vadd.f32 %v3132, %v3271
      %v3294 = vadd.f32 %v3133, %v3273
      %v3295 = vadd.f32 %v3134, %v3277
      %v3296 = vadd.f32 %v3135, %v3279
      %v3297 = vadd.f32 %v3136, %v3283
      %v3298 = vadd.f32 %v3137, %v3285
      %v3299 = vadd.f32 %v3138, %v3289
      %v3300 = vadd.f32 %v3139, %v3291
      %v3301 = vld [vmem:[%s4] sm:$0xff]
      %v3302 = vld [vmem:[%s4 + $0x8] sm:$0xff]
      %v3303 = vld [vmem:[%s4 + $0x10] sm:$0xff]
      %v3304 = vld [vmem:[%s4 + $0x18] sm:$0xff]
      %3306 = vset.pattern.permute.xlu0 0
      %3307 = vperm.xlu0 %3306, %v3301
      %v3308 = vpop.permute.xlu0 %3307
      %3311 = vset.pattern.permute.xlu0 0
      %3312 = vperm.xlu0 %3311, %v3302
      %v3313 = vpop.permute.xlu0 %3312
      %3316 = vset.pattern.permute.xlu0 0
      %3317 = vperm.xlu0 %3316, %v3303
      %v3318 = vpop.permute.xlu0 %3317
      %3321 = vset.pattern.permute.xlu0 0
      %3322 = vperm.xlu0 %3321, %v3304
      %v3323 = vpop.permute.xlu0 %3322
      %v3325 = vadd.f32 %v3293, %v3308
      %v3326 = vadd.f32 %v3294, %v3308
      %v3327 = vadd.f32 %v3295, %v3313
      %v3328 = vadd.f32 %v3296, %v3313
      %v3329 = vadd.f32 %v3297, %v3318
      %v3330 = vadd.f32 %v3298, %v3318
      %v3331 = vadd.f32 %v3299, %v3323
      %v3332 = vadd.f32 %v3300, %v3323
      %vm3333 = vcmp.gt.f32.partialorder %v3325, 0.0
      %vm3334 = vcmp.gt.f32.partialorder %v3326, 0.0
      %vm3335 = vcmp.gt.f32.partialorder %v3327, 0.0
      %vm3336 = vcmp.gt.f32.partialorder %v3328, 0.0
      %vm3337 = vcmp.gt.f32.partialorder %v3329, 0.0
      %vm3338 = vcmp.gt.f32.partialorder %v3330, 0.0
      %vm3339 = vcmp.gt.f32.partialorder %v3331, 0.0
      %vm3340 = vcmp.gt.f32.partialorder %v3332, 0.0
      %v3341 = vmul.f32 %v3325, 0.2
      %v3342 = vmul.f32 %v3326, 0.2
      %v3343 = vmul.f32 %v3327, 0.2
      %v3344 = vmul.f32 %v3328, 0.2
      %v3345 = vmul.f32 %v3329, 0.2
      %v3346 = vmul.f32 %v3330, 0.2
      %v3347 = vmul.f32 %v3331, 0.2
      %v3348 = vmul.f32 %v3332, 0.2
      %v3349 = vsel %vm3333, %v3325, %v3341
      %v3350 = vsel %vm3334, %v3326, %v3342
      %v3351 = vsel %vm3335, %v3327, %v3343
      %v3352 = vsel %vm3336, %v3328, %v3344
      %v3353 = vsel %vm3337, %v3329, %v3345
      %v3354 = vsel %vm3338, %v3330, %v3346
      %v3355 = vsel %vm3339, %v3331, %v3347
      %v3356 = vsel %vm3340, %v3332, %v3348
      %3357 = vst [vmem:[#allocation2 + $0x8] sm:$0xff] %v3349
      %3358 = vst [vmem:[#allocation2 + $0x10] sm:$0xff] %v3350
      %3359 = vst [vmem:[#allocation2 + $0x28] sm:$0xff] %v3351
      %3360 = vst [vmem:[#allocation2 + $0x30] sm:$0xff] %v3352
      %3361 = vst [vmem:[#allocation2 + $0x48] sm:$0xff] %v3353
      %3362 = vst [vmem:[#allocation2 + $0x50] sm:$0xff] %v3354
      %3363 = vst [vmem:[#allocation2 + $0x68] sm:$0xff] %v3355
      %3364 = vst [vmem:[#allocation2 + $0x70] sm:$0xff] %v3356
      %v3365 = vld [vmem:[#allocation2] sm:$0xff]
      %v3366 = vld [vmem:[#allocation2 + $0x8] sm:$0xff]
      %v3367 = vld [vmem:[#allocation2 + $0x10] sm:$0xff]
      %v3368 = vld [vmem:[#allocation2 + $0x20] sm:$0xff]
      %v3369 = vld [vmem:[#allocation2 + $0x28] sm:$0xff]
      %v3370 = vld [vmem:[#allocation2 + $0x30] sm:$0xff]
      %v3371 = vld [vmem:[#allocation2 + $0x40] sm:$0xff]
      %v3372 = vld [vmem:[#allocation2 + $0x48] sm:$0xff]
      %v3373 = vld [vmem:[#allocation2 + $0x50] sm:$0xff]
      %v3374 = vld [vmem:[#allocation2 + $0x60] sm:$0xff]
      %v3375 = vld [vmem:[#allocation2 + $0x68] sm:$0xff]
      %v3376 = vld [vmem:[#allocation2 + $0x70] sm:$0xff]
      %3389 = vrot.lane.b32.xlu0 %v3365, 17
      %v3390 = vpop.permute.xlu0 %3389
      %3391 = vrot.lane.b32.xlu0 %v3366, 17
      %v3392 = vpop.permute.xlu0 %3391
      %3393 = vrot.lane.b32.xlu0 %v3367, 17
      %v3394 = vpop.permute.xlu0 %3393
      %3395 = vrot.lane.b32.xlu0 %v3368, 17
      %v3396 = vpop.permute.xlu0 %3395
      %3397 = vrot.lane.b32.xlu0 %v3369, 17
      %v3398 = vpop.permute.xlu0 %3397
      %3399 = vrot.lane.b32.xlu0 %v3370, 17
      %v3400 = vpop.permute.xlu0 %3399
      %3401 = vrot.lane.b32.xlu0 %v3371, 17
      %v3402 = vpop.permute.xlu0 %3401
      %3403 = vrot.lane.b32.xlu0 %v3372, 17
      %v3404 = vpop.permute.xlu0 %3403
      %3405 = vrot.lane.b32.xlu0 %v3373, 17
      %v3406 = vpop.permute.xlu0 %3405
      %3407 = vrot.lane.b32.xlu0 %v3374, 17
      %v3408 = vpop.permute.xlu0 %3407
      %3409 = vrot.lane.b32.xlu0 %v3375, 17
      %v3410 = vpop.permute.xlu0 %3409
      %3411 = vrot.lane.b32.xlu0 %v3376, 17
      %v3412 = vpop.permute.xlu0 %3411
      %v3413 = vsel %vm335, %v3390, %v3392
      %v3414 = vsel %vm335, %v3392, %v3394
      %v3415 = vsel %vm335, %v3396, %v3398
      %v3416 = vsel %vm335, %v3398, %v3400
      %v3417 = vsel %vm335, %v3402, %v3404
      %v3418 = vsel %vm335, %v3404, %v3406
      %v3419 = vsel %vm335, %v3408, %v3410
      %v3420 = vsel %vm335, %v3410, %v3412
      %v3429 = vsel %vm401, %v3413, 0.0
      %v3430 = vsel %vm402, %v3414, 0.0
      %v3431 = vsel %vm401, %v3415, 0.0
      %v3432 = vsel %vm402, %v3416, 0.0
      %v3433 = vsel %vm401, %v3417, 0.0
      %v3434 = vsel %vm402, %v3418, 0.0
      %v3435 = vsel %vm401, %v3419, 0.0
      %v3436 = vsel %vm402, %v3420, 0.0
      %v3437 = vld [vmem:[%s5] sm:$0xff]
      %v3438 = vld [vmem:[%s5 + $0x8] sm:$0xff]
      %v3439 = vld [vmem:[%s5 + $0x10] sm:$0xff]
      %v3440 = vld [vmem:[%s5 + $0x18] sm:$0xff]
      %v3441 = vld [vmem:[%s5 + $0x20] sm:$0xff]
      %v3442 = vld [vmem:[%s5 + $0x28] sm:$0xff]
      %v3443 = vld [vmem:[%s5 + $0x30] sm:$0xff]
      %v3444 = vld [vmem:[%s5 + $0x38] sm:$0xff]
      %3445 = vrot.lane.b32.xlu0 %v3365, 16
      %v3446 = vpop.permute.xlu0 %3445
      %3447 = vrot.lane.b32.xlu0 %v3366, 16
      %v3448 = vpop.permute.xlu0 %3447
      %3449 = vrot.lane.b32.xlu0 %v3367, 16
      %v3450 = vpop.permute.xlu0 %3449
      %3451 = vrot.lane.b32.xlu0 %v3368, 16
      %v3452 = vpop.permute.xlu0 %3451
      %3453 = vrot.lane.b32.xlu0 %v3369, 16
      %v3454 = vpop.permute.xlu0 %3453
      %3455 = vrot.lane.b32.xlu0 %v3370, 16
      %v3456 = vpop.permute.xlu0 %3455
      %3457 = vrot.lane.b32.xlu0 %v3371, 16
      %v3458 = vpop.permute.xlu0 %3457
      %3459 = vrot.lane.b32.xlu0 %v3372, 16
      %v3460 = vpop.permute.xlu0 %3459
      %3461 = vrot.lane.b32.xlu0 %v3373, 16
      %v3462 = vpop.permute.xlu0 %3461
      %3463 = vrot.lane.b32.xlu0 %v3374, 16
      %v3464 = vpop.permute.xlu0 %3463
      %3465 = vrot.lane.b32.xlu0 %v3375, 16
      %v3466 = vpop.permute.xlu0 %3465
      %3467 = vrot.lane.b32.xlu0 %v3376, 16
      %v3468 = vpop.permute.xlu0 %3467
      %v3469 = vsel %vm495, %v3446, %v3448
      %v3470 = vsel %vm495, %v3448, %v3450
      %v3471 = vsel %vm495, %v3452, %v3454
      %v3472 = vsel %vm495, %v3454, %v3456
      %v3473 = vsel %vm495, %v3458, %v3460
      %v3474 = vsel %vm495, %v3460, %v3462
      %v3475 = vsel %vm495, %v3464, %v3466
      %v3476 = vsel %vm495, %v3466, %v3468
      %v3486 = vsel %vm512, %v3441, 0
      %v3489 = vsel %vm512, %v3442, 0
      %v3492 = vsel %vm512, %v3443, 0
      %v3495 = vsel %vm512, %v3444, 0
      %3497 = vmatprep.subr.mxu0 %v3470
      %3498 = vmatpush1.msra.mxu0 %v3469
      %3499 = vmatprep.subr.mxu0 %v3472
      %3500 = vmatpush1.msra.mxu0 %v3471
      %3501 = vmatprep.subr.mxu0 %v3474
      %3502 = vmatpush1.msra.mxu0 %v3473
      %3503 = vmatprep.subr.mxu0 %v3476
      %3504 = vmatpush1.msra.mxu0 %v3475
      %3505 = vmatprep.subr.mxu0 0.0
      %3506 = vmatpush1.msra.mxu0 0.0
      %3507 = vmatprep.subr.mxu0 0.0
      %3508 = vmatpush1.msra.mxu0 0.0
      %3509 = vmatprep.subr.mxu0 0.0
      %3510 = vmatpush1.msra.mxu0 0.0
      %3511 = vmatprep.subr.mxu0 0.0
      %3512 = vmatpush1.msra.mxu0 0.0
      %3513 = vmatprep.subr.mxu0 0.0
      %3514 = vmatpush1.msra.mxu0 0.0
      %3515 = vmatprep.subr.mxu0 0.0
      %3516 = vmatpush1.msra.mxu0 0.0
      %3517 = vmatprep.subr.mxu0 0.0
      %3518 = vmatpush1.msra.mxu0 0.0
      %3519 = vmatprep.subr.mxu0 0.0
      %3520 = vmatpush1.msra.mxu0 0.0
      %3521 = vmatprep.subr.mxu0 0.0
      %3522 = vmatpush1.msra.mxu0 0.0
      %3523 = vmatprep.subr.mxu0 0.0
      %3524 = vmatpush1.msra.mxu0 0.0
      %3525 = vmatprep.subr.mxu0 0.0
      %3526 = vmatpush1.msra.mxu0 0.0
      %3527 = vmatprep.subr.mxu0 0.0
      %3528 = vmatpush1.msra.mxu0 0.0
      %3529 = vmatprep.subr.mxu0 0.0
      %3530 = vmatpush1.msra.mxu0 0.0
      %3531 = vmatprep.subr.mxu0 0.0
      %3532 = vmatpush1.msra.mxu0 0.0
      %3533 = vmatprep.subr.mxu0 0.0
      %3534 = vmatpush1.msra.mxu0 0.0
      %3535 = vmatprep.subr.mxu0 0.0
      %3536 = vmatpush1.msra.mxu0 0.0
      %3537 = vmatprep.subr.mxu0 0.0
      %3538 = vmatpush1.msra.mxu0 0.0
      %3539 = vmatprep.subr.mxu0 0.0
      %3540 = vmatpush1.msra.mxu0 0.0
      %3541 = vmatprep.subr.mxu0 0.0
      %3542 = vmatpush1.msra.mxu0 0.0
      %3543 = vmatprep.subr.mxu0 0.0
      %3544 = vmatpush1.msra.mxu0 0.0
      %3545 = vmatprep.subr.mxu0 0.0
      %3546 = vmatpush1.msra.mxu0 0.0
      %3547 = vmatprep.subr.mxu0 0.0
      %3548 = vmatpush1.msra.mxu0 0.0
      %3549 = vmatprep.subr.mxu0 0.0
      %3550 = vmatpush1.msra.mxu0 0.0
      %3551 = vmatprep.subr.mxu0 0.0
      %3552 = vmatpush1.msra.mxu0 0.0
      %3553 = vmatprep.subr.mxu0 0.0
      %3554 = vmatpush1.msra.mxu0 0.0
      %3555 = vmatprep.subr.mxu0 0.0
      %3556 = vmatpush1.msra.mxu0 0.0
      %3557 = vmatprep.subr.mxu0 0.0
      %3558 = vmatpush1.msra.mxu0 0.0
      %3559 = vmatprep.subr.mxu0 0.0
      %3560 = vmatpush1.msra.mxu0 0.0
      %3561 = vmatprep.mubr.f32.mxu0 0.0
      %3562 = vmatmul.mubr.f32.gmra.mrb[0].mxu0 %v3486
      %v3563 = vpop.f32.mrb[0].mxu0
      %v3564 = vadd.f32 0.0, %v3563
      %v3565 = vpop.f32.mrb[0].mxu0
      %v3566 = vadd.f32 0.0, %v3565
      %3567 = vmatprep.mubr.f32.mxu0 0.0
      %3568 = vmatmul.mubr.f32.gmra.mrb[0].mxu0 %v3489
      %v3569 = vpop.f32.mrb[0].mxu0
      %v3570 = vadd.f32 0.0, %v3569
      %v3571 = vpop.f32.mrb[0].mxu0
      %v3572 = vadd.f32 0.0, %v3571
      %3573 = vmatprep.mubr.f32.mxu0 0.0
      %3574 = vmatmul.mubr.f32.gmra.mrb[0].mxu0 %v3492
      %v3575 = vpop.f32.mrb[0].mxu0
      %v3576 = vadd.f32 0.0, %v3575
      %v3577 = vpop.f32.mrb[0].mxu0
      %v3578 = vadd.f32 0.0, %v3577
      %3579 = vmatprep.mubr.f32.mxu0 0.0
      %3580 = vmatmul.mubr.f32.gmra.mrb[0].mxu0 %v3495
      %v3581 = vpop.f32.mrb[0].mxu0
      %v3582 = vadd.f32 0.0, %v3581
      %v3583 = vpop.f32.mrb[0].mxu0
      %v3584 = vadd.f32 0.0, %v3583
      %3585 = vdwg.mxu0
      %v3587 = vsel %vm512, %v3437, 0
      %v3590 = vsel %vm512, %v3438, 0
      %v3593 = vsel %vm512, %v3439, 0
      %v3596 = vsel %vm512, %v3440, 0
      %3598 = vmatprep.subr.mxu0 %v3430
      %3599 = vmatpush1.msra.mxu0 %v3429
      %3600 = vmatprep.subr.mxu0 %v3432
      %3601 = vmatpush1.msra.mxu0 %v3431
      %3602 = vmatprep.subr.mxu0 %v3434
      %3603 = vmatpush1.msra.mxu0 %v3433
      %3604 = vmatprep.subr.mxu0 %v3436
      %3605 = vmatpush1.msra.mxu0 %v3435
      %3606 = vmatprep.subr.mxu0 0.0
      %3607 = vmatpush1.msra.mxu0 0.0
      %3608 = vmatprep.subr.mxu0 0.0
      %3609 = vmatpush1.msra.mxu0 0.0
      %3610 = vmatprep.subr.mxu0 0.0
      %3611 = vmatpush1.msra.mxu0 0.0
      %3612 = vmatprep.subr.mxu0 0.0
      %3613 = vmatpush1.msra.mxu0 0.0
      %3614 = vmatprep.subr.mxu0 0.0
      %3615 = vmatpush1.msra.mxu0 0.0
      %3616 = vmatprep.subr.mxu0 0.0
      %3617 = vmatpush1.msra.mxu0 0.0
      %3618 = vmatprep.subr.mxu0 0.0
      %3619 = vmatpush1.msra.mxu0 0.0
      %3620 = vmatprep.subr.mxu0 0.0
      %3621 = vmatpush1.msra.mxu0 0.0
      %3622 = vmatprep.subr.mxu0 0.0
      %3623 = vmatpush1.msra.mxu0 0.0
      %3624 = vmatprep.subr.mxu0 0.0
      %3625 = vmatpush1.msra.mxu0 0.0
      %3626 = vmatprep.subr.mxu0 0.0
      %3627 = vmatpush1.msra.mxu0 0.0
      %3628 = vmatprep.subr.mxu0 0.0
      %3629 = vmatpush1.msra.mxu0 0.0
      %3630 = vmatprep.subr.mxu0 0.0
      %3631 = vmatpush1.msra.mxu0 0.0
      %3632 = vmatprep.subr.mxu0 0.0
      %3633 = vmatpush1.msra.mxu0 0.0
      %3634 = vmatprep.subr.mxu0 0.0
      %3635 = vmatpush1.msra.mxu0 0.0
      %3636 = vmatprep.subr.mxu0 0.0
      %3637 = vmatpush1.msra.mxu0 0.0
      %3638 = vmatprep.subr.mxu0 0.0
      %3639 = vmatpush1.msra.mxu0 0.0
      %3640 = vmatprep.subr.mxu0 0.0
      %3641 = vmatpush1.msra.mxu0 0.0
      %3642 = vmatprep.subr.mxu0 0.0
      %3643 = vmatpush1.msra.mxu0 0.0
      %3644 = vmatprep.subr.mxu0 0.0
      %3645 = vmatpush1.msra.mxu0 0.0
      %3646 = vmatprep.subr.mxu0 0.0
      %3647 = vmatpush1.msra.mxu0 0.0
      %3648 = vmatprep.subr.mxu0 0.0
      %3649 = vmatpush1.msra.mxu0 0.0
      %3650 = vmatprep.subr.mxu0 0.0
      %3651 = vmatpush1.msra.mxu0 0.0
      %3652 = vmatprep.subr.mxu0 0.0
      %3653 = vmatpush1.msra.mxu0 0.0
      %3654 = vmatprep.subr.mxu0 0.0
      %3655 = vmatpush1.msra.mxu0 0.0
      %3656 = vmatprep.subr.mxu0 0.0
      %3657 = vmatpush1.msra.mxu0 0.0
      %3658 = vmatprep.subr.mxu0 0.0
      %3659 = vmatpush1.msra.mxu0 0.0
      %3660 = vmatprep.subr.mxu0 0.0
      %3661 = vmatpush1.msra.mxu0 0.0
      %3662 = vmatprep.mubr.f32.mxu0 0.0
      %3663 = vmatmul.mubr.f32.gmra.mrb[0].mxu0 %v3587
      %v3664 = vpop.f32.mrb[0].mxu0
      %v3665 = vadd.f32 %v3564, %v3664
      %v3666 = vpop.f32.mrb[0].mxu0
      %v3667 = vadd.f32 %v3566, %v3666
      %3668 = vmatprep.mubr.f32.mxu0 0.0
      %3669 = vmatmul.mubr.f32.gmra.mrb[0].mxu0 %v3590
      %v3670 = vpop.f32.mrb[0].mxu0
      %v3671 = vadd.f32 %v3570, %v3670
      %v3672 = vpop.f32.mrb[0].mxu0
      %v3673 = vadd.f32 %v3572, %v3672
      %3674 = vmatprep.mubr.f32.mxu0 0.0
      %3675 = vmatmul.mubr.f32.gmra.mrb[0].mxu0 %v3593
      %v3676 = vpop.f32.mrb[0].mxu0
      %v3677 = vadd.f32 %v3576, %v3676
      %v3678 = vpop.f32.mrb[0].mxu0
      %v3679 = vadd.f32 %v3578, %v3678
      %3680 = vmatprep.mubr.f32.mxu0 0.0
      %3681 = vmatmul.mubr.f32.gmra.mrb[0].mxu0 %v3596
      %v3682 = vpop.f32.mrb[0].mxu0
      %v3683 = vadd.f32 %v3582, %v3682
      %v3684 = vpop.f32.mrb[0].mxu0
      %v3685 = vadd.f32 %v3584, %v3684
      %3686 = vdwg.mxu0
      %3687 = vrot.lane.b32.xlu0 %v3365, 15
      %v3688 = vpop.permute.xlu0 %3687
      %3689 = vrot.lane.b32.xlu0 %v3366, 15
      %v3690 = vpop.permute.xlu0 %3689
      %3691 = vrot.lane.b32.xlu0 %v3367, 15
      %v3692 = vpop.permute.xlu0 %3691
      %3693 = vrot.lane.b32.xlu0 %v3368, 15
      %v3694 = vpop.permute.xlu0 %3693
      %3695 = vrot.lane.b32.xlu0 %v3369, 15
      %v3696 = vpop.permute.xlu0 %3695
      %3697 = vrot.lane.b32.xlu0 %v3370, 15
      %v3698 = vpop.permute.xlu0 %3697
      %3699 = vrot.lane.b32.xlu0 %v3371, 15
      %v3700 = vpop.permute.xlu0 %3699
      %3701 = vrot.lane.b32.xlu0 %v3372, 15
      %v3702 = vpop.permute.xlu0 %3701
      %3703 = vrot.lane.b32.xlu0 %v3373, 15
      %v3704 = vpop.permute.xlu0 %3703
      %3705 = vrot.lane.b32.xlu0 %v3374, 15
      %v3706 = vpop.permute.xlu0 %3705
      %3707 = vrot.lane.b32.xlu0 %v3375, 15
      %v3708 = vpop.permute.xlu0 %3707
      %3709 = vrot.lane.b32.xlu0 %v3376, 15
      %v3710 = vpop.permute.xlu0 %3709
      %v3711 = vsel %vm743, %v3688, %v3690
      %v3712 = vsel %vm743, %v3690, %v3692
      %v3713 = vsel %vm743, %v3694, %v3696
      %v3714 = vsel %vm743, %v3696, %v3698
      %v3715 = vsel %vm743, %v3700, %v3702
      %v3716 = vsel %vm743, %v3702, %v3704
      %v3717 = vsel %vm743, %v3706, %v3708
      %v3718 = vsel %vm743, %v3708, %v3710
      %v3727 = vsel %vm717, %v3711, 0.0
      %v3728 = vsel %vm718, %v3712, 0.0
      %v3729 = vsel %vm717, %v3713, 0.0
      %v3730 = vsel %vm718, %v3714, 0.0
      %v3731 = vsel %vm717, %v3715, 0.0
      %v3732 = vsel %vm718, %v3716, 0.0
      %v3733 = vsel %vm717, %v3717, 0.0
      %v3734 = vsel %vm718, %v3718, 0.0
      %v3735 = vld [vmem:[%s5 + $0x40] sm:$0xff]
      %v3736 = vld [vmem:[%s5 + $0x48] sm:$0xff]
      %v3737 = vld [vmem:[%s5 + $0x50] sm:$0xff]
      %v3738 = vld [vmem:[%s5 + $0x58] sm:$0xff]
      %v3740 = vsel %vm512, %v3735, 0
      %v3743 = vsel %vm512, %v3736, 0
      %v3746 = vsel %vm512, %v3737, 0
      %v3749 = vsel %vm512, %v3738, 0
      %3751 = vmatprep.subr.mxu0 %v3728
      %3752 = vmatpush1.msra.mxu0 %v3727
      %3753 = vmatprep.subr.mxu0 %v3730
      %3754 = vmatpush1.msra.mxu0 %v3729
      %3755 = vmatprep.subr.mxu0 %v3732
      %3756 = vmatpush1.msra.mxu0 %v3731
      %3757 = vmatprep.subr.mxu0 %v3734
      %3758 = vmatpush1.msra.mxu0 %v3733
      %3759 = vmatprep.subr.mxu0 0.0
      %3760 = vmatpush1.msra.mxu0 0.0
      %3761 = vmatprep.subr.mxu0 0.0
      %3762 = vmatpush1.msra.mxu0 0.0
      %3763 = vmatprep.subr.mxu0 0.0
      %3764 = vmatpush1.msra.mxu0 0.0
      %3765 = vmatprep.subr.mxu0 0.0
      %3766 = vmatpush1.msra.mxu0 0.0
      %3767 = vmatprep.subr.mxu0 0.0
      %3768 = vmatpush1.msra.mxu0 0.0
      %3769 = vmatprep.subr.mxu0 0.0
      %3770 = vmatpush1.msra.mxu0 0.0
      %3771 = vmatprep.subr.mxu0 0.0
      %3772 = vmatpush1.msra.mxu0 0.0
      %3773 = vmatprep.subr.mxu0 0.0
      %3774 = vmatpush1.msra.mxu0 0.0
      %3775 = vmatprep.subr.mxu0 0.0
      %3776 = vmatpush1.msra.mxu0 0.0
      %3777 = vmatprep.subr.mxu0 0.0
      %3778 = vmatpush1.msra.mxu0 0.0
      %3779 = vmatprep.subr.mxu0 0.0
      %3780 = vmatpush1.msra.mxu0 0.0
      %3781 = vmatprep.subr.mxu0 0.0
      %3782 = vmatpush1.msra.mxu0 0.0
      %3783 = vmatprep.subr.mxu0 0.0
      %3784 = vmatpush1.msra.mxu0 0.0
      %3785 = vmatprep.subr.mxu0 0.0
      %3786 = vmatpush1.msra.mxu0 0.0
      %3787 = vmatprep.subr.mxu0 0.0
      %3788 = vmatpush1.msra.mxu0 0.0
      %3789 = vmatprep.subr.mxu0 0.0
      %3790 = vmatpush1.msra.mxu0 0.0
      %3791 = vmatprep.subr.mxu0 0.0
      %3792 = vmatpush1.msra.mxu0 0.0
      %3793 = vmatprep.subr.mxu0 0.0
      %3794 = vmatpush1.msra.mxu0 0.0
      %3795 = vmatprep.subr.mxu0 0.0
      %3796 = vmatpush1.msra.mxu0 0.0
      %3797 = vmatprep.subr.mxu0 0.0
      %3798 = vmatpush1.msra.mxu0 0.0
      %3799 = vmatprep.subr.mxu0 0.0
      %3800 = vmatpush1.msra.mxu0 0.0
      %3801 = vmatprep.subr.mxu0 0.0
      %3802 = vmatpush1.msra.mxu0 0.0
      %3803 = vmatprep.subr.mxu0 0.0
      %3804 = vmatpush1.msra.mxu0 0.0
      %3805 = vmatprep.subr.mxu0 0.0
      %3806 = vmatpush1.msra.mxu0 0.0
      %3807 = vmatprep.subr.mxu0 0.0
      %3808 = vmatpush1.msra.mxu0 0.0
      %3809 = vmatprep.subr.mxu0 0.0
      %3810 = vmatpush1.msra.mxu0 0.0
      %3811 = vmatprep.subr.mxu0 0.0
      %3812 = vmatpush1.msra.mxu0 0.0
      %3813 = vmatprep.subr.mxu0 0.0
      %3814 = vmatpush1.msra.mxu0 0.0
      %3815 = vmatprep.mubr.f32.mxu0 0.0
      %3816 = vmatmul.mubr.f32.gmra.mrb[0].mxu0 %v3740
      %v3817 = vpop.f32.mrb[0].mxu0
      %v3818 = vadd.f32 0.0, %v3817
      %v3819 = vpop.f32.mrb[0].mxu0
      %v3820 = vadd.f32 0.0, %v3819
      %3821 = vmatprep.mubr.f32.mxu0 0.0
      %3822 = vmatmul.mubr.f32.gmra.mrb[0].mxu0 %v3743
      %v3823 = vpop.f32.mrb[0].mxu0
      %v3824 = vadd.f32 0.0, %v3823
      %v3825 = vpop.f32.mrb[0].mxu0
      %v3826 = vadd.f32 0.0, %v3825
      %3827 = vmatprep.mubr.f32.mxu0 0.0
      %3828 = vmatmul.mubr.f32.gmra.mrb[0].mxu0 %v3746
      %v3829 = vpop.f32.mrb[0].mxu0
      %v3830 = vadd.f32 0.0, %v3829
      %v3831 = vpop.f32.mrb[0].mxu0
      %v3832 = vadd.f32 0.0, %v3831
      %3833 = vmatprep.mubr.f32.mxu0 0.0
      %3834 = vmatmul.mubr.f32.gmra.mrb[0].mxu0 %v3749
      %v3835 = vpop.f32.mrb[0].mxu0
      %v3836 = vadd.f32 0.0, %v3835
      %v3837 = vpop.f32.mrb[0].mxu0
      %v3838 = vadd.f32 0.0, %v3837
      %3839 = vdwg.mxu0
      %v3840 = vadd.f32 %v3665, %v3818
      %v3841 = vadd.f32 %v3667, %v3820
      %v3842 = vadd.f32 %v3671, %v3824
      %v3843 = vadd.f32 %v3673, %v3826
      %v3844 = vadd.f32 %v3677, %v3830
      %v3845 = vadd.f32 %v3679, %v3832
      %v3846 = vadd.f32 %v3683, %v3836
      %v3847 = vadd.f32 %v3685, %v3838
      %3848 = vrot.lane.b32.xlu0 %v3365, 1
      %v3849 = vpop.permute.xlu0 %3848
      %3850 = vrot.lane.b32.xlu0 %v3366, 1
      %v3851 = vpop.permute.xlu0 %3850
      %3852 = vrot.lane.b32.xlu0 %v3367, 1
      %v3853 = vpop.permute.xlu0 %3852
      %3854 = vrot.lane.b32.xlu0 %v3368, 1
      %v3855 = vpop.permute.xlu0 %3854
      %3856 = vrot.lane.b32.xlu0 %v3369, 1
      %v3857 = vpop.permute.xlu0 %3856
      %3858 = vrot.lane.b32.xlu0 %v3370, 1
      %v3859 = vpop.permute.xlu0 %3858
      %3860 = vrot.lane.b32.xlu0 %v3371, 1
      %v3861 = vpop.permute.xlu0 %3860
      %3862 = vrot.lane.b32.xlu0 %v3372, 1
      %v3863 = vpop.permute.xlu0 %3862
      %3864 = vrot.lane.b32.xlu0 %v3373, 1
      %v3865 = vpop.permute.xlu0 %3864
      %3866 = vrot.lane.b32.xlu0 %v3374, 1
      %v3867 = vpop.permute.xlu0 %3866
      %3868 = vrot.lane.b32.xlu0 %v3375, 1
      %v3869 = vpop.permute.xlu0 %3868
      %3870 = vrot.lane.b32.xlu0 %v3376, 1
      %v3871 = vpop.permute.xlu0 %3870
      %v3872 = vsel %vm905, %v3849, %v3851
      %v3873 = vsel %vm905, %v3851, %v3853
      %v3874 = vsel %vm905, %v3855, %v3857
      %v3875 = vsel %vm905, %v3857, %v3859
      %v3876 = vsel %vm905, %v3861, %v3863
      %v3877 = vsel %vm905, %v3863, %v3865
      %v3878 = vsel %vm905, %v3867, %v3869
      %v3879 = vsel %vm905, %v3869, %v3871
      %v3888 = vsel %vm401, %v3872, 0.0
      %v3889 = vsel %vm402, %v3873, 0.0
      %v3890 = vsel %vm401, %v3874, 0.0
      %v3891 = vsel %vm402, %v3875, 0.0
      %v3892 = vsel %vm401, %v3876, 0.0
      %v3893 = vsel %vm402, %v3877, 0.0
      %v3894 = vsel %vm401, %v3878, 0.0
      %v3895 = vsel %vm402, %v3879, 0.0
      %v3896 = vld [vmem:[%s5 + $0x60] sm:$0xff]
      %v3897 = vld [vmem:[%s5 + $0x68] sm:$0xff]
      %v3898 = vld [vmem:[%s5 + $0x70] sm:$0xff]
      %v3899 = vld [vmem:[%s5 + $0x78] sm:$0xff]
      %v3901 = vsel %vm512, %v3896, 0
      %v3904 = vsel %vm512, %v3897, 0
      %v3907 = vsel %vm512, %v3898, 0
      %v3910 = vsel %vm512, %v3899, 0
      %3912 = vmatprep.subr.mxu0 %v3889
      %3913 = vmatpush1.msra.mxu0 %v3888
      %3914 = vmatprep.subr.mxu0 %v3891
      %3915 = vmatpush1.msra.mxu0 %v3890
      %3916 = vmatprep.subr.mxu0 %v3893
      %3917 = vmatpush1.msra.mxu0 %v3892
      %3918 = vmatprep.subr.mxu0 %v3895
      %3919 = vmatpush1.msra.mxu0 %v3894
      %3920 = vmatprep.subr.mxu0 0.0
      %3921 = vmatpush1.msra.mxu0 0.0
      %3922 = vmatprep.subr.mxu0 0.0
      %3923 = vmatpush1.msra.mxu0 0.0
      %3924 = vmatprep.subr.mxu0 0.0
      %3925 = vmatpush1.msra.mxu0 0.0
      %3926 = vmatprep.subr.mxu0 0.0
      %3927 = vmatpush1.msra.mxu0 0.0
      %3928 = vmatprep.subr.mxu0 0.0
      %3929 = vmatpush1.msra.mxu0 0.0
      %3930 = vmatprep.subr.mxu0 0.0
      %3931 = vmatpush1.msra.mxu0 0.0
      %3932 = vmatprep.subr.mxu0 0.0
      %3933 = vmatpush1.msra.mxu0 0.0
      %3934 = vmatprep.subr.mxu0 0.0
      %3935 = vmatpush1.msra.mxu0 0.0
      %3936 = vmatprep.subr.mxu0 0.0
      %3937 = vmatpush1.msra.mxu0 0.0
      %3938 = vmatprep.subr.mxu0 0.0
      %3939 = vmatpush1.msra.mxu0 0.0
      %3940 = vmatprep.subr.mxu0 0.0
      %3941 = vmatpush1.msra.mxu0 0.0
      %3942 = vmatprep.subr.mxu0 0.0
      %3943 = vmatpush1.msra.mxu0 0.0
      %3944 = vmatprep.subr.mxu0 0.0
      %3945 = vmatpush1.msra.mxu0 0.0
      %3946 = vmatprep.subr.mxu0 0.0
      %3947 = vmatpush1.msra.mxu0 0.0
      %3948 = vmatprep.subr.mxu0 0.0
      %3949 = vmatpush1.msra.mxu0 0.0
      %3950 = vmatprep.subr.mxu0 0.0
      %3951 = vmatpush1.msra.mxu0 0.0
      %3952 = vmatprep.subr.mxu0 0.0
      %3953 = vmatpush1.msra.mxu0 0.0
      %3954 = vmatprep.subr.mxu0 0.0
      %3955 = vmatpush1.msra.mxu0 0.0
      %3956 = vmatprep.subr.mxu0 0.0
      %3957 = vmatpush1.msra.mxu0 0.0
      %3958 = vmatprep.subr.mxu0 0.0
      %3959 = vmatpush1.msra.mxu0 0.0
      %3960 = vmatprep.subr.mxu0 0.0
      %3961 = vmatpush1.msra.mxu0 0.0
      %3962 = vmatprep.subr.mxu0 0.0
      %3963 = vmatpush1.msra.mxu0 0.0
      %3964 = vmatprep.subr.mxu0 0.0
      %3965 = vmatpush1.msra.mxu0 0.0
      %3966 = vmatprep.subr.mxu0 0.0
      %3967 = vmatpush1.msra.mxu0 0.0
      %3968 = vmatprep.subr.mxu0 0.0
      %3969 = vmatpush1.msra.mxu0 0.0
      %3970 = vmatprep.subr.mxu0 0.0
      %3971 = vmatpush1.msra.mxu0 0.0
      %3972 = vmatprep.subr.mxu0 0.0
      %3973 = vmatpush1.msra.mxu0 0.0
      %3974 = vmatprep.subr.mxu0 0.0
      %3975 = vmatpush1.msra.mxu0 0.0
      %3976 = vmatprep.mubr.f32.mxu0 0.0
      %3977 = vmatmul.mubr.f32.gmra.mrb[0].mxu0 %v3901
      %v3978 = vpop.f32.mrb[0].mxu0
      %v3979 = vadd.f32 0.0, %v3978
      %v3980 = vpop.f32.mrb[0].mxu0
      %v3981 = vadd.f32 0.0, %v3980
      %3982 = vmatprep.mubr.f32.mxu0 0.0
      %3983 = vmatmul.mubr.f32.gmra.mrb[0].mxu0 %v3904
      %v3984 = vpop.f32.mrb[0].mxu0
      %v3985 = vadd.f32 0.0, %v3984
      %v3986 = vpop.f32.mrb[0].mxu0
      %v3987 = vadd.f32 0.0, %v3986
      %3988 = vmatprep.mubr.f32.mxu0 0.0
      %3989 = vmatmul.mubr.f32.gmra.mrb[0].mxu0 %v3907
      %v3990 = vpop.f32.mrb[0].mxu0
      %v3991 = vadd.f32 0.0, %v3990
      %v3992 = vpop.f32.mrb[0].mxu0
      %v3993 = vadd.f32 0.0, %v3992
      %3994 = vmatprep.mubr.f32.mxu0 0.0
      %3995 = vmatmul.mubr.f32.gmra.mrb[0].mxu0 %v3910
      %v3996 = vpop.f32.mrb[0].mxu0
      %v3997 = vadd.f32 0.0, %v3996
      %v3998 = vpop.f32.mrb[0].mxu0
      %v3999 = vadd.f32 0.0, %v3998
      %4000 = vdwg.mxu0
      %v4001 = vadd.f32 %v3840, %v3979
      %v4002 = vadd.f32 %v3841, %v3981
      %v4003 = vadd.f32 %v3842, %v3985
      %v4004 = vadd.f32 %v3843, %v3987
      %v4005 = vadd.f32 %v3844, %v3991
      %v4006 = vadd.f32 %v3845, %v3993
      %v4007 = vadd.f32 %v3846, %v3997
      %v4008 = vadd.f32 %v3847, %v3999
      %v4009 = vld [vmem:[%s5 + $0x80] sm:$0xff]
      %v4010 = vld [vmem:[%s5 + $0x88] sm:$0xff]
      %v4011 = vld [vmem:[%s5 + $0x90] sm:$0xff]
      %v4012 = vld [vmem:[%s5 + $0x98] sm:$0xff]
      %v4014 = vsel %vm512, %v4009, 0
      %v4017 = vsel %vm512, %v4010, 0
      %v4020 = vsel %vm512, %v4011, 0
      %v4023 = vsel %vm512, %v4012, 0
      %4025 = vmatprep.subr.mxu0 %v3367
      %4026 = vmatpush1.msra.mxu0 %v3366
      %4027 = vmatprep.subr.mxu0 %v3370
      %4028 = vmatpush1.msra.mxu0 %v3369
      %4029 = vmatprep.subr.mxu0 %v3373
      %4030 = vmatpush1.msra.mxu0 %v3372
      %4031 = vmatprep.subr.mxu0 %v3376
      %4032 = vmatpush1.msra.mxu0 %v3375
      %4033 = vmatprep.subr.mxu0 0.0
      %4034 = vmatpush1.msra.mxu0 0.0
      %4035 = vmatprep.subr.mxu0 0.0
      %4036 = vmatpush1.msra.mxu0 0.0
      %4037 = vmatprep.subr.mxu0 0.0
      %4038 = vmatpush1.msra.mxu0 0.0
      %4039 = vmatprep.subr.mxu0 0.0
      %4040 = vmatpush1.msra.mxu0 0.0
      %4041 = vmatprep.subr.mxu0 0.0
      %4042 = vmatpush1.msra.mxu0 0.0
      %4043 = vmatprep.subr.mxu0 0.0
      %4044 = vmatpush1.msra.mxu0 0.0
      %4045 = vmatprep.subr.mxu0 0.0
      %4046 = vmatpush1.msra.mxu0 0.0
      %4047 = vmatprep.subr.mxu0 0.0
      %4048 = vmatpush1.msra.mxu0 0.0
      %4049 = vmatprep.subr.mxu0 0.0
      %4050 = vmatpush1.msra.mxu0 0.0
      %4051 = vmatprep.subr.mxu0 0.0
      %4052 = vmatpush1.msra.mxu0 0.0
      %4053 = vmatprep.subr.mxu0 0.0
      %4054 = vmatpush1.msra.mxu0 0.0
      %4055 = vmatprep.subr.mxu0 0.0
      %4056 = vmatpush1.msra.mxu0 0.0
      %4057 = vmatprep.subr.mxu0 0.0
      %4058 = vmatpush1.msra.mxu0 0.0
      %4059 = vmatprep.subr.mxu0 0.0
      %4060 = vmatpush1.msra.mxu0 0.0
      %4061 = vmatprep.subr.mxu0 0.0
      %4062 = vmatpush1.msra.mxu0 0.0
      %4063 = vmatprep.subr.mxu0 0.0
      %4064 = vmatpush1.msra.mxu0 0.0
      %4065 = vmatprep.subr.mxu0 0.0
      %4066 = vmatpush1.msra.mxu0 0.0
      %4067 = vmatprep.subr.mxu0 0.0
      %4068 = vmatpush1.msra.mxu0 0.0
      %4069 = vmatprep.subr.mxu0 0.0
      %4070 = vmatpush1.msra.mxu0 0.0
      %4071 = vmatprep.subr.mxu0 0.0
      %4072 = vmatpush1.msra.mxu0 0.0
      %4073 = vmatprep.subr.mxu0 0.0
      %4074 = vmatpush1.msra.mxu0 0.0
      %4075 = vmatprep.subr.mxu0 0.0
      %4076 = vmatpush1.msra.mxu0 0.0
      %4077 = vmatprep.subr.mxu0 0.0
      %4078 = vmatpush1.msra.mxu0 0.0
      %4079 = vmatprep.subr.mxu0 0.0
      %4080 = vmatpush1.msra.mxu0 0.0
      %4081 = vmatprep.subr.mxu0 0.0
      %4082 = vmatpush1.msra.mxu0 0.0
      %4083 = vmatprep.subr.mxu0 0.0
      %4084 = vmatpush1.msra.mxu0 0.0
      %4085 = vmatprep.subr.mxu0 0.0
      %4086 = vmatpush1.msra.mxu0 0.0
      %4087 = vmatprep.subr.mxu0 0.0
      %4088 = vmatpush1.msra.mxu0 0.0
      %4089 = vmatprep.mubr.f32.mxu0 0.0
      %4090 = vmatmul.mubr.f32.gmra.mrb[0].mxu0 %v4014
      %v4091 = vpop.f32.mrb[0].mxu0
      %v4092 = vadd.f32 0.0, %v4091
      %v4093 = vpop.f32.mrb[0].mxu0
      %v4094 = vadd.f32 0.0, %v4093
      %4095 = vmatprep.mubr.f32.mxu0 0.0
      %4096 = vmatmul.mubr.f32.gmra.mrb[0].mxu0 %v4017
      %v4097 = vpop.f32.mrb[0].mxu0
      %v4098 = vadd.f32 0.0, %v4097
      %v4099 = vpop.f32.mrb[0].mxu0
      %v4100 = vadd.f32 0.0, %v4099
      %4101 = vmatprep.mubr.f32.mxu0 0.0
      %4102 = vmatmul.mubr.f32.gmra.mrb[0].mxu0 %v4020
      %v4103 = vpop.f32.mrb[0].mxu0
      %v4104 = vadd.f32 0.0, %v4103
      %v4105 = vpop.f32.mrb[0].mxu0
      %v4106 = vadd.f32 0.0, %v4105
      %4107 = vmatprep.mubr.f32.mxu0 0.0
      %4108 = vmatmul.mubr.f32.gmra.mrb[0].mxu0 %v4023
      %v4109 = vpop.f32.mrb[0].mxu0
      %v4110 = vadd.f32 0.0, %v4109
      %v4111 = vpop.f32.mrb[0].mxu0
      %v4112 = vadd.f32 0.0, %v4111
      %4113 = vdwg.mxu0
      %v4114 = vadd.f32 %v4001, %v4092
      %v4115 = vadd.f32 %v4002, %v4094
      %v4116 = vadd.f32 %v4003, %v4098
      %v4117 = vadd.f32 %v4004, %v4100
      %v4118 = vadd.f32 %v4005, %v4104
      %v4119 = vadd.f32 %v4006, %v4106
      %v4120 = vadd.f32 %v4007, %v4110
      %v4121 = vadd.f32 %v4008, %v4112
      %v4122 = vld [vmem:[#allocation2 + $0x8] sm:$0xff]
      %v4123 = vld [vmem:[#allocation2 + $0x10] sm:$0xff]
      %v4124 = vld [vmem:[#allocation2 + $0x18] sm:$0xff]
      %v4125 = vld [vmem:[#allocation2 + $0x28] sm:$0xff]
      %v4126 = vld [vmem:[#allocation2 + $0x30] sm:$0xff]
      %v4127 = vld [vmem:[#allocation2 + $0x38] sm:$0xff]
      %v4128 = vld [vmem:[#allocation2 + $0x48] sm:$0xff]
      %v4129 = vld [vmem:[#allocation2 + $0x50] sm:$0xff]
      %v4130 = vld [vmem:[#allocation2 + $0x58] sm:$0xff]
      %v4131 = vld [vmem:[#allocation2 + $0x68] sm:$0xff]
      %v4132 = vld [vmem:[#allocation2 + $0x70] sm:$0xff]
      %v4133 = vld [vmem:[#allocation2 + $0x78] sm:$0xff]
      %4146 = vrot.lane.b32.xlu0 %v4122, 127
      %v4147 = vpop.permute.xlu0 %4146
      %4148 = vrot.lane.b32.xlu0 %v4123, 127
      %v4149 = vpop.permute.xlu0 %4148
      %4150 = vrot.lane.b32.xlu0 %v4124, 127
      %v4151 = vpop.permute.xlu0 %4150
      %4152 = vrot.lane.b32.xlu0 %v4125, 127
      %v4153 = vpop.permute.xlu0 %4152
      %4154 = vrot.lane.b32.xlu0 %v4126, 127
      %v4155 = vpop.permute.xlu0 %4154
      %4156 = vrot.lane.b32.xlu0 %v4127, 127
      %v4157 = vpop.permute.xlu0 %4156
      %4158 = vrot.lane.b32.xlu0 %v4128, 127
      %v4159 = vpop.permute.xlu0 %4158
      %4160 = vrot.lane.b32.xlu0 %v4129, 127
      %v4161 = vpop.permute.xlu0 %4160
      %4162 = vrot.lane.b32.xlu0 %v4130, 127
      %v4163 = vpop.permute.xlu0 %4162
      %4164 = vrot.lane.b32.xlu0 %v4131, 127
      %v4165 = vpop.permute.xlu0 %4164
      %4166 = vrot.lane.b32.xlu0 %v4132, 127
      %v4167 = vpop.permute.xlu0 %4166
      %4168 = vrot.lane.b32.xlu0 %v4133, 127
      %v4169 = vpop.permute.xlu0 %4168
      %v4170 = vsel %vm1204, %v4147, %v4149
      %v4171 = vsel %vm1204, %v4149, %v4151
      %v4172 = vsel %vm1204, %v4153, %v4155
      %v4173 = vsel %vm1204, %v4155, %v4157
      %v4174 = vsel %vm1204, %v4159, %v4161
      %v4175 = vsel %vm1204, %v4161, %v4163
      %v4176 = vsel %vm1204, %v4165, %v4167
      %v4177 = vsel %vm1204, %v4167, %v4169
      %v4186 = vsel %vm717, %v4170, 0.0
      %v4187 = vsel %vm718, %v4171, 0.0
      %v4188 = vsel %vm717, %v4172, 0.0
      %v4189 = vsel %vm718, %v4173, 0.0
      %v4190 = vsel %vm717, %v4174, 0.0
      %v4191 = vsel %vm718, %v4175, 0.0
      %v4192 = vsel %vm717, %v4176, 0.0
      %v4193 = vsel %vm718, %v4177, 0.0
      %v4194 = vld [vmem:[%s5 + $0xa0] sm:$0xff]
      %v4195 = vld [vmem:[%s5 + $0xa8] sm:$0xff]
      %v4196 = vld [vmem:[%s5 + $0xb0] sm:$0xff]
      %v4197 = vld [vmem:[%s5 + $0xb8] sm:$0xff]
      %v4199 = vsel %vm512, %v4194, 0
      %v4202 = vsel %vm512, %v4195, 0
      %v4205 = vsel %vm512, %v4196, 0
      %v4208 = vsel %vm512, %v4197, 0
      %4210 = vmatprep.subr.mxu0 %v4187
      %4211 = vmatpush1.msra.mxu0 %v4186
      %4212 = vmatprep.subr.mxu0 %v4189
      %4213 = vmatpush1.msra.mxu0 %v4188
      %4214 = vmatprep.subr.mxu0 %v4191
      %4215 = vmatpush1.msra.mxu0 %v4190
      %4216 = vmatprep.subr.mxu0 %v4193
      %4217 = vmatpush1.msra.mxu0 %v4192
      %4218 = vmatprep.subr.mxu0 0.0
      %4219 = vmatpush1.msra.mxu0 0.0
      %4220 = vmatprep.subr.mxu0 0.0
      %4221 = vmatpush1.msra.mxu0 0.0
      %4222 = vmatprep.subr.mxu0 0.0
      %4223 = vmatpush1.msra.mxu0 0.0
      %4224 = vmatprep.subr.mxu0 0.0
      %4225 = vmatpush1.msra.mxu0 0.0
      %4226 = vmatprep.subr.mxu0 0.0
      %4227 = vmatpush1.msra.mxu0 0.0
      %4228 = vmatprep.subr.mxu0 0.0
      %4229 = vmatpush1.msra.mxu0 0.0
      %4230 = vmatprep.subr.mxu0 0.0
      %4231 = vmatpush1.msra.mxu0 0.0
      %4232 = vmatprep.subr.mxu0 0.0
      %4233 = vmatpush1.msra.mxu0 0.0
      %4234 = vmatprep.subr.mxu0 0.0
      %4235 = vmatpush1.msra.mxu0 0.0
      %4236 = vmatprep.subr.mxu0 0.0
      %4237 = vmatpush1.msra.mxu0 0.0
      %4238 = vmatprep.subr.mxu0 0.0
      %4239 = vmatpush1.msra.mxu0 0.0
      %4240 = vmatprep.subr.mxu0 0.0
      %4241 = vmatpush1.msra.mxu0 0.0
      %4242 = vmatprep.subr.mxu0 0.0
      %4243 = vmatpush1.msra.mxu0 0.0
      %4244 = vmatprep.subr.mxu0 0.0
      %4245 = vmatpush1.msra.mxu0 0.0
      %4246 = vmatprep.subr.mxu0 0.0
      %4247 = vmatpush1.msra.mxu0 0.0
      %4248 = vmatprep.subr.mxu0 0.0
      %4249 = vmatpush1.msra.mxu0 0.0
      %4250 = vmatprep.subr.mxu0 0.0
      %4251 = vmatpush1.msra.mxu0 0.0
      %4252 = vmatprep.subr.mxu0 0.0
      %4253 = vmatpush1.msra.mxu0 0.0
      %4254 = vmatprep.subr.mxu0 0.0
      %4255 = vmatpush1.msra.mxu0 0.0
      %4256 = vmatprep.subr.mxu0 0.0
      %4257 = vmatpush1.msra.mxu0 0.0
      %4258 = vmatprep.subr.mxu0 0.0
      %4259 = vmatpush1.msra.mxu0 0.0
      %4260 = vmatprep.subr.mxu0 0.0
      %4261 = vmatpush1.msra.mxu0 0.0
      %4262 = vmatprep.subr.mxu0 0.0
      %4263 = vmatpush1.msra.mxu0 0.0
      %4264 = vmatprep.subr.mxu0 0.0
      %4265 = vmatpush1.msra.mxu0 0.0
      %4266 = vmatprep.subr.mxu0 0.0
      %4267 = vmatpush1.msra.mxu0 0.0
      %4268 = vmatprep.subr.mxu0 0.0
      %4269 = vmatpush1.msra.mxu0 0.0
      %4270 = vmatprep.subr.mxu0 0.0
      %4271 = vmatpush1.msra.mxu0 0.0
      %4272 = vmatprep.subr.mxu0 0.0
      %4273 = vmatpush1.msra.mxu0 0.0
      %4274 = vmatprep.mubr.f32.mxu0 0.0
      %4275 = vmatmul.mubr.f32.gmra.mrb[0].mxu0 %v4199
      %v4276 = vpop.f32.mrb[0].mxu0
      %v4277 = vadd.f32 0.0, %v4276
      %v4278 = vpop.f32.mrb[0].mxu0
      %v4279 = vadd.f32 0.0, %v4278
      %4280 = vmatprep.mubr.f32.mxu0 0.0
      %4281 = vmatmul.mubr.f32.gmra.mrb[0].mxu0 %v4202
      %v4282 = vpop.f32.mrb[0].mxu0
      %v4283 = vadd.f32 0.0, %v4282
      %v4284 = vpop.f32.mrb[0].mxu0
      %v4285 = vadd.f32 0.0, %v4284
      %4286 = vmatprep.mubr.f32.mxu0 0.0
      %4287 = vmatmul.mubr.f32.gmra.mrb[0].mxu0 %v4205
      %v4288 = vpop.f32.mrb[0].mxu0
      %v4289 = vadd.f32 0.0, %v4288
      %v4290 = vpop.f32.mrb[0].mxu0
      %v4291 = vadd.f32 0.0, %v4290
      %4292 = vmatprep.mubr.f32.mxu0 0.0
      %4293 = vmatmul.mubr.f32.gmra.mrb[0].mxu0 %v4208
      %v4294 = vpop.f32.mrb[0].mxu0
      %v4295 = vadd.f32 0.0, %v4294
      %v4296 = vpop.f32.mrb[0].mxu0
      %v4297 = vadd.f32 0.0, %v4296
      %4298 = vdwg.mxu0
      %v4299 = vadd.f32 %v4114, %v4277
      %v4300 = vadd.f32 %v4115, %v4279
      %v4301 = vadd.f32 %v4116, %v4283
      %v4302 = vadd.f32 %v4117, %v4285
      %v4303 = vadd.f32 %v4118, %v4289
      %v4304 = vadd.f32 %v4119, %v4291
      %v4305 = vadd.f32 %v4120, %v4295
      %v4306 = vadd.f32 %v4121, %v4297
      %4307 = vrot.lane.b32.xlu0 %v4122, 113
      %v4308 = vpop.permute.xlu0 %4307
      %4309 = vrot.lane.b32.xlu0 %v4123, 113
      %v4310 = vpop.permute.xlu0 %4309
      %4311 = vrot.lane.b32.xlu0 %v4124, 113
      %v4312 = vpop.permute.xlu0 %4311
      %4313 = vrot.lane.b32.xlu0 %v4125, 113
      %v4314 = vpop.permute.xlu0 %4313
      %4315 = vrot.lane.b32.xlu0 %v4126, 113
      %v4316 = vpop.permute.xlu0 %4315
      %4317 = vrot.lane.b32.xlu0 %v4127, 113
      %v4318 = vpop.permute.xlu0 %4317
      %4319 = vrot.lane.b32.xlu0 %v4128, 113
      %v4320 = vpop.permute.xlu0 %4319
      %4321 = vrot.lane.b32.xlu0 %v4129, 113
      %v4322 = vpop.permute.xlu0 %4321
      %4323 = vrot.lane.b32.xlu0 %v4130, 113
      %v4324 = vpop.permute.xlu0 %4323
      %4325 = vrot.lane.b32.xlu0 %v4131, 113
      %v4326 = vpop.permute.xlu0 %4325
      %4327 = vrot.lane.b32.xlu0 %v4132, 113
      %v4328 = vpop.permute.xlu0 %4327
      %4329 = vrot.lane.b32.xlu0 %v4133, 113
      %v4330 = vpop.permute.xlu0 %4329
      %v4331 = vsel %vm1366, %v4308, %v4310
      %v4332 = vsel %vm1366, %v4310, %v4312
      %v4333 = vsel %vm1366, %v4314, %v4316
      %v4334 = vsel %vm1366, %v4316, %v4318
      %v4335 = vsel %vm1366, %v4320, %v4322
      %v4336 = vsel %vm1366, %v4322, %v4324
      %v4337 = vsel %vm1366, %v4326, %v4328
      %v4338 = vsel %vm1366, %v4328, %v4330
      %v4347 = vsel %vm401, %v4331, 0.0
      %v4348 = vsel %vm402, %v4332, 0.0
      %v4349 = vsel %vm401, %v4333, 0.0
      %v4350 = vsel %vm402, %v4334, 0.0
      %v4351 = vsel %vm401, %v4335, 0.0
      %v4352 = vsel %vm402, %v4336, 0.0
      %v4353 = vsel %vm401, %v4337, 0.0
      %v4354 = vsel %vm402, %v4338, 0.0
      %v4355 = vld [vmem:[%s5 + $0xc0] sm:$0xff]
      %v4356 = vld [vmem:[%s5 + $0xc8] sm:$0xff]
      %v4357 = vld [vmem:[%s5 + $0xd0] sm:$0xff]
      %v4358 = vld [vmem:[%s5 + $0xd8] sm:$0xff]
      %v4360 = vsel %vm512, %v4355, 0
      %v4363 = vsel %vm512, %v4356, 0
      %v4366 = vsel %vm512, %v4357, 0
      %v4369 = vsel %vm512, %v4358, 0
      %4371 = vmatprep.subr.mxu0 %v4348
      %4372 = vmatpush1.msra.mxu0 %v4347
      %4373 = vmatprep.subr.mxu0 %v4350
      %4374 = vmatpush1.msra.mxu0 %v4349
      %4375 = vmatprep.subr.mxu0 %v4352
      %4376 = vmatpush1.msra.mxu0 %v4351
      %4377 = vmatprep.subr.mxu0 %v4354
      %4378 = vmatpush1.msra.mxu0 %v4353
      %4379 = vmatprep.subr.mxu0 0.0
      %4380 = vmatpush1.msra.mxu0 0.0
      %4381 = vmatprep.subr.mxu0 0.0
      %4382 = vmatpush1.msra.mxu0 0.0
      %4383 = vmatprep.subr.mxu0 0.0
      %4384 = vmatpush1.msra.mxu0 0.0
      %4385 = vmatprep.subr.mxu0 0.0
      %4386 = vmatpush1.msra.mxu0 0.0
      %4387 = vmatprep.subr.mxu0 0.0
      %4388 = vmatpush1.msra.mxu0 0.0
      %4389 = vmatprep.subr.mxu0 0.0
      %4390 = vmatpush1.msra.mxu0 0.0
      %4391 = vmatprep.subr.mxu0 0.0
      %4392 = vmatpush1.msra.mxu0 0.0
      %4393 = vmatprep.subr.mxu0 0.0
      %4394 = vmatpush1.msra.mxu0 0.0
      %4395 = vmatprep.subr.mxu0 0.0
      %4396 = vmatpush1.msra.mxu0 0.0
      %4397 = vmatprep.subr.mxu0 0.0
      %4398 = vmatpush1.msra.mxu0 0.0
      %4399 = vmatprep.subr.mxu0 0.0
      %4400 = vmatpush1.msra.mxu0 0.0
      %4401 = vmatprep.subr.mxu0 0.0
      %4402 = vmatpush1.msra.mxu0 0.0
      %4403 = vmatprep.subr.mxu0 0.0
      %4404 = vmatpush1.msra.mxu0 0.0
      %4405 = vmatprep.subr.mxu0 0.0
      %4406 = vmatpush1.msra.mxu0 0.0
      %4407 = vmatprep.subr.mxu0 0.0
      %4408 = vmatpush1.msra.mxu0 0.0
      %4409 = vmatprep.subr.mxu0 0.0
      %4410 = vmatpush1.msra.mxu0 0.0
      %4411 = vmatprep.subr.mxu0 0.0
      %4412 = vmatpush1.msra.mxu0 0.0
      %4413 = vmatprep.subr.mxu0 0.0
      %4414 = vmatpush1.msra.mxu0 0.0
      %4415 = vmatprep.subr.mxu0 0.0
      %4416 = vmatpush1.msra.mxu0 0.0
      %4417 = vmatprep.subr.mxu0 0.0
      %4418 = vmatpush1.msra.mxu0 0.0
      %4419 = vmatprep.subr.mxu0 0.0
      %4420 = vmatpush1.msra.mxu0 0.0
      %4421 = vmatprep.subr.mxu0 0.0
      %4422 = vmatpush1.msra.mxu0 0.0
      %4423 = vmatprep.subr.mxu0 0.0
      %4424 = vmatpush1.msra.mxu0 0.0
      %4425 = vmatprep.subr.mxu0 0.0
      %4426 = vmatpush1.msra.mxu0 0.0
      %4427 = vmatprep.subr.mxu0 0.0
      %4428 = vmatpush1.msra.mxu0 0.0
      %4429 = vmatprep.subr.mxu0 0.0
      %4430 = vmatpush1.msra.mxu0 0.0
      %4431 = vmatprep.subr.mxu0 0.0
      %4432 = vmatpush1.msra.mxu0 0.0
      %4433 = vmatprep.subr.mxu0 0.0
      %4434 = vmatpush1.msra.mxu0 0.0
      %4435 = vmatprep.mubr.f32.mxu0 0.0
      %4436 = vmatmul.mubr.f32.gmra.mrb[0].mxu0 %v4360
      %v4437 = vpop.f32.mrb[0].mxu0
      %v4438 = vadd.f32 0.0, %v4437
      %v4439 = vpop.f32.mrb[0].mxu0
      %v4440 = vadd.f32 0.0, %v4439
      %4441 = vmatprep.mubr.f32.mxu0 0.0
      %4442 = vmatmul.mubr.f32.gmra.mrb[0].mxu0 %v4363
      %v4443 = vpop.f32.mrb[0].mxu0
      %v4444 = vadd.f32 0.0, %v4443
      %v4445 = vpop.f32.mrb[0].mxu0
      %v4446 = vadd.f32 0.0, %v4445
      %4447 = vmatprep.mubr.f32.mxu0 0.0
      %4448 = vmatmul.mubr.f32.gmra.mrb[0].mxu0 %v4366
      %v4449 = vpop.f32.mrb[0].mxu0
      %v4450 = vadd.f32 0.0, %v4449
      %v4451 = vpop.f32.mrb[0].mxu0
      %v4452 = vadd.f32 0.0, %v4451
      %4453 = vmatprep.mubr.f32.mxu0 0.0
      %4454 = vmatmul.mubr.f32.gmra.mrb[0].mxu0 %v4369
      %v4455 = vpop.f32.mrb[0].mxu0
      %v4456 = vadd.f32 0.0, %v4455
      %v4457 = vpop.f32.mrb[0].mxu0
      %v4458 = vadd.f32 0.0, %v4457
      %4459 = vdwg.mxu0
      %v4460 = vadd.f32 %v4299, %v4438
      %v4461 = vadd.f32 %v4300, %v4440
      %v4462 = vadd.f32 %v4301, %v4444
      %v4463 = vadd.f32 %v4302, %v4446
      %v4464 = vadd.f32 %v4303, %v4450
      %v4465 = vadd.f32 %v4304, %v4452
      %v4466 = vadd.f32 %v4305, %v4456
      %v4467 = vadd.f32 %v4306, %v4458
      %v4468 = vld [vmem:[%s5 + $0xe0] sm:$0xff]
      %v4469 = vld [vmem:[%s5 + $0xe8] sm:$0xff]
      %v4470 = vld [vmem:[%s5 + $0xf0] sm:$0xff]
      %v4471 = vld [vmem:[%s5 + $0xf8] sm:$0xff]
      %4472 = vrot.lane.b32.xlu0 %v4122, 112
      %v4473 = vpop.permute.xlu0 %4472
      %4474 = vrot.lane.b32.xlu0 %v4123, 112
      %v4475 = vpop.permute.xlu0 %4474
      %4476 = vrot.lane.b32.xlu0 %v4124, 112
      %v4477 = vpop.permute.xlu0 %4476
      %4478 = vrot.lane.b32.xlu0 %v4125, 112
      %v4479 = vpop.permute.xlu0 %4478
      %4480 = vrot.lane.b32.xlu0 %v4126, 112
      %v4481 = vpop.permute.xlu0 %4480
      %4482 = vrot.lane.b32.xlu0 %v4127, 112
      %v4483 = vpop.permute.xlu0 %4482
      %4484 = vrot.lane.b32.xlu0 %v4128, 112
      %v4485 = vpop.permute.xlu0 %4484
      %4486 = vrot.lane.b32.xlu0 %v4129, 112
      %v4487 = vpop.permute.xlu0 %4486
      %4488 = vrot.lane.b32.xlu0 %v4130, 112
      %v4489 = vpop.permute.xlu0 %4488
      %4490 = vrot.lane.b32.xlu0 %v4131, 112
      %v4491 = vpop.permute.xlu0 %4490
      %4492 = vrot.lane.b32.xlu0 %v4132, 112
      %v4493 = vpop.permute.xlu0 %4492
      %4494 = vrot.lane.b32.xlu0 %v4133, 112
      %v4495 = vpop.permute.xlu0 %4494
      %v4496 = vsel %vm1532, %v4473, %v4475
      %v4497 = vsel %vm1532, %v4475, %v4477
      %v4498 = vsel %vm1532, %v4479, %v4481
      %v4499 = vsel %vm1532, %v4481, %v4483
      %v4500 = vsel %vm1532, %v4485, %v4487
      %v4501 = vsel %vm1532, %v4487, %v4489
      %v4502 = vsel %vm1532, %v4491, %v4493
      %v4503 = vsel %vm1532, %v4493, %v4495
      %v4513 = vsel %vm512, %v4468, 0
      %v4516 = vsel %vm512, %v4469, 0
      %v4519 = vsel %vm512, %v4470, 0
      %v4522 = vsel %vm512, %v4471, 0
      %4524 = vmatprep.subr.mxu0 %v4497
      %4525 = vmatpush1.msra.mxu0 %v4496
      %4526 = vmatprep.subr.mxu0 %v4499
      %4527 = vmatpush1.msra.mxu0 %v4498
      %4528 = vmatprep.subr.mxu0 %v4501
      %4529 = vmatpush1.msra.mxu0 %v4500
      %4530 = vmatprep.subr.mxu0 %v4503
      %4531 = vmatpush1.msra.mxu0 %v4502
      %4532 = vmatprep.subr.mxu0 0.0
      %4533 = vmatpush1.msra.mxu0 0.0
      %4534 = vmatprep.subr.mxu0 0.0
      %4535 = vmatpush1.msra.mxu0 0.0
      %4536 = vmatprep.subr.mxu0 0.0
      %4537 = vmatpush1.msra.mxu0 0.0
      %4538 = vmatprep.subr.mxu0 0.0
      %4539 = vmatpush1.msra.mxu0 0.0
      %4540 = vmatprep.subr.mxu0 0.0
      %4541 = vmatpush1.msra.mxu0 0.0
      %4542 = vmatprep.subr.mxu0 0.0
      %4543 = vmatpush1.msra.mxu0 0.0
      %4544 = vmatprep.subr.mxu0 0.0
      %4545 = vmatpush1.msra.mxu0 0.0
      %4546 = vmatprep.subr.mxu0 0.0
      %4547 = vmatpush1.msra.mxu0 0.0
      %4548 = vmatprep.subr.mxu0 0.0
      %4549 = vmatpush1.msra.mxu0 0.0
      %4550 = vmatprep.subr.mxu0 0.0
      %4551 = vmatpush1.msra.mxu0 0.0
      %4552 = vmatprep.subr.mxu0 0.0
      %4553 = vmatpush1.msra.mxu0 0.0
      %4554 = vmatprep.subr.mxu0 0.0
      %4555 = vmatpush1.msra.mxu0 0.0
      %4556 = vmatprep.subr.mxu0 0.0
      %4557 = vmatpush1.msra.mxu0 0.0
      %4558 = vmatprep.subr.mxu0 0.0
      %4559 = vmatpush1.msra.mxu0 0.0
      %4560 = vmatprep.subr.mxu0 0.0
      %4561 = vmatpush1.msra.mxu0 0.0
      %4562 = vmatprep.subr.mxu0 0.0
      %4563 = vmatpush1.msra.mxu0 0.0
      %4564 = vmatprep.subr.mxu0 0.0
      %4565 = vmatpush1.msra.mxu0 0.0
      %4566 = vmatprep.subr.mxu0 0.0
      %4567 = vmatpush1.msra.mxu0 0.0
      %4568 = vmatprep.subr.mxu0 0.0
      %4569 = vmatpush1.msra.mxu0 0.0
      %4570 = vmatprep.subr.mxu0 0.0
      %4571 = vmatpush1.msra.mxu0 0.0
      %4572 = vmatprep.subr.mxu0 0.0
      %4573 = vmatpush1.msra.mxu0 0.0
      %4574 = vmatprep.subr.mxu0 0.0
      %4575 = vmatpush1.msra.mxu0 0.0
      %4576 = vmatprep.subr.mxu0 0.0
      %4577 = vmatpush1.msra.mxu0 0.0
      %4578 = vmatprep.subr.mxu0 0.0
      %4579 = vmatpush1.msra.mxu0 0.0
      %4580 = vmatprep.subr.mxu0 0.0
      %4581 = vmatpush1.msra.mxu0 0.0
      %4582 = vmatprep.subr.mxu0 0.0
      %4583 = vmatpush1.msra.mxu0 0.0
      %4584 = vmatprep.subr.mxu0 0.0
      %4585 = vmatpush1.msra.mxu0 0.0
      %4586 = vmatprep.subr.mxu0 0.0
      %4587 = vmatpush1.msra.mxu0 0.0
      %4588 = vmatprep.mubr.f32.mxu0 0.0
      %4589 = vmatmul.mubr.f32.gmra.mrb[0].mxu0 %v4513
      %v4590 = vpop.f32.mrb[0].mxu0
      %v4591 = vadd.f32 0.0, %v4590
      %v4592 = vpop.f32.mrb[0].mxu0
      %v4593 = vadd.f32 0.0, %v4592
      %4594 = vmatprep.mubr.f32.mxu0 0.0
      %4595 = vmatmul.mubr.f32.gmra.mrb[0].mxu0 %v4516
      %v4596 = vpop.f32.mrb[0].mxu0
      %v4597 = vadd.f32 0.0, %v4596
      %v4598 = vpop.f32.mrb[0].mxu0
      %v4599 = vadd.f32 0.0, %v4598
      %4600 = vmatprep.mubr.f32.mxu0 0.0
      %4601 = vmatmul.mubr.f32.gmra.mrb[0].mxu0 %v4519
      %v4602 = vpop.f32.mrb[0].mxu0
      %v4603 = vadd.f32 0.0, %v4602
      %v4604 = vpop.f32.mrb[0].mxu0
      %v4605 = vadd.f32 0.0, %v4604
      %4606 = vmatprep.mubr.f32.mxu0 0.0
      %4607 = vmatmul.mubr.f32.gmra.mrb[0].mxu0 %v4522
      %v4608 = vpop.f32.mrb[0].mxu0
      %v4609 = vadd.f32 0.0, %v4608
      %v4610 = vpop.f32.mrb[0].mxu0
      %v4611 = vadd.f32 0.0, %v4610
      %4612 = vdwg.mxu0
      %v4613 = vadd.f32 %v4460, %v4591
      %v4614 = vadd.f32 %v4461, %v4593
      %v4615 = vadd.f32 %v4462, %v4597
      %v4616 = vadd.f32 %v4463, %v4599
      %v4617 = vadd.f32 %v4464, %v4603
      %v4618 = vadd.f32 %v4465, %v4605
      %v4619 = vadd.f32 %v4466, %v4609
      %v4620 = vadd.f32 %v4467, %v4611
      %4621 = vrot.lane.b32.xlu0 %v4122, 111
      %v4622 = vpop.permute.xlu0 %4621
      %4623 = vrot.lane.b32.xlu0 %v4123, 111
      %v4624 = vpop.permute.xlu0 %4623
      %4625 = vrot.lane.b32.xlu0 %v4124, 111
      %v4626 = vpop.permute.xlu0 %4625
      %4627 = vrot.lane.b32.xlu0 %v4125, 111
      %v4628 = vpop.permute.xlu0 %4627
      %4629 = vrot.lane.b32.xlu0 %v4126, 111
      %v4630 = vpop.permute.xlu0 %4629
      %4631 = vrot.lane.b32.xlu0 %v4127, 111
      %v4632 = vpop.permute.xlu0 %4631
      %4633 = vrot.lane.b32.xlu0 %v4128, 111
      %v4634 = vpop.permute.xlu0 %4633
      %4635 = vrot.lane.b32.xlu0 %v4129, 111
      %v4636 = vpop.permute.xlu0 %4635
      %4637 = vrot.lane.b32.xlu0 %v4130, 111
      %v4638 = vpop.permute.xlu0 %4637
      %4639 = vrot.lane.b32.xlu0 %v4131, 111
      %v4640 = vpop.permute.xlu0 %4639
      %4641 = vrot.lane.b32.xlu0 %v4132, 111
      %v4642 = vpop.permute.xlu0 %4641
      %4643 = vrot.lane.b32.xlu0 %v4133, 111
      %v4644 = vpop.permute.xlu0 %4643
      %v4645 = vsel %vm1682, %v4622, %v4624
      %v4646 = vsel %vm1682, %v4624, %v4626
      %v4647 = vsel %vm1682, %v4628, %v4630
      %v4648 = vsel %vm1682, %v4630, %v4632
      %v4649 = vsel %vm1682, %v4634, %v4636
      %v4650 = vsel %vm1682, %v4636, %v4638
      %v4651 = vsel %vm1682, %v4640, %v4642
      %v4652 = vsel %vm1682, %v4642, %v4644
      %v4661 = vsel %vm717, %v4645, 0.0
      %v4662 = vsel %vm718, %v4646, 0.0
      %v4663 = vsel %vm717, %v4647, 0.0
      %v4664 = vsel %vm718, %v4648, 0.0
      %v4665 = vsel %vm717, %v4649, 0.0
      %v4666 = vsel %vm718, %v4650, 0.0
      %v4667 = vsel %vm717, %v4651, 0.0
      %v4668 = vsel %vm718, %v4652, 0.0
      %v4669 = vld [vmem:[%s5 + $0x100] sm:$0xff]
      %v4670 = vld [vmem:[%s5 + $0x108] sm:$0xff]
      %v4671 = vld [vmem:[%s5 + $0x110] sm:$0xff]
      %v4672 = vld [vmem:[%s5 + $0x118] sm:$0xff]
      %v4674 = vsel %vm512, %v4669, 0
      %v4677 = vsel %vm512, %v4670, 0
      %v4680 = vsel %vm512, %v4671, 0
      %v4683 = vsel %vm512, %v4672, 0
      %4685 = vmatprep.subr.mxu0 %v4662
      %4686 = vmatpush1.msra.mxu0 %v4661
      %4687 = vmatprep.subr.mxu0 %v4664
      %4688 = vmatpush1.msra.mxu0 %v4663
      %4689 = vmatprep.subr.mxu0 %v4666
      %4690 = vmatpush1.msra.mxu0 %v4665
      %4691 = vmatprep.subr.mxu0 %v4668
      %4692 = vmatpush1.msra.mxu0 %v4667
      %4693 = vmatprep.subr.mxu0 0.0
      %4694 = vmatpush1.msra.mxu0 0.0
      %4695 = vmatprep.subr.mxu0 0.0
      %4696 = vmatpush1.msra.mxu0 0.0
      %4697 = vmatprep.subr.mxu0 0.0
      %4698 = vmatpush1.msra.mxu0 0.0
      %4699 = vmatprep.subr.mxu0 0.0
      %4700 = vmatpush1.msra.mxu0 0.0
      %4701 = vmatprep.subr.mxu0 0.0
      %4702 = vmatpush1.msra.mxu0 0.0
      %4703 = vmatprep.subr.mxu0 0.0
      %4704 = vmatpush1.msra.mxu0 0.0
      %4705 = vmatprep.subr.mxu0 0.0
      %4706 = vmatpush1.msra.mxu0 0.0
      %4707 = vmatprep.subr.mxu0 0.0
      %4708 = vmatpush1.msra.mxu0 0.0
      %4709 = vmatprep.subr.mxu0 0.0
      %4710 = vmatpush1.msra.mxu0 0.0
      %4711 = vmatprep.subr.mxu0 0.0
      %4712 = vmatpush1.msra.mxu0 0.0
      %4713 = vmatprep.subr.mxu0 0.0
      %4714 = vmatpush1.msra.mxu0 0.0
      %4715 = vmatprep.subr.mxu0 0.0
      %4716 = vmatpush1.msra.mxu0 0.0
      %4717 = vmatprep.subr.mxu0 0.0
      %4718 = vmatpush1.msra.mxu0 0.0
      %4719 = vmatprep.subr.mxu0 0.0
      %4720 = vmatpush1.msra.mxu0 0.0
      %4721 = vmatprep.subr.mxu0 0.0
      %4722 = vmatpush1.msra.mxu0 0.0
      %4723 = vmatprep.subr.mxu0 0.0
      %4724 = vmatpush1.msra.mxu0 0.0
      %4725 = vmatprep.subr.mxu0 0.0
      %4726 = vmatpush1.msra.mxu0 0.0
      %4727 = vmatprep.subr.mxu0 0.0
      %4728 = vmatpush1.msra.mxu0 0.0
      %4729 = vmatprep.subr.mxu0 0.0
      %4730 = vmatpush1.msra.mxu0 0.0
      %4731 = vmatprep.subr.mxu0 0.0
      %4732 = vmatpush1.msra.mxu0 0.0
      %4733 = vmatprep.subr.mxu0 0.0
      %4734 = vmatpush1.msra.mxu0 0.0
      %4735 = vmatprep.subr.mxu0 0.0
      %4736 = vmatpush1.msra.mxu0 0.0
      %4737 = vmatprep.subr.mxu0 0.0
      %4738 = vmatpush1.msra.mxu0 0.0
      %4739 = vmatprep.subr.mxu0 0.0
      %4740 = vmatpush1.msra.mxu0 0.0
      %4741 = vmatprep.subr.mxu0 0.0
      %4742 = vmatpush1.msra.mxu0 0.0
      %4743 = vmatprep.subr.mxu0 0.0
      %4744 = vmatpush1.msra.mxu0 0.0
      %4745 = vmatprep.subr.mxu0 0.0
      %4746 = vmatpush1.msra.mxu0 0.0
      %4747 = vmatprep.subr.mxu0 0.0
      %4748 = vmatpush1.msra.mxu0 0.0
      %4749 = vmatprep.mubr.f32.mxu0 0.0
      %4750 = vmatmul.mubr.f32.gmra.mrb[0].mxu0 %v4674
      %v4751 = vpop.f32.mrb[0].mxu0
      %v4752 = vadd.f32 0.0, %v4751
      %v4753 = vpop.f32.mrb[0].mxu0
      %v4754 = vadd.f32 0.0, %v4753
      %4755 = vmatprep.mubr.f32.mxu0 0.0
      %4756 = vmatmul.mubr.f32.gmra.mrb[0].mxu0 %v4677
      %v4757 = vpop.f32.mrb[0].mxu0
      %v4758 = vadd.f32 0.0, %v4757
      %v4759 = vpop.f32.mrb[0].mxu0
      %v4760 = vadd.f32 0.0, %v4759
      %4761 = vmatprep.mubr.f32.mxu0 0.0
      %4762 = vmatmul.mubr.f32.gmra.mrb[0].mxu0 %v4680
      %v4763 = vpop.f32.mrb[0].mxu0
      %v4764 = vadd.f32 0.0, %v4763
      %v4765 = vpop.f32.mrb[0].mxu0
      %v4766 = vadd.f32 0.0, %v4765
      %4767 = vmatprep.mubr.f32.mxu0 0.0
      %4768 = vmatmul.mubr.f32.gmra.mrb[0].mxu0 %v4683
      %v4769 = vpop.f32.mrb[0].mxu0
      %v4770 = vadd.f32 0.0, %v4769
      %v4771 = vpop.f32.mrb[0].mxu0
      %v4772 = vadd.f32 0.0, %v4771
      %4773 = vdwg.mxu0
      %v4774 = vadd.f32 %v4613, %v4752
      %v4775 = vadd.f32 %v4614, %v4754
      %v4776 = vadd.f32 %v4615, %v4758
      %v4777 = vadd.f32 %v4616, %v4760
      %v4778 = vadd.f32 %v4617, %v4764
      %v4779 = vadd.f32 %v4618, %v4766
      %v4780 = vadd.f32 %v4619, %v4770
      %v4781 = vadd.f32 %v4620, %v4772
      %v4782 = vld [vmem:[%s6] sm:$0xff]
      %v4783 = vld [vmem:[%s6 + $0x8] sm:$0xff]
      %v4784 = vld [vmem:[%s6 + $0x10] sm:$0xff]
      %v4785 = vld [vmem:[%s6 + $0x18] sm:$0xff]
      %4787 = vset.pattern.permute.xlu0 0
      %4788 = vperm.xlu0 %4787, %v4782
      %v4789 = vpop.permute.xlu0 %4788
      %4792 = vset.pattern.permute.xlu0 0
      %4793 = vperm.xlu0 %4792, %v4783
      %v4794 = vpop.permute.xlu0 %4793
      %4797 = vset.pattern.permute.xlu0 0
      %4798 = vperm.xlu0 %4797, %v4784
      %v4799 = vpop.permute.xlu0 %4798
      %4802 = vset.pattern.permute.xlu0 0
      %4803 = vperm.xlu0 %4802, %v4785
      %v4804 = vpop.permute.xlu0 %4803
      %v4806 = vadd.f32 %v4774, %v4789
      %v4807 = vadd.f32 %v4775, %v4789
      %v4808 = vadd.f32 %v4776, %v4794
      %v4809 = vadd.f32 %v4777, %v4794
      %v4810 = vadd.f32 %v4778, %v4799
      %v4811 = vadd.f32 %v4779, %v4799
      %v4812 = vadd.f32 %v4780, %v4804
      %v4813 = vadd.f32 %v4781, %v4804
      %vm4814 = vcmp.gt.f32.partialorder %v4806, 0.0
      %vm4815 = vcmp.gt.f32.partialorder %v4807, 0.0
      %vm4816 = vcmp.gt.f32.partialorder %v4808, 0.0
      %vm4817 = vcmp.gt.f32.partialorder %v4809, 0.0
      %vm4818 = vcmp.gt.f32.partialorder %v4810, 0.0
      %vm4819 = vcmp.gt.f32.partialorder %v4811, 0.0
      %vm4820 = vcmp.gt.f32.partialorder %v4812, 0.0
      %vm4821 = vcmp.gt.f32.partialorder %v4813, 0.0
      %v4822 = vmul.f32 %v4806, 0.2
      %v4823 = vmul.f32 %v4807, 0.2
      %v4824 = vmul.f32 %v4808, 0.2
      %v4825 = vmul.f32 %v4809, 0.2
      %v4826 = vmul.f32 %v4810, 0.2
      %v4827 = vmul.f32 %v4811, 0.2
      %v4828 = vmul.f32 %v4812, 0.2
      %v4829 = vmul.f32 %v4813, 0.2
      %v4830 = vsel %vm4814, %v4806, %v4822
      %v4831 = vsel %vm4815, %v4807, %v4823
      %v4832 = vsel %vm4816, %v4808, %v4824
      %v4833 = vsel %vm4817, %v4809, %v4825
      %v4834 = vsel %vm4818, %v4810, %v4826
      %v4835 = vsel %vm4819, %v4811, %v4827
      %v4836 = vsel %vm4820, %v4812, %v4828
      %v4837 = vsel %vm4821, %v4813, %v4829
      %4838 = vst [vmem:[#allocation2 + $0x8] sm:$0xff] %v4830
      %4839 = vst [vmem:[#allocation2 + $0x10] sm:$0xff] %v4831
      %4840 = vst [vmem:[#allocation2 + $0x28] sm:$0xff] %v4832
      %4841 = vst [vmem:[#allocation2 + $0x30] sm:$0xff] %v4833
      %4842 = vst [vmem:[#allocation2 + $0x48] sm:$0xff] %v4834
      %4843 = vst [vmem:[#allocation2 + $0x50] sm:$0xff] %v4835
      %4844 = vst [vmem:[#allocation2 + $0x68] sm:$0xff] %v4836
      %4845 = vst [vmem:[#allocation2 + $0x70] sm:$0xff] %v4837
      %v4846 = vld [vmem:[#allocation2] sm:$0xff]
      %v4847 = vld [vmem:[#allocation2 + $0x8] sm:$0xff]
      %v4848 = vld [vmem:[#allocation2 + $0x10] sm:$0xff]
      %v4849 = vld [vmem:[#allocation2 + $0x20] sm:$0xff]
      %v4850 = vld [vmem:[#allocation2 + $0x28] sm:$0xff]
      %v4851 = vld [vmem:[#allocation2 + $0x30] sm:$0xff]
      %v4852 = vld [vmem:[#allocation2 + $0x40] sm:$0xff]
      %v4853 = vld [vmem:[#allocation2 + $0x48] sm:$0xff]
      %v4854 = vld [vmem:[#allocation2 + $0x50] sm:$0xff]
      %v4855 = vld [vmem:[#allocation2 + $0x60] sm:$0xff]
      %v4856 = vld [vmem:[#allocation2 + $0x68] sm:$0xff]
      %v4857 = vld [vmem:[#allocation2 + $0x70] sm:$0xff]
      %4870 = vrot.lane.b32.xlu0 %v4846, 17
      %v4871 = vpop.permute.xlu0 %4870
      %4872 = vrot.lane.b32.xlu0 %v4847, 17
      %v4873 = vpop.permute.xlu0 %4872
      %4874 = vrot.lane.b32.xlu0 %v4848, 17
      %v4875 = vpop.permute.xlu0 %4874
      %4876 = vrot.lane.b32.xlu0 %v4849, 17
      %v4877 = vpop.permute.xlu0 %4876
      %4878 = vrot.lane.b32.xlu0 %v4850, 17
      %v4879 = vpop.permute.xlu0 %4878
      %4880 = vrot.lane.b32.xlu0 %v4851, 17
      %v4881 = vpop.permute.xlu0 %4880
      %4882 = vrot.lane.b32.xlu0 %v4852, 17
      %v4883 = vpop.permute.xlu0 %4882
      %4884 = vrot.lane.b32.xlu0 %v4853, 17
      %v4885 = vpop.permute.xlu0 %4884
      %4886 = vrot.lane.b32.xlu0 %v4854, 17
      %v4887 = vpop.permute.xlu0 %4886
      %4888 = vrot.lane.b32.xlu0 %v4855, 17
      %v4889 = vpop.permute.xlu0 %4888
      %4890 = vrot.lane.b32.xlu0 %v4856, 17
      %v4891 = vpop.permute.xlu0 %4890
      %4892 = vrot.lane.b32.xlu0 %v4857, 17
      %v4893 = vpop.permute.xlu0 %4892
      %v4894 = vsel %vm335, %v4871, %v4873
      %v4895 = vsel %vm335, %v4873, %v4875
      %v4896 = vsel %vm335, %v4877, %v4879
      %v4897 = vsel %vm335, %v4879, %v4881
      %v4898 = vsel %vm335, %v4883, %v4885
      %v4899 = vsel %vm335, %v4885, %v4887
      %v4900 = vsel %vm335, %v4889, %v4891
      %v4901 = vsel %vm335, %v4891, %v4893
      %v4910 = vsel %vm401, %v4894, 0.0
      %v4911 = vsel %vm402, %v4895, 0.0
      %v4912 = vsel %vm401, %v4896, 0.0
      %v4913 = vsel %vm402, %v4897, 0.0
      %v4914 = vsel %vm401, %v4898, 0.0
      %v4915 = vsel %vm402, %v4899, 0.0
      %v4916 = vsel %vm401, %v4900, 0.0
      %v4917 = vsel %vm402, %v4901, 0.0
      %v4918 = vld [vmem:[%s7] sm:$0xff]
      %v4919 = vld [vmem:[%s7 + $0x8] sm:$0xff]
      %4920 = vrot.lane.b32.xlu0 %v4846, 16
      %v4921 = vpop.permute.xlu0 %4920
      %4922 = vrot.lane.b32.xlu0 %v4847, 16
      %v4923 = vpop.permute.xlu0 %4922
      %4924 = vrot.lane.b32.xlu0 %v4848, 16
      %v4925 = vpop.permute.xlu0 %4924
      %4926 = vrot.lane.b32.xlu0 %v4849, 16
      %v4927 = vpop.permute.xlu0 %4926
      %4928 = vrot.lane.b32.xlu0 %v4850, 16
      %v4929 = vpop.permute.xlu0 %4928
      %4930 = vrot.lane.b32.xlu0 %v4851, 16
      %v4931 = vpop.permute.xlu0 %4930
      %4932 = vrot.lane.b32.xlu0 %v4852, 16
      %v4933 = vpop.permute.xlu0 %4932
      %4934 = vrot.lane.b32.xlu0 %v4853, 16
      %v4935 = vpop.permute.xlu0 %4934
      %4936 = vrot.lane.b32.xlu0 %v4854, 16
      %v4937 = vpop.permute.xlu0 %4936
      %4938 = vrot.lane.b32.xlu0 %v4855, 16
      %v4939 = vpop.permute.xlu0 %4938
      %4940 = vrot.lane.b32.xlu0 %v4856, 16
      %v4941 = vpop.permute.xlu0 %4940
      %4942 = vrot.lane.b32.xlu0 %v4857, 16
      %v4943 = vpop.permute.xlu0 %4942
      %v4944 = vsel %vm495, %v4921, %v4923
      %v4945 = vsel %vm495, %v4923, %v4925
      %v4946 = vsel %vm495, %v4927, %v4929
      %v4947 = vsel %vm495, %v4929, %v4931
      %v4948 = vsel %vm495, %v4933, %v4935
      %v4949 = vsel %vm495, %v4935, %v4937
      %v4950 = vsel %vm495, %v4939, %v4941
      %v4951 = vsel %vm495, %v4941, %v4943
      %v4961 = vsel %vm512, %v4919, 0
      %4963 = vmatprep.subr.mxu0 %v4945
      %4964 = vmatpush1.msra.mxu0 %v4944
      %4965 = vmatprep.subr.mxu0 %v4947
      %4966 = vmatpush1.msra.mxu0 %v4946
      %4967 = vmatprep.subr.mxu0 %v4949
      %4968 = vmatpush1.msra.mxu0 %v4948
      %4969 = vmatprep.subr.mxu0 %v4951
      %4970 = vmatpush1.msra.mxu0 %v4950
      %4971 = vmatprep.subr.mxu0 0.0
      %4972 = vmatpush1.msra.mxu0 0.0
      %4973 = vmatprep.subr.mxu0 0.0
      %4974 = vmatpush1.msra.mxu0 0.0
      %4975 = vmatprep.subr.mxu0 0.0
      %4976 = vmatpush1.msra.mxu0 0.0
      %4977 = vmatprep.subr.mxu0 0.0
      %4978 = vmatpush1.msra.mxu0 0.0
      %4979 = vmatprep.subr.mxu0 0.0
      %4980 = vmatpush1.msra.mxu0 0.0
      %4981 = vmatprep.subr.mxu0 0.0
      %4982 = vmatpush1.msra.mxu0 0.0
      %4983 = vmatprep.subr.mxu0 0.0
      %4984 = vmatpush1.msra.mxu0 0.0
      %4985 = vmatprep.subr.mxu0 0.0
      %4986 = vmatpush1.msra.mxu0 0.0
      %4987 = vmatprep.subr.mxu0 0.0
      %4988 = vmatpush1.msra.mxu0 0.0
      %4989 = vmatprep.subr.mxu0 0.0
      %4990 = vmatpush1.msra.mxu0 0.0
      %4991 = vmatprep.subr.mxu0 0.0
      %4992 = vmatpush1.msra.mxu0 0.0
      %4993 = vmatprep.subr.mxu0 0.0
      %4994 = vmatpush1.msra.mxu0 0.0
      %4995 = vmatprep.subr.mxu0 0.0
      %4996 = vmatpush1.msra.mxu0 0.0
      %4997 = vmatprep.subr.mxu0 0.0
      %4998 = vmatpush1.msra.mxu0 0.0
      %4999 = vmatprep.subr.mxu0 0.0
      %5000 = vmatpush1.msra.mxu0 0.0
      %5001 = vmatprep.subr.mxu0 0.0
      %5002 = vmatpush1.msra.mxu0 0.0
      %5003 = vmatprep.subr.mxu0 0.0
      %5004 = vmatpush1.msra.mxu0 0.0
      %5005 = vmatprep.subr.mxu0 0.0
      %5006 = vmatpush1.msra.mxu0 0.0
      %5007 = vmatprep.subr.mxu0 0.0
      %5008 = vmatpush1.msra.mxu0 0.0
      %5009 = vmatprep.subr.mxu0 0.0
      %5010 = vmatpush1.msra.mxu0 0.0
      %5011 = vmatprep.subr.mxu0 0.0
      %5012 = vmatpush1.msra.mxu0 0.0
      %5013 = vmatprep.subr.mxu0 0.0
      %5014 = vmatpush1.msra.mxu0 0.0
      %5015 = vmatprep.subr.mxu0 0.0
      %5016 = vmatpush1.msra.mxu0 0.0
      %5017 = vmatprep.subr.mxu0 0.0
      %5018 = vmatpush1.msra.mxu0 0.0
      %5019 = vmatprep.subr.mxu0 0.0
      %5020 = vmatpush1.msra.mxu0 0.0
      %5021 = vmatprep.subr.mxu0 0.0
      %5022 = vmatpush1.msra.mxu0 0.0
      %5023 = vmatprep.subr.mxu0 0.0
      %5024 = vmatpush1.msra.mxu0 0.0
      %5025 = vmatprep.subr.mxu0 0.0
      %5026 = vmatpush1.msra.mxu0 0.0
      %5027 = vmatprep.mubr.f32.mxu0 0.0
      %5028 = vmatmul.mubr.f32.gmra.mrb[0].mxu0 %v4961
      %v5029 = vpop.f32.mrb[0].mxu0
      %v5030 = vadd.f32 0.0, %v5029
      %v5031 = vpop.f32.mrb[0].mxu0
      %v5032 = vadd.f32 0.0, %v5031
      %5033 = vdwg.mxu0
      %v5035 = vsel %vm512, %v4918, 0
      %5037 = vmatprep.subr.mxu0 %v4911
      %5038 = vmatpush1.msra.mxu0 %v4910
      %5039 = vmatprep.subr.mxu0 %v4913
      %5040 = vmatpush1.msra.mxu0 %v4912
      %5041 = vmatprep.subr.mxu0 %v4915
      %5042 = vmatpush1.msra.mxu0 %v4914
      %5043 = vmatprep.subr.mxu0 %v4917
      %5044 = vmatpush1.msra.mxu0 %v4916
      %5045 = vmatprep.subr.mxu0 0.0
      %5046 = vmatpush1.msra.mxu0 0.0
      %5047 = vmatprep.subr.mxu0 0.0
      %5048 = vmatpush1.msra.mxu0 0.0
      %5049 = vmatprep.subr.mxu0 0.0
      %5050 = vmatpush1.msra.mxu0 0.0
      %5051 = vmatprep.subr.mxu0 0.0
      %5052 = vmatpush1.msra.mxu0 0.0
      %5053 = vmatprep.subr.mxu0 0.0
      %5054 = vmatpush1.msra.mxu0 0.0
      %5055 = vmatprep.subr.mxu0 0.0
      %5056 = vmatpush1.msra.mxu0 0.0
      %5057 = vmatprep.subr.mxu0 0.0
      %5058 = vmatpush1.msra.mxu0 0.0
      %5059 = vmatprep.subr.mxu0 0.0
      %5060 = vmatpush1.msra.mxu0 0.0
      %5061 = vmatprep.subr.mxu0 0.0
      %5062 = vmatpush1.msra.mxu0 0.0
      %5063 = vmatprep.subr.mxu0 0.0
      %5064 = vmatpush1.msra.mxu0 0.0
      %5065 = vmatprep.subr.mxu0 0.0
      %5066 = vmatpush1.msra.mxu0 0.0
      %5067 = vmatprep.subr.mxu0 0.0
      %5068 = vmatpush1.msra.mxu0 0.0
      %5069 = vmatprep.subr.mxu0 0.0
      %5070 = vmatpush1.msra.mxu0 0.0
      %5071 = vmatprep.subr.mxu0 0.0
      %5072 = vmatpush1.msra.mxu0 0.0
      %5073 = vmatprep.subr.mxu0 0.0
      %5074 = vmatpush1.msra.mxu0 0.0
      %5075 = vmatprep.subr.mxu0 0.0
      %5076 = vmatpush1.msra.mxu0 0.0
      %5077 = vmatprep.subr.mxu0 0.0
      %5078 = vmatpush1.msra.mxu0 0.0
      %5079 = vmatprep.subr.mxu0 0.0
      %5080 = vmatpush1.msra.mxu0 0.0
      %5081 = vmatprep.subr.mxu0 0.0
      %5082 = vmatpush1.msra.mxu0 0.0
      %5083 = vmatprep.subr.mxu0 0.0
      %5084 = vmatpush1.msra.mxu0 0.0
      %5085 = vmatprep.subr.mxu0 0.0
      %5086 = vmatpush1.msra.mxu0 0.0
      %5087 = vmatprep.subr.mxu0 0.0
      %5088 = vmatpush1.msra.mxu0 0.0
      %5089 = vmatprep.subr.mxu0 0.0
      %5090 = vmatpush1.msra.mxu0 0.0
      %5091 = vmatprep.subr.mxu0 0.0
      %5092 = vmatpush1.msra.mxu0 0.0
      %5093 = vmatprep.subr.mxu0 0.0
      %5094 = vmatpush1.msra.mxu0 0.0
      %5095 = vmatprep.subr.mxu0 0.0
      %5096 = vmatpush1.msra.mxu0 0.0
      %5097 = vmatprep.subr.mxu0 0.0
      %5098 = vmatpush1.msra.mxu0 0.0
      %5099 = vmatprep.subr.mxu0 0.0
      %5100 = vmatpush1.msra.mxu0 0.0
      %5101 = vmatprep.mubr.f32.mxu0 0.0
      %5102 = vmatmul.mubr.f32.gmra.mrb[0].mxu0 %v5035
      %v5103 = vpop.f32.mrb[0].mxu0
      %v5104 = vadd.f32 %v5030, %v5103
      %v5105 = vpop.f32.mrb[0].mxu0
      %v5106 = vadd.f32 %v5032, %v5105
      %5107 = vdwg.mxu0
      %5108 = vrot.lane.b32.xlu0 %v4846, 15
      %v5109 = vpop.permute.xlu0 %5108
      %5110 = vrot.lane.b32.xlu0 %v4847, 15
      %v5111 = vpop.permute.xlu0 %5110
      %5112 = vrot.lane.b32.xlu0 %v4848, 15
      %v5113 = vpop.permute.xlu0 %5112
      %5114 = vrot.lane.b32.xlu0 %v4849, 15
      %v5115 = vpop.permute.xlu0 %5114
      %5116 = vrot.lane.b32.xlu0 %v4850, 15
      %v5117 = vpop.permute.xlu0 %5116
      %5118 = vrot.lane.b32.xlu0 %v4851, 15
      %v5119 = vpop.permute.xlu0 %5118
      %5120 = vrot.lane.b32.xlu0 %v4852, 15
      %v5121 = vpop.permute.xlu0 %5120
      %5122 = vrot.lane.b32.xlu0 %v4853, 15
      %v5123 = vpop.permute.xlu0 %5122
      %5124 = vrot.lane.b32.xlu0 %v4854, 15
      %v5125 = vpop.permute.xlu0 %5124
      %5126 = vrot.lane.b32.xlu0 %v4855, 15
      %v5127 = vpop.permute.xlu0 %5126
      %5128 = vrot.lane.b32.xlu0 %v4856, 15
      %v5129 = vpop.permute.xlu0 %5128
      %5130 = vrot.lane.b32.xlu0 %v4857, 15
      %v5131 = vpop.permute.xlu0 %5130
      %v5132 = vsel %vm743, %v5109, %v5111
      %v5133 = vsel %vm743, %v5111, %v5113
      %v5134 = vsel %vm743, %v5115, %v5117
      %v5135 = vsel %vm743, %v5117, %v5119
      %v5136 = vsel %vm743, %v5121, %v5123
      %v5137 = vsel %vm743, %v5123, %v5125
      %v5138 = vsel %vm743, %v5127, %v5129
      %v5139 = vsel %vm743, %v5129, %v5131
      %v5148 = vsel %vm717, %v5132, 0.0
      %v5149 = vsel %vm718, %v5133, 0.0
      %v5150 = vsel %vm717, %v5134, 0.0
      %v5151 = vsel %vm718, %v5135, 0.0
      %v5152 = vsel %vm717, %v5136, 0.0
      %v5153 = vsel %vm718, %v5137, 0.0
      %v5154 = vsel %vm717, %v5138, 0.0
      %v5155 = vsel %vm718, %v5139, 0.0
      %v5156 = vld [vmem:[%s7 + $0x10] sm:$0xff]
      %v5158 = vsel %vm512, %v5156, 0
      %5160 = vmatprep.subr.mxu0 %v5149
      %5161 = vmatpush1.msra.mxu0 %v5148
      %5162 = vmatprep.subr.mxu0 %v5151
      %5163 = vmatpush1.msra.mxu0 %v5150
      %5164 = vmatprep.subr.mxu0 %v5153
      %5165 = vmatpush1.msra.mxu0 %v5152
      %5166 = vmatprep.subr.mxu0 %v5155
      %5167 = vmatpush1.msra.mxu0 %v5154
      %5168 = vmatprep.subr.mxu0 0.0
      %5169 = vmatpush1.msra.mxu0 0.0
      %5170 = vmatprep.subr.mxu0 0.0
      %5171 = vmatpush1.msra.mxu0 0.0
      %5172 = vmatprep.subr.mxu0 0.0
      %5173 = vmatpush1.msra.mxu0 0.0
      %5174 = vmatprep.subr.mxu0 0.0
      %5175 = vmatpush1.msra.mxu0 0.0
      %5176 = vmatprep.subr.mxu0 0.0
      %5177 = vmatpush1.msra.mxu0 0.0
      %5178 = vmatprep.subr.mxu0 0.0
      %5179 = vmatpush1.msra.mxu0 0.0
      %5180 = vmatprep.subr.mxu0 0.0
      %5181 = vmatpush1.msra.mxu0 0.0
      %5182 = vmatprep.subr.mxu0 0.0
      %5183 = vmatpush1.msra.mxu0 0.0
      %5184 = vmatprep.subr.mxu0 0.0
      %5185 = vmatpush1.msra.mxu0 0.0
      %5186 = vmatprep.subr.mxu0 0.0
      %5187 = vmatpush1.msra.mxu0 0.0
      %5188 = vmatprep.subr.mxu0 0.0
      %5189 = vmatpush1.msra.mxu0 0.0
      %5190 = vmatprep.subr.mxu0 0.0
      %5191 = vmatpush1.msra.mxu0 0.0
      %5192 = vmatprep.subr.mxu0 0.0
      %5193 = vmatpush1.msra.mxu0 0.0
      %5194 = vmatprep.subr.mxu0 0.0
      %5195 = vmatpush1.msra.mxu0 0.0
      %5196 = vmatprep.subr.mxu0 0.0
      %5197 = vmatpush1.msra.mxu0 0.0
      %5198 = vmatprep.subr.mxu0 0.0
      %5199 = vmatpush1.msra.mxu0 0.0
      %5200 = vmatprep.subr.mxu0 0.0
      %5201 = vmatpush1.msra.mxu0 0.0
      %5202 = vmatprep.subr.mxu0 0.0
      %5203 = vmatpush1.msra.mxu0 0.0
      %5204 = vmatprep.subr.mxu0 0.0
      %5205 = vmatpush1.msra.mxu0 0.0
      %5206 = vmatprep.subr.mxu0 0.0
      %5207 = vmatpush1.msra.mxu0 0.0
      %5208 = vmatprep.subr.mxu0 0.0
      %5209 = vmatpush1.msra.mxu0 0.0
      %5210 = vmatprep.subr.mxu0 0.0
      %5211 = vmatpush1.msra.mxu0 0.0
      %5212 = vmatprep.subr.mxu0 0.0
      %5213 = vmatpush1.msra.mxu0 0.0
      %5214 = vmatprep.subr.mxu0 0.0
      %5215 = vmatpush1.msra.mxu0 0.0
      %5216 = vmatprep.subr.mxu0 0.0
      %5217 = vmatpush1.msra.mxu0 0.0
      %5218 = vmatprep.subr.mxu0 0.0
      %5219 = vmatpush1.msra.mxu0 0.0
      %5220 = vmatprep.subr.mxu0 0.0
      %5221 = vmatpush1.msra.mxu0 0.0
      %5222 = vmatprep.subr.mxu0 0.0
      %5223 = vmatpush1.msra.mxu0 0.0
      %5224 = vmatprep.mubr.f32.mxu0 0.0
      %5225 = vmatmul.mubr.f32.gmra.mrb[0].mxu0 %v5158
      %v5226 = vpop.f32.mrb[0].mxu0
      %v5227 = vadd.f32 0.0, %v5226
      %v5228 = vpop.f32.mrb[0].mxu0
      %v5229 = vadd.f32 0.0, %v5228
      %5230 = vdwg.mxu0
      %v5231 = vadd.f32 %v5104, %v5227
      %v5232 = vadd.f32 %v5106, %v5229
      %5233 = vrot.lane.b32.xlu0 %v4846, 1
      %v5234 = vpop.permute.xlu0 %5233
      %5235 = vrot.lane.b32.xlu0 %v4847, 1
      %v5236 = vpop.permute.xlu0 %5235
      %5237 = vrot.lane.b32.xlu0 %v4848, 1
      %v5238 = vpop.permute.xlu0 %5237
      %5239 = vrot.lane.b32.xlu0 %v4849, 1
      %v5240 = vpop.permute.xlu0 %5239
      %5241 = vrot.lane.b32.xlu0 %v4850, 1
      %v5242 = vpop.permute.xlu0 %5241
      %5243 = vrot.lane.b32.xlu0 %v4851, 1
      %v5244 = vpop.permute.xlu0 %5243
      %5245 = vrot.lane.b32.xlu0 %v4852, 1
      %v5246 = vpop.permute.xlu0 %5245
      %5247 = vrot.lane.b32.xlu0 %v4853, 1
      %v5248 = vpop.permute.xlu0 %5247
      %5249 = vrot.lane.b32.xlu0 %v4854, 1
      %v5250 = vpop.permute.xlu0 %5249
      %5251 = vrot.lane.b32.xlu0 %v4855, 1
      %v5252 = vpop.permute.xlu0 %5251
      %5253 = vrot.lane.b32.xlu0 %v4856, 1
      %v5254 = vpop.permute.xlu0 %5253
      %5255 = vrot.lane.b32.xlu0 %v4857, 1
      %v5256 = vpop.permute.xlu0 %5255
      %v5257 = vsel %vm905, %v5234, %v5236
      %v5258 = vsel %vm905, %v5236, %v5238
      %v5259 = vsel %vm905, %v5240, %v5242
      %v5260 = vsel %vm905, %v5242, %v5244
      %v5261 = vsel %vm905, %v5246, %v5248
      %v5262 = vsel %vm905, %v5248, %v5250
      %v5263 = vsel %vm905, %v5252, %v5254
      %v5264 = vsel %vm905, %v5254, %v5256
      %v5273 = vsel %vm401, %v5257, 0.0
      %v5274 = vsel %vm402, %v5258, 0.0
      %v5275 = vsel %vm401, %v5259, 0.0
      %v5276 = vsel %vm402, %v5260, 0.0
      %v5277 = vsel %vm401, %v5261, 0.0
      %v5278 = vsel %vm402, %v5262, 0.0
      %v5279 = vsel %vm401, %v5263, 0.0
      %v5280 = vsel %vm402, %v5264, 0.0
      %v5281 = vld [vmem:[%s7 + $0x18] sm:$0xff]
      %v5283 = vsel %vm512, %v5281, 0
      %5285 = vmatprep.subr.mxu0 %v5274
      %5286 = vmatpush1.msra.mxu0 %v5273
      %5287 = vmatprep.subr.mxu0 %v5276
      %5288 = vmatpush1.msra.mxu0 %v5275
      %5289 = vmatprep.subr.mxu0 %v5278
      %5290 = vmatpush1.msra.mxu0 %v5277
      %5291 = vmatprep.subr.mxu0 %v5280
      %5292 = vmatpush1.msra.mxu0 %v5279
      %5293 = vmatprep.subr.mxu0 0.0
      %5294 = vmatpush1.msra.mxu0 0.0
      %5295 = vmatprep.subr.mxu0 0.0
      %5296 = vmatpush1.msra.mxu0 0.0
      %5297 = vmatprep.subr.mxu0 0.0
      %5298 = vmatpush1.msra.mxu0 0.0
      %5299 = vmatprep.subr.mxu0 0.0
      %5300 = vmatpush1.msra.mxu0 0.0
      %5301 = vmatprep.subr.mxu0 0.0
      %5302 = vmatpush1.msra.mxu0 0.0
      %5303 = vmatprep.subr.mxu0 0.0
      %5304 = vmatpush1.msra.mxu0 0.0
      %5305 = vmatprep.subr.mxu0 0.0
      %5306 = vmatpush1.msra.mxu0 0.0
      %5307 = vmatprep.subr.mxu0 0.0
      %5308 = vmatpush1.msra.mxu0 0.0
      %5309 = vmatprep.subr.mxu0 0.0
      %5310 = vmatpush1.msra.mxu0 0.0
      %5311 = vmatprep.subr.mxu0 0.0
      %5312 = vmatpush1.msra.mxu0 0.0
      %5313 = vmatprep.subr.mxu0 0.0
      %5314 = vmatpush1.msra.mxu0 0.0
      %5315 = vmatprep.subr.mxu0 0.0
      %5316 = vmatpush1.msra.mxu0 0.0
      %5317 = vmatprep.subr.mxu0 0.0
      %5318 = vmatpush1.msra.mxu0 0.0
      %5319 = vmatprep.subr.mxu0 0.0
      %5320 = vmatpush1.msra.mxu0 0.0
      %5321 = vmatprep.subr.mxu0 0.0
      %5322 = vmatpush1.msra.mxu0 0.0
      %5323 = vmatprep.subr.mxu0 0.0
      %5324 = vmatpush1.msra.mxu0 0.0
      %5325 = vmatprep.subr.mxu0 0.0
      %5326 = vmatpush1.msra.mxu0 0.0
      %5327 = vmatprep.subr.mxu0 0.0
      %5328 = vmatpush1.msra.mxu0 0.0
      %5329 = vmatprep.subr.mxu0 0.0
      %5330 = vmatpush1.msra.mxu0 0.0
      %5331 = vmatprep.subr.mxu0 0.0
      %5332 = vmatpush1.msra.mxu0 0.0
      %5333 = vmatprep.subr.mxu0 0.0
      %5334 = vmatpush1.msra.mxu0 0.0
      %5335 = vmatprep.subr.mxu0 0.0
      %5336 = vmatpush1.msra.mxu0 0.0
      %5337 = vmatprep.subr.mxu0 0.0
      %5338 = vmatpush1.msra.mxu0 0.0
      %5339 = vmatprep.subr.mxu0 0.0
      %5340 = vmatpush1.msra.mxu0 0.0
      %5341 = vmatprep.subr.mxu0 0.0
      %5342 = vmatpush1.msra.mxu0 0.0
      %5343 = vmatprep.subr.mxu0 0.0
      %5344 = vmatpush1.msra.mxu0 0.0
      %5345 = vmatprep.subr.mxu0 0.0
      %5346 = vmatpush1.msra.mxu0 0.0
      %5347 = vmatprep.subr.mxu0 0.0
      %5348 = vmatpush1.msra.mxu0 0.0
      %5349 = vmatprep.mubr.f32.mxu0 0.0
      %5350 = vmatmul.mubr.f32.gmra.mrb[0].mxu0 %v5283
      %v5351 = vpop.f32.mrb[0].mxu0
      %v5352 = vadd.f32 0.0, %v5351
      %v5353 = vpop.f32.mrb[0].mxu0
      %v5354 = vadd.f32 0.0, %v5353
      %5355 = vdwg.mxu0
      %v5356 = vadd.f32 %v5231, %v5352
      %v5357 = vadd.f32 %v5232, %v5354
      %v5358 = vld [vmem:[%s7 + $0x20] sm:$0xff]
      %v5360 = vsel %vm512, %v5358, 0
      %5362 = vmatprep.subr.mxu0 %v4848
      %5363 = vmatpush1.msra.mxu0 %v4847
      %5364 = vmatprep.subr.mxu0 %v4851
      %5365 = vmatpush1.msra.mxu0 %v4850
      %5366 = vmatprep.subr.mxu0 %v4854
      %5367 = vmatpush1.msra.mxu0 %v4853
      %5368 = vmatprep.subr.mxu0 %v4857
      %5369 = vmatpush1.msra.mxu0 %v4856
      %5370 = vmatprep.subr.mxu0 0.0
      %5371 = vmatpush1.msra.mxu0 0.0
      %5372 = vmatprep.subr.mxu0 0.0
      %5373 = vmatpush1.msra.mxu0 0.0
      %5374 = vmatprep.subr.mxu0 0.0
      %5375 = vmatpush1.msra.mxu0 0.0
      %5376 = vmatprep.subr.mxu0 0.0
      %5377 = vmatpush1.msra.mxu0 0.0
      %5378 = vmatprep.subr.mxu0 0.0
      %5379 = vmatpush1.msra.mxu0 0.0
      %5380 = vmatprep.subr.mxu0 0.0
      %5381 = vmatpush1.msra.mxu0 0.0
      %5382 = vmatprep.subr.mxu0 0.0
      %5383 = vmatpush1.msra.mxu0 0.0
      %5384 = vmatprep.subr.mxu0 0.0
      %5385 = vmatpush1.msra.mxu0 0.0
      %5386 = vmatprep.subr.mxu0 0.0
      %5387 = vmatpush1.msra.mxu0 0.0
      %5388 = vmatprep.subr.mxu0 0.0
      %5389 = vmatpush1.msra.mxu0 0.0
      %5390 = vmatprep.subr.mxu0 0.0
      %5391 = vmatpush1.msra.mxu0 0.0
      %5392 = vmatprep.subr.mxu0 0.0
      %5393 = vmatpush1.msra.mxu0 0.0
      %5394 = vmatprep.subr.mxu0 0.0
      %5395 = vmatpush1.msra.mxu0 0.0
      %5396 = vmatprep.subr.mxu0 0.0
      %5397 = vmatpush1.msra.mxu0 0.0
      %5398 = vmatprep.subr.mxu0 0.0
      %5399 = vmatpush1.msra.mxu0 0.0
      %5400 = vmatprep.subr.mxu0 0.0
      %5401 = vmatpush1.msra.mxu0 0.0
      %5402 = vmatprep.subr.mxu0 0.0
      %5403 = vmatpush1.msra.mxu0 0.0
      %5404 = vmatprep.subr.mxu0 0.0
      %5405 = vmatpush1.msra.mxu0 0.0
      %5406 = vmatprep.subr.mxu0 0.0
      %5407 = vmatpush1.msra.mxu0 0.0
      %5408 = vmatprep.subr.mxu0 0.0
      %5409 = vmatpush1.msra.mxu0 0.0
      %5410 = vmatprep.subr.mxu0 0.0
      %5411 = vmatpush1.msra.mxu0 0.0
      %5412 = vmatprep.subr.mxu0 0.0
      %5413 = vmatpush1.msra.mxu0 0.0
      %5414 = vmatprep.subr.mxu0 0.0
      %5415 = vmatpush1.msra.mxu0 0.0
      %5416 = vmatprep.subr.mxu0 0.0
      %5417 = vmatpush1.msra.mxu0 0.0
      %5418 = vmatprep.subr.mxu0 0.0
      %5419 = vmatpush1.msra.mxu0 0.0
      %5420 = vmatprep.subr.mxu0 0.0
      %5421 = vmatpush1.msra.mxu0 0.0
      %5422 = vmatprep.subr.mxu0 0.0
      %5423 = vmatpush1.msra.mxu0 0.0
      %5424 = vmatprep.subr.mxu0 0.0
      %5425 = vmatpush1.msra.mxu0 0.0
      %5426 = vmatprep.mubr.f32.mxu0 0.0
      %5427 = vmatmul.mubr.f32.gmra.mrb[0].mxu0 %v5360
      %v5428 = vpop.f32.mrb[0].mxu0
      %v5429 = vadd.f32 0.0, %v5428
      %v5430 = vpop.f32.mrb[0].mxu0
      %v5431 = vadd.f32 0.0, %v5430
      %5432 = vdwg.mxu0
      %v5433 = vadd.f32 %v5356, %v5429
      %v5434 = vadd.f32 %v5357, %v5431
      %v5435 = vld [vmem:[#allocation2 + $0x8] sm:$0xff]
      %v5436 = vld [vmem:[#allocation2 + $0x10] sm:$0xff]
      %v5437 = vld [vmem:[#allocation2 + $0x18] sm:$0xff]
      %v5438 = vld [vmem:[#allocation2 + $0x28] sm:$0xff]
      %v5439 = vld [vmem:[#allocation2 + $0x30] sm:$0xff]
      %v5440 = vld [vmem:[#allocation2 + $0x38] sm:$0xff]
      %v5441 = vld [vmem:[#allocation2 + $0x48] sm:$0xff]
      %v5442 = vld [vmem:[#allocation2 + $0x50] sm:$0xff]
      %v5443 = vld [vmem:[#allocation2 + $0x58] sm:$0xff]
      %v5444 = vld [vmem:[#allocation2 + $0x68] sm:$0xff]
      %v5445 = vld [vmem:[#allocation2 + $0x70] sm:$0xff]
      %v5446 = vld [vmem:[#allocation2 + $0x78] sm:$0xff]
      %5459 = vrot.lane.b32.xlu0 %v5435, 127
      %v5460 = vpop.permute.xlu0 %5459
      %5461 = vrot.lane.b32.xlu0 %v5436, 127
      %v5462 = vpop.permute.xlu0 %5461
      %5463 = vrot.lane.b32.xlu0 %v5437, 127
      %v5464 = vpop.permute.xlu0 %5463
      %5465 = vrot.lane.b32.xlu0 %v5438, 127
      %v5466 = vpop.permute.xlu0 %5465
      %5467 = vrot.lane.b32.xlu0 %v5439, 127
      %v5468 = vpop.permute.xlu0 %5467
      %5469 = vrot.lane.b32.xlu0 %v5440, 127
      %v5470 = vpop.permute.xlu0 %5469
      %5471 = vrot.lane.b32.xlu0 %v5441, 127
      %v5472 = vpop.permute.xlu0 %5471
      %5473 = vrot.lane.b32.xlu0 %v5442, 127
      %v5474 = vpop.permute.xlu0 %5473
      %5475 = vrot.lane.b32.xlu0 %v5443, 127
      %v5476 = vpop.permute.xlu0 %5475
      %5477 = vrot.lane.b32.xlu0 %v5444, 127
      %v5478 = vpop.permute.xlu0 %5477
      %5479 = vrot.lane.b32.xlu0 %v5445, 127
      %v5480 = vpop.permute.xlu0 %5479
      %5481 = vrot.lane.b32.xlu0 %v5446, 127
      %v5482 = vpop.permute.xlu0 %5481
      %v5483 = vsel %vm1204, %v5460, %v5462
      %v5484 = vsel %vm1204, %v5462, %v5464
      %v5485 = vsel %vm1204, %v5466, %v5468
      %v5486 = vsel %vm1204, %v5468, %v5470
      %v5487 = vsel %vm1204, %v5472, %v5474
      %v5488 = vsel %vm1204, %v5474, %v5476
      %v5489 = vsel %vm1204, %v5478, %v5480
      %v5490 = vsel %vm1204, %v5480, %v5482
      %v5499 = vsel %vm717, %v5483, 0.0
      %v5500 = vsel %vm718, %v5484, 0.0
      %v5501 = vsel %vm717, %v5485, 0.0
      %v5502 = vsel %vm718, %v5486, 0.0
      %v5503 = vsel %vm717, %v5487, 0.0
      %v5504 = vsel %vm718, %v5488, 0.0
      %v5505 = vsel %vm717, %v5489, 0.0
      %v5506 = vsel %vm718, %v5490, 0.0
      %v5507 = vld [vmem:[%s7 + $0x28] sm:$0xff]
      %v5509 = vsel %vm512, %v5507, 0
      %5511 = vmatprep.subr.mxu0 %v5500
      %5512 = vmatpush1.msra.mxu0 %v5499
      %5513 = vmatprep.subr.mxu0 %v5502
      %5514 = vmatpush1.msra.mxu0 %v5501
      %5515 = vmatprep.subr.mxu0 %v5504
      %5516 = vmatpush1.msra.mxu0 %v5503
      %5517 = vmatprep.subr.mxu0 %v5506
      %5518 = vmatpush1.msra.mxu0 %v5505
      %5519 = vmatprep.subr.mxu0 0.0
      %5520 = vmatpush1.msra.mxu0 0.0
      %5521 = vmatprep.subr.mxu0 0.0
      %5522 = vmatpush1.msra.mxu0 0.0
      %5523 = vmatprep.subr.mxu0 0.0
      %5524 = vmatpush1.msra.mxu0 0.0
      %5525 = vmatprep.subr.mxu0 0.0
      %5526 = vmatpush1.msra.mxu0 0.0
      %5527 = vmatprep.subr.mxu0 0.0
      %5528 = vmatpush1.msra.mxu0 0.0
      %5529 = vmatprep.subr.mxu0 0.0
      %5530 = vmatpush1.msra.mxu0 0.0
      %5531 = vmatprep.subr.mxu0 0.0
      %5532 = vmatpush1.msra.mxu0 0.0
      %5533 = vmatprep.subr.mxu0 0.0
      %5534 = vmatpush1.msra.mxu0 0.0
      %5535 = vmatprep.subr.mxu0 0.0
      %5536 = vmatpush1.msra.mxu0 0.0
      %5537 = vmatprep.subr.mxu0 0.0
      %5538 = vmatpush1.msra.mxu0 0.0
      %5539 = vmatprep.subr.mxu0 0.0
      %5540 = vmatpush1.msra.mxu0 0.0
      %5541 = vmatprep.subr.mxu0 0.0
      %5542 = vmatpush1.msra.mxu0 0.0
      %5543 = vmatprep.subr.mxu0 0.0
      %5544 = vmatpush1.msra.mxu0 0.0
      %5545 = vmatprep.subr.mxu0 0.0
      %5546 = vmatpush1.msra.mxu0 0.0
      %5547 = vmatprep.subr.mxu0 0.0
      %5548 = vmatpush1.msra.mxu0 0.0
      %5549 = vmatprep.subr.mxu0 0.0
      %5550 = vmatpush1.msra.mxu0 0.0
      %5551 = vmatprep.subr.mxu0 0.0
      %5552 = vmatpush1.msra.mxu0 0.0
      %5553 = vmatprep.subr.mxu0 0.0
      %5554 = vmatpush1.msra.mxu0 0.0
      %5555 = vmatprep.subr.mxu0 0.0
      %5556 = vmatpush1.msra.mxu0 0.0
      %5557 = vmatprep.subr.mxu0 0.0
      %5558 = vmatpush1.msra.mxu0 0.0
      %5559 = vmatprep.subr.mxu0 0.0
      %5560 = vmatpush1.msra.mxu0 0.0
      %5561 = vmatprep.subr.mxu0 0.0
      %5562 = vmatpush1.msra.mxu0 0.0
      %5563 = vmatprep.subr.mxu0 0.0
      %5564 = vmatpush1.msra.mxu0 0.0
      %5565 = vmatprep.subr.mxu0 0.0
      %5566 = vmatpush1.msra.mxu0 0.0
      %5567 = vmatprep.subr.mxu0 0.0
      %5568 = vmatpush1.msra.mxu0 0.0
      %5569 = vmatprep.subr.mxu0 0.0
      %5570 = vmatpush1.msra.mxu0 0.0
      %5571 = vmatprep.subr.mxu0 0.0
      %5572 = vmatpush1.msra.mxu0 0.0
      %5573 = vmatprep.subr.mxu0 0.0
      %5574 = vmatpush1.msra.mxu0 0.0
      %5575 = vmatprep.mubr.f32.mxu0 0.0
      %5576 = vmatmul.mubr.f32.gmra.mrb[0].mxu0 %v5509
      %v5577 = vpop.f32.mrb[0].mxu0
      %v5578 = vadd.f32 0.0, %v5577
      %v5579 = vpop.f32.mrb[0].mxu0
      %v5580 = vadd.f32 0.0, %v5579
      %5581 = vdwg.mxu0
      %v5582 = vadd.f32 %v5433, %v5578
      %v5583 = vadd.f32 %v5434, %v5580
      %5584 = vrot.lane.b32.xlu0 %v5435, 113
      %v5585 = vpop.permute.xlu0 %5584
      %5586 = vrot.lane.b32.xlu0 %v5436, 113
      %v5587 = vpop.permute.xlu0 %5586
      %5588 = vrot.lane.b32.xlu0 %v5437, 113
      %v5589 = vpop.permute.xlu0 %5588
      %5590 = vrot.lane.b32.xlu0 %v5438, 113
      %v5591 = vpop.permute.xlu0 %5590
      %5592 = vrot.lane.b32.xlu0 %v5439, 113
      %v5593 = vpop.permute.xlu0 %5592
      %5594 = vrot.lane.b32.xlu0 %v5440, 113
      %v5595 = vpop.permute.xlu0 %5594
      %5596 = vrot.lane.b32.xlu0 %v5441, 113
      %v5597 = vpop.permute.xlu0 %5596
      %5598 = vrot.lane.b32.xlu0 %v5442, 113
      %v5599 = vpop.permute.xlu0 %5598
      %5600 = vrot.lane.b32.xlu0 %v5443, 113
      %v5601 = vpop.permute.xlu0 %5600
      %5602 = vrot.lane.b32.xlu0 %v5444, 113
      %v5603 = vpop.permute.xlu0 %5602
      %5604 = vrot.lane.b32.xlu0 %v5445, 113
      %v5605 = vpop.permute.xlu0 %5604
      %5606 = vrot.lane.b32.xlu0 %v5446, 113
      %v5607 = vpop.permute.xlu0 %5606
      %v5608 = vsel %vm1366, %v5585, %v5587
      %v5609 = vsel %vm1366, %v5587, %v5589
      %v5610 = vsel %vm1366, %v5591, %v5593
      %v5611 = vsel %vm1366, %v5593, %v5595
      %v5612 = vsel %vm1366, %v5597, %v5599
      %v5613 = vsel %vm1366, %v5599, %v5601
      %v5614 = vsel %vm1366, %v5603, %v5605
      %v5615 = vsel %vm1366, %v5605, %v5607
      %v5624 = vsel %vm401, %v5608, 0.0
      %v5625 = vsel %vm402, %v5609, 0.0
      %v5626 = vsel %vm401, %v5610, 0.0
      %v5627 = vsel %vm402, %v5611, 0.0
      %v5628 = vsel %vm401, %v5612, 0.0
      %v5629 = vsel %vm402, %v5613, 0.0
      %v5630 = vsel %vm401, %v5614, 0.0
      %v5631 = vsel %vm402, %v5615, 0.0
      %v5632 = vld [vmem:[%s7 + $0x30] sm:$0xff]
      %v5634 = vsel %vm512, %v5632, 0
      %5636 = vmatprep.subr.mxu0 %v5625
      %5637 = vmatpush1.msra.mxu0 %v5624
      %5638 = vmatprep.subr.mxu0 %v5627
      %5639 = vmatpush1.msra.mxu0 %v5626
      %5640 = vmatprep.subr.mxu0 %v5629
      %5641 = vmatpush1.msra.mxu0 %v5628
      %5642 = vmatprep.subr.mxu0 %v5631
      %5643 = vmatpush1.msra.mxu0 %v5630
      %5644 = vmatprep.subr.mxu0 0.0
      %5645 = vmatpush1.msra.mxu0 0.0
      %5646 = vmatprep.subr.mxu0 0.0
      %5647 = vmatpush1.msra.mxu0 0.0
      %5648 = vmatprep.subr.mxu0 0.0
      %5649 = vmatpush1.msra.mxu0 0.0
      %5650 = vmatprep.subr.mxu0 0.0
      %5651 = vmatpush1.msra.mxu0 0.0
      %5652 = vmatprep.subr.mxu0 0.0
      %5653 = vmatpush1.msra.mxu0 0.0
      %5654 = vmatprep.subr.mxu0 0.0
      %5655 = vmatpush1.msra.mxu0 0.0
      %5656 = vmatprep.subr.mxu0 0.0
      %5657 = vmatpush1.msra.mxu0 0.0
      %5658 = vmatprep.subr.mxu0 0.0
      %5659 = vmatpush1.msra.mxu0 0.0
      %5660 = vmatprep.subr.mxu0 0.0
      %5661 = vmatpush1.msra.mxu0 0.0
      %5662 = vmatprep.subr.mxu0 0.0
      %5663 = vmatpush1.msra.mxu0 0.0
      %5664 = vmatprep.subr.mxu0 0.0
      %5665 = vmatpush1.msra.mxu0 0.0
      %5666 = vmatprep.subr.mxu0 0.0
      %5667 = vmatpush1.msra.mxu0 0.0
      %5668 = vmatprep.subr.mxu0 0.0
      %5669 = vmatpush1.msra.mxu0 0.0
      %5670 = vmatprep.subr.mxu0 0.0
      %5671 = vmatpush1.msra.mxu0 0.0
      %5672 = vmatprep.subr.mxu0 0.0
      %5673 = vmatpush1.msra.mxu0 0.0
      %5674 = vmatprep.subr.mxu0 0.0
      %5675 = vmatpush1.msra.mxu0 0.0
      %5676 = vmatprep.subr.mxu0 0.0
      %5677 = vmatpush1.msra.mxu0 0.0
      %5678 = vmatprep.subr.mxu0 0.0
      %5679 = vmatpush1.msra.mxu0 0.0
      %5680 = vmatprep.subr.mxu0 0.0
      %5681 = vmatpush1.msra.mxu0 0.0
      %5682 = vmatprep.subr.mxu0 0.0
      %5683 = vmatpush1.msra.mxu0 0.0
      %5684 = vmatprep.subr.mxu0 0.0
      %5685 = vmatpush1.msra.mxu0 0.0
      %5686 = vmatprep.subr.mxu0 0.0
      %5687 = vmatpush1.msra.mxu0 0.0
      %5688 = vmatprep.subr.mxu0 0.0
      %5689 = vmatpush1.msra.mxu0 0.0
      %5690 = vmatprep.subr.mxu0 0.0
      %5691 = vmatpush1.msra.mxu0 0.0
      %5692 = vmatprep.subr.mxu0 0.0
      %5693 = vmatpush1.msra.mxu0 0.0
      %5694 = vmatprep.subr.mxu0 0.0
      %5695 = vmatpush1.msra.mxu0 0.0
      %5696 = vmatprep.subr.mxu0 0.0
      %5697 = vmatpush1.msra.mxu0 0.0
      %5698 = vmatprep.subr.mxu0 0.0
      %5699 = vmatpush1.msra.mxu0 0.0
      %5700 = vmatprep.mubr.f32.mxu0 0.0
      %5701 = vmatmul.mubr.f32.gmra.mrb[0].mxu0 %v5634
      %v5702 = vpop.f32.mrb[0].mxu0
      %v5703 = vadd.f32 0.0, %v5702
      %v5704 = vpop.f32.mrb[0].mxu0
      %v5705 = vadd.f32 0.0, %v5704
      %5706 = vdwg.mxu0
      %v5707 = vadd.f32 %v5582, %v5703
      %v5708 = vadd.f32 %v5583, %v5705
      %v5709 = vld [vmem:[%s7 + $0x38] sm:$0xff]
      %5710 = vrot.lane.b32.xlu0 %v5435, 112
      %v5711 = vpop.permute.xlu0 %5710
      %5712 = vrot.lane.b32.xlu0 %v5436, 112
      %v5713 = vpop.permute.xlu0 %5712
      %5714 = vrot.lane.b32.xlu0 %v5437, 112
      %v5715 = vpop.permute.xlu0 %5714
      %5716 = vrot.lane.b32.xlu0 %v5438, 112
      %v5717 = vpop.permute.xlu0 %5716
      %5718 = vrot.lane.b32.xlu0 %v5439, 112
      %v5719 = vpop.permute.xlu0 %5718
      %5720 = vrot.lane.b32.xlu0 %v5440, 112
      %v5721 = vpop.permute.xlu0 %5720
      %5722 = vrot.lane.b32.xlu0 %v5441, 112
      %v5723 = vpop.permute.xlu0 %5722
      %5724 = vrot.lane.b32.xlu0 %v5442, 112
      %v5725 = vpop.permute.xlu0 %5724
      %5726 = vrot.lane.b32.xlu0 %v5443, 112
      %v5727 = vpop.permute.xlu0 %5726
      %5728 = vrot.lane.b32.xlu0 %v5444, 112
      %v5729 = vpop.permute.xlu0 %5728
      %5730 = vrot.lane.b32.xlu0 %v5445, 112
      %v5731 = vpop.permute.xlu0 %5730
      %5732 = vrot.lane.b32.xlu0 %v5446, 112
      %v5733 = vpop.permute.xlu0 %5732
      %v5734 = vsel %vm1532, %v5711, %v5713
      %v5735 = vsel %vm1532, %v5713, %v5715
      %v5736 = vsel %vm1532, %v5717, %v5719
      %v5737 = vsel %vm1532, %v5719, %v5721
      %v5738 = vsel %vm1532, %v5723, %v5725
      %v5739 = vsel %vm1532, %v5725, %v5727
      %v5740 = vsel %vm1532, %v5729, %v5731
      %v5741 = vsel %vm1532, %v5731, %v5733
      %v5751 = vsel %vm512, %v5709, 0
      %5753 = vmatprep.subr.mxu0 %v5735
      %5754 = vmatpush1.msra.mxu0 %v5734
      %5755 = vmatprep.subr.mxu0 %v5737
      %5756 = vmatpush1.msra.mxu0 %v5736
      %5757 = vmatprep.subr.mxu0 %v5739
      %5758 = vmatpush1.msra.mxu0 %v5738
      %5759 = vmatprep.subr.mxu0 %v5741
      %5760 = vmatpush1.msra.mxu0 %v5740
      %5761 = vmatprep.subr.mxu0 0.0
      %5762 = vmatpush1.msra.mxu0 0.0
      %5763 = vmatprep.subr.mxu0 0.0
      %5764 = vmatpush1.msra.mxu0 0.0
      %5765 = vmatprep.subr.mxu0 0.0
      %5766 = vmatpush1.msra.mxu0 0.0
      %5767 = vmatprep.subr.mxu0 0.0
      %5768 = vmatpush1.msra.mxu0 0.0
      %5769 = vmatprep.subr.mxu0 0.0
      %5770 = vmatpush1.msra.mxu0 0.0
      %5771 = vmatprep.subr.mxu0 0.0
      %5772 = vmatpush1.msra.mxu0 0.0
      %5773 = vmatprep.subr.mxu0 0.0
      %5774 = vmatpush1.msra.mxu0 0.0
      %5775 = vmatprep.subr.mxu0 0.0
      %5776 = vmatpush1.msra.mxu0 0.0
      %5777 = vmatprep.subr.mxu0 0.0
      %5778 = vmatpush1.msra.mxu0 0.0
      %5779 = vmatprep.subr.mxu0 0.0
      %5780 = vmatpush1.msra.mxu0 0.0
      %5781 = vmatprep.subr.mxu0 0.0
      %5782 = vmatpush1.msra.mxu0 0.0
      %5783 = vmatprep.subr.mxu0 0.0
      %5784 = vmatpush1.msra.mxu0 0.0
      %5785 = vmatprep.subr.mxu0 0.0
      %5786 = vmatpush1.msra.mxu0 0.0
      %5787 = vmatprep.subr.mxu0 0.0
      %5788 = vmatpush1.msra.mxu0 0.0
      %5789 = vmatprep.subr.mxu0 0.0
      %5790 = vmatpush1.msra.mxu0 0.0
      %5791 = vmatprep.subr.mxu0 0.0
      %5792 = vmatpush1.msra.mxu0 0.0
      %5793 = vmatprep.subr.mxu0 0.0
      %5794 = vmatpush1.msra.mxu0 0.0
      %5795 = vmatprep.subr.mxu0 0.0
      %5796 = vmatpush1.msra.mxu0 0.0
      %5797 = vmatprep.subr.mxu0 0.0
      %5798 = vmatpush1.msra.mxu0 0.0
      %5799 = vmatprep.subr.mxu0 0.0
      %5800 = vmatpush1.msra.mxu0 0.0
      %5801 = vmatprep.subr.mxu0 0.0
      %5802 = vmatpush1.msra.mxu0 0.0
      %5803 = vmatprep.subr.mxu0 0.0
      %5804 = vmatpush1.msra.mxu0 0.0
      %5805 = vmatprep.subr.mxu0 0.0
      %5806 = vmatpush1.msra.mxu0 0.0
      %5807 = vmatprep.subr.mxu0 0.0
      %5808 = vmatpush1.msra.mxu0 0.0
      %5809 = vmatprep.subr.mxu0 0.0
      %5810 = vmatpush1.msra.mxu0 0.0
      %5811 = vmatprep.subr.mxu0 0.0
      %5812 = vmatpush1.msra.mxu0 0.0
      %5813 = vmatprep.subr.mxu0 0.0
      %5814 = vmatpush1.msra.mxu0 0.0
      %5815 = vmatprep.subr.mxu0 0.0
      %5816 = vmatpush1.msra.mxu0 0.0
      %5817 = vmatprep.mubr.f32.mxu0 0.0
      %5818 = vmatmul.mubr.f32.gmra.mrb[0].mxu0 %v5751
      %v5819 = vpop.f32.mrb[0].mxu0
      %v5820 = vadd.f32 0.0, %v5819
      %v5821 = vpop.f32.mrb[0].mxu0
      %v5822 = vadd.f32 0.0, %v5821
      %5823 = vdwg.mxu0
      %v5824 = vadd.f32 %v5707, %v5820
      %v5825 = vadd.f32 %v5708, %v5822
      %5826 = vrot.lane.b32.xlu0 %v5435, 111
      %v5827 = vpop.permute.xlu0 %5826
      %5828 = vrot.lane.b32.xlu0 %v5436, 111
      %v5829 = vpop.permute.xlu0 %5828
      %5830 = vrot.lane.b32.xlu0 %v5437, 111
      %v5831 = vpop.permute.xlu0 %5830
      %5832 = vrot.lane.b32.xlu0 %v5438, 111
      %v5833 = vpop.permute.xlu0 %5832
      %5834 = vrot.lane.b32.xlu0 %v5439, 111
      %v5835 = vpop.permute.xlu0 %5834
      %5836 = vrot.lane.b32.xlu0 %v5440, 111
      %v5837 = vpop.permute.xlu0 %5836
      %5838 = vrot.lane.b32.xlu0 %v5441, 111
      %v5839 = vpop.permute.xlu0 %5838
      %5840 = vrot.lane.b32.xlu0 %v5442, 111
      %v5841 = vpop.permute.xlu0 %5840
      %5842 = vrot.lane.b32.xlu0 %v5443, 111
      %v5843 = vpop.permute.xlu0 %5842
      %5844 = vrot.lane.b32.xlu0 %v5444, 111
      %v5845 = vpop.permute.xlu0 %5844
      %5846 = vrot.lane.b32.xlu0 %v5445, 111
      %v5847 = vpop.permute.xlu0 %5846
      %5848 = vrot.lane.b32.xlu0 %v5446, 111
      %v5849 = vpop.permute.xlu0 %5848
      %v5850 = vsel %vm1682, %v5827, %v5829
      %v5851 = vsel %vm1682, %v5829, %v5831
      %v5852 = vsel %vm1682, %v5833, %v5835
      %v5853 = vsel %vm1682, %v5835, %v5837
      %v5854 = vsel %vm1682, %v5839, %v5841
      %v5855 = vsel %vm1682, %v5841, %v5843
      %v5856 = vsel %vm1682, %v5845, %v5847
      %v5857 = vsel %vm1682, %v5847, %v5849
      %v5866 = vsel %vm717, %v5850, 0.0
      %v5867 = vsel %vm718, %v5851, 0.0
      %v5868 = vsel %vm717, %v5852, 0.0
      %v5869 = vsel %vm718, %v5853, 0.0
      %v5870 = vsel %vm717, %v5854, 0.0
      %v5871 = vsel %vm718, %v5855, 0.0
      %v5872 = vsel %vm717, %v5856, 0.0
      %v5873 = vsel %vm718, %v5857, 0.0
      %v5874 = vld [vmem:[%s7 + $0x40] sm:$0xff]
      %v5876 = vsel %vm512, %v5874, 0
      %5878 = vmatprep.subr.mxu0 %v5867
      %5879 = vmatpush1.msra.mxu0 %v5866
      %5880 = vmatprep.subr.mxu0 %v5869
      %5881 = vmatpush1.msra.mxu0 %v5868
      %5882 = vmatprep.subr.mxu0 %v5871
      %5883 = vmatpush1.msra.mxu0 %v5870
      %5884 = vmatprep.subr.mxu0 %v5873
      %5885 = vmatpush1.msra.mxu0 %v5872
      %5886 = vmatprep.subr.mxu0 0.0
      %5887 = vmatpush1.msra.mxu0 0.0
      %5888 = vmatprep.subr.mxu0 0.0
      %5889 = vmatpush1.msra.mxu0 0.0
      %5890 = vmatprep.subr.mxu0 0.0
      %5891 = vmatpush1.msra.mxu0 0.0
      %5892 = vmatprep.subr.mxu0 0.0
      %5893 = vmatpush1.msra.mxu0 0.0
      %5894 = vmatprep.subr.mxu0 0.0
      %5895 = vmatpush1.msra.mxu0 0.0
      %5896 = vmatprep.subr.mxu0 0.0
      %5897 = vmatpush1.msra.mxu0 0.0
      %5898 = vmatprep.subr.mxu0 0.0
      %5899 = vmatpush1.msra.mxu0 0.0
      %5900 = vmatprep.subr.mxu0 0.0
      %5901 = vmatpush1.msra.mxu0 0.0
      %5902 = vmatprep.subr.mxu0 0.0
      %5903 = vmatpush1.msra.mxu0 0.0
      %5904 = vmatprep.subr.mxu0 0.0
      %5905 = vmatpush1.msra.mxu0 0.0
      %5906 = vmatprep.subr.mxu0 0.0
      %5907 = vmatpush1.msra.mxu0 0.0
      %5908 = vmatprep.subr.mxu0 0.0
      %5909 = vmatpush1.msra.mxu0 0.0
      %5910 = vmatprep.subr.mxu0 0.0
      %5911 = vmatpush1.msra.mxu0 0.0
      %5912 = vmatprep.subr.mxu0 0.0
      %5913 = vmatpush1.msra.mxu0 0.0
      %5914 = vmatprep.subr.mxu0 0.0
      %5915 = vmatpush1.msra.mxu0 0.0
      %5916 = vmatprep.subr.mxu0 0.0
      %5917 = vmatpush1.msra.mxu0 0.0
      %5918 = vmatprep.subr.mxu0 0.0
      %5919 = vmatpush1.msra.mxu0 0.0
      %5920 = vmatprep.subr.mxu0 0.0
      %5921 = vmatpush1.msra.mxu0 0.0
      %5922 = vmatprep.subr.mxu0 0.0
      %5923 = vmatpush1.msra.mxu0 0.0
      %5924 = vmatprep.subr.mxu0 0.0
      %5925 = vmatpush1.msra.mxu0 0.0
      %5926 = vmatprep.subr.mxu0 0.0
      %5927 = vmatpush1.msra.mxu0 0.0
      %5928 = vmatprep.subr.mxu0 0.0
      %5929 = vmatpush1.msra.mxu0 0.0
      %5930 = vmatprep.subr.mxu0 0.0
      %5931 = vmatpush1.msra.mxu0 0.0
      %5932 = vmatprep.subr.mxu0 0.0
      %5933 = vmatpush1.msra.mxu0 0.0
      %5934 = vmatprep.subr.mxu0 0.0
      %5935 = vmatpush1.msra.mxu0 0.0
      %5936 = vmatprep.subr.mxu0 0.0
      %5937 = vmatpush1.msra.mxu0 0.0
      %5938 = vmatprep.subr.mxu0 0.0
      %5939 = vmatpush1.msra.mxu0 0.0
      %5940 = vmatprep.subr.mxu0 0.0
      %5941 = vmatpush1.msra.mxu0 0.0
      %5942 = vmatprep.mubr.f32.mxu0 0.0
      %5943 = vmatmul.mubr.f32.gmra.mrb[0].mxu0 %v5876
      %v5944 = vpop.f32.mrb[0].mxu0
      %v5945 = vadd.f32 0.0, %v5944
      %v5946 = vpop.f32.mrb[0].mxu0
      %v5947 = vadd.f32 0.0, %v5946
      %5948 = vdwg.mxu0
      %v5949 = vadd.f32 %v5824, %v5945
      %v5950 = vadd.f32 %v5825, %v5947
      %v5951 = vld [vmem:[%s8] sm:$0xff]
      %5953 = vset.pattern.permute.xlu0 0
      %5954 = vperm.xlu0 %5953, %v5951
      %v5955 = vpop.permute.xlu0 %5954
      %v5957 = vadd.f32 %v5949, %v5955
      %v5958 = vadd.f32 %v5950, %v5955
      %v5961 = vcombine.low %v5957, %v5958
      %v5963 = vunpack.c.l.s4 1966171168
      %v5964 = vunpack.c.0.s8 %v5963
      %v5965 = vlaneseq
      %v5966 = vshrl.u32 %v5965, 7
      %v5967 = vsub.s32 %v5964, %v5966
      %v5968 = vrot.slane %v5961, %v5967
      %v5970 = vunpack.c.l.s4 1966171168
      %v5971 = vunpack.c.0.s8 %v5970
      %v5972 = vlaneseq
      %v5973 = vshrl.u32 %v5972, 7
      %v5974 = vsub.s32 %v5971, %v5973
      %v5975 = vrot.slane %v5968, %v5974
      %v5977 = vlaneseq
      %vm5978 = vcmp.ge.s32.totalorder %v5977, 0
      %vm5979 = vcmp.lt.s32.totalorder %v5977, 256
      %vm5980 = vmand %vm5978, %vm5979
      %5981 = vst.msk [vmem:[%s330] sm:$0x3] %vm5980, %v5975
      %p5982 = scmp.lt.s32.totalorder %s20, 1
      %s5983 = scalar_select %p5982, %s20, 1
      %s5984 = smul.addr %s5983, 2
      %s5985 = scalar_lea.vmem %s9, %s5984
      // Predicated region
      $region57: #{fc_discriminator_img.1} parent=55 // pred_check
        %p5986 = pneg %p232
      $region58: #{fc_discriminator_img.1} parent=55 // pred_check_branch
        %5988 = sbr.rel (%p5986) target = $region60
      $region59: #{fc_discriminator_img.1} parent=55 // pred_region
        _
      $region60: #{fc_discriminator_img.1} parent=55 // pred_fallthru
        _
    $region56: #{fc_discriminator_img.1} parent=5 // pred_fallthru
      _
    %p5989 = scmp.le.s32.totalorder 2, %s15
    // Predicated region
    $region61: #{fc_discriminator_img.1} parent=5 // pred_check
      %p5990 = pneg %p5989
    $region62: #{fc_discriminator_img.1} parent=5 // pred_check_branch
      %5992 = sbr.rel (%p5990) target = $region64
    $region63: #{fc_discriminator_img.1} parent=5 // pred_region
      %s5993 = ssub.s32 %s15, 2
      // Predicated region
      $region65: #{fc_discriminator_img.1} parent=63 // pred_check
        %p5994 = pneg %p238
      $region66: #{fc_discriminator_img.1} parent=63 // pred_check_branch
        %5996 = sbr.rel (%p5994) target = $region68
      $region67: #{fc_discriminator_img.1} parent=63 // pred_region
        %p5997 = scmp.lt.s32.totalorder %s21, 1
        %s5998 = scalar_select %p5997, %s21, 1
        %s5999 = smul.addr %s5998, 2
        %s6000 = scalar_lea.vmem %s9, %s5999
      $region68: #{fc_discriminator_img.1} parent=63 // pred_fallthru
        _
    $region64: #{fc_discriminator_img.1} parent=5 // pred_fallthru
      _
  $region6: #{fc_discriminator_img.1} parent=0 // loop_footer
    %s19 = sadd.s32 1, %s15
  $region7: #{fc_discriminator_img.1} parent=0 // loop_footer_branch
    %14 = sbr.rel target = $region3
  $region8: #{fc_discriminator_img.1} parent=0 // loop_exit
    _

</llo_original>
